<compile_context>
chip_gen: v7x
topology: tpu7x:2x2x1
jax: 0.10.0
libtpu: 0.0.40
codegen_flags: <defaults>
</compile_context>

<pallas_src>
import jax
import jax.numpy as jnp
import numpy as np
from jax.experimental import pallas as pl
from jax.experimental.pallas import tpu as pltpu

D = 32            # d_model (num_features)
H = D // 4        # nhead = 8
HD = D // H       # head dim = 4
F = 4 * D         # dim_feedforward = 128
S = 8             # sequence length
B = 2             # batch
L = 4             # num encoder layers
N = B * S         # flattened rows = 16
HS = H * S        # replicated key rows = 64
EPS = 1e-5        # torch LayerNorm default eps

# Order in which the packed per-layer / classifier parameters are fed to the kernel.
_PACKED_ORDER = ("wq", "wk", "wv", "bq", "bk", "bv", "wo", "bo", "g1", "be1",
                 "w1", "b1", "w2", "b2", "g2", "be2", "wc", "bc")


def _layer_norm(x, gamma, beta):
    # var = E[x^2] - mu^2: the two lane reductions are independent (can overlap).
    mu = jnp.mean(x, axis=-1, keepdims=True)
    ex2 = jnp.mean(x * x, axis=-1, keepdims=True)
    inv = jax.lax.rsqrt(ex2 - mu * mu + EPS)
    return (x - mu) * (inv * gamma) + beta


def fused_transformer_kernel(x_ref, mask_ref,
                             wq_ref, wk_ref, wv_ref, bq_ref, bk_ref, bv_ref,
                             wo_ref, bo_ref, g1_ref, be1_ref,
                             w1_ref, b1_ref, w2_ref, b2_ref, g2_ref, be2_ref,
                             wc_ref, bc_ref,
                             o_ref):
    """Whole model: 4 post-norm encoder layers + classifier over all rows."""
    x = x_ref[...].astype(jnp.float32).reshape(N, D)     # (16, 32) residual stream, f32
    mask = mask_ref[...]                                  # (64, 32) f32: 1 iff col//HD == row//S
    mask_bf = mask.astype(jnp.bfloat16)                   # reused as denominator-matmul rhs

    for l in range(L):                                     # static unroll over layers
        x_bf = x.astype(jnp.bfloat16)
        # ---- lane-aligned Q/K/V projections (scale folded into Wq / bq) ------------
        q = jnp.dot(x_bf, wq_ref[l], preferred_element_type=jnp.float32) + bq_ref[l]
        k = jnp.dot(x_bf, wk_ref[l], preferred_element_type=jnp.float32) + bk_ref[l]
        v = jnp.dot(x_bf, wv_ref[l], preferred_element_type=jnp.float32) + bv_ref[l]

        # ---- head-batched attention via block-replicated + masked K / V ------------
        k3 = k.reshape(B, S, D)
        v3 = v.reshape(B, S, D)
        # k_rep[b, h*S + kk, d] = K[b, kk, d] if d belongs to head h else 0.
        k_rep = jnp.concatenate([k3] * H, axis=1) * mask          # (B, 64, 32) f32
        v_rep = jnp.concatenate([v3] * H, axis=1) * mask          # (B, 64, 32) f32

        q3_bf = q.reshape(B, S, D).astype(jnp.bfloat16)
        s = jnp.einsum('bqd,bmd->bqm', q3_bf, k_rep.astype(jnp.bfloat16),
                       preferred_element_type=jnp.float32)         # (B, S, 64)
        s2 = s.reshape(N, HS)                                      # (16, 64)
        # One row max over all heads: constant within each head's softmax group -> valid shift.
        s2 = s2 - jnp.max(s2, axis=-1, keepdims=True)
        p = jnp.exp(s2)                                            # (16, 64) f32, unnormalized

        # Per-output-feature softmax denominator via the idle MXU:
        # denom[n, h*HD + j] = sum_k p[n, h*S + k]
        denom = jnp.dot(p.astype(jnp.bfloat16), mask_bf,
                        preferred_element_type=jnp.float32)        # (16, 32)

        ctx = jnp.einsum('bqm,bmd->bqd',
                         p.reshape(B, S, HS).astype(jnp.bfloat16),
                         v_rep.astype(jnp.bfloat16),
                         preferred_element_type=jnp.float32).reshape(N, D)
        ctx = ctx * pl.reciprocal(denom, approx=True)              # normalize once

        attn = jnp.dot(ctx.astype(jnp.bfloat16), wo_ref[l],
                       preferred_element_type=jnp.float32) + bo_ref[l]

        # dropout is identity in eval mode
        x1 = _layer_norm(x + attn, g1_ref[l], be1_ref[l])          # norm1 (post-norm)

        # ---- feed forward -----------------------------------------------------------
        hdn = jnp.dot(x1.astype(jnp.bfloat16), w1_ref[l],
                      preferred_element_type=jnp.float32) + b1_ref[l]   # (16, 128)
        hdn = jnp.maximum(hdn, 0.0)                                     # ReLU
        ffn = jnp.dot(hdn.astype(jnp.bfloat16), w2_ref[l],
                      preferred_element_type=jnp.float32) + b2_ref[l]   # (16, 32)
        x = _layer_norm(x1 + ffn, g2_ref[l], be2_ref[l])                # norm2

    # ---- classifier over all 16 rows (last-timestep slice happens in the wrapper) ---
    logits = jnp.dot(x.astype(jnp.bfloat16), wc_ref[...],
                     preferred_element_type=jnp.float32) + bc_ref[...]  # (16, 3)
    o_ref[...] = logits.astype(o_ref.dtype)


# ----------------------------- host-side packing (call ONCE) ----------------------
def pack_params(params):
    """Fold 1/sqrt(head_dim) into Wq/bq, stack layers, downcast MXU weights to bf16,
    and build the constant head block-mask.  Do this once, outside the per-call path."""
    scale = 1.0 / (HD ** 0.5)
    layers = params["layers"]

    def stk(fn, dtype):
        return jnp.stack([fn(p) for p in layers], axis=0).astype(dtype)

    row_h = np.arange(HS) // S          # head owning each replicated key row
    col_h = np.arange(D) // HD          # head owning each feature column
    mask = (row_h[:, None] == col_h[None, :]).astype(np.float32)   # (64, 32)

    return dict(
        mask=jnp.asarray(mask),
        wq=stk(lambda p: p["wq"] * scale, jnp.bfloat16),
        wk=stk(lambda p: p["wk"], jnp.bfloat16),
        wv=stk(lambda p: p["wv"], jnp.bfloat16),
        bq=stk(lambda p: p["bq"] * scale, jnp.float32),
        bk=stk(lambda p: p["bk"], jnp.float32),
        bv=stk(lambda p: p["bv"], jnp.float32),
        wo=stk(lambda p: p["wo"], jnp.bfloat16),
        bo=stk(lambda p: p["bo"], jnp.float32),
        g1=stk(lambda p: p["g1"], jnp.float32),
        be1=stk(lambda p: p["be1"], jnp.float32),
        w1=stk(lambda p: p["w1"], jnp.bfloat16),
        b1=stk(lambda p: p["b1"], jnp.float32),
        w2=stk(lambda p: p["w2"], jnp.bfloat16),
        b2=stk(lambda p: p["b2"], jnp.float32),
        g2=stk(lambda p: p["g2"], jnp.float32),
        be2=stk(lambda p: p["be2"], jnp.float32),
        wc=params["wc"].astype(jnp.bfloat16),
        bc=params["bc"].astype(jnp.float32),
    )


# ----------------------------- forward wrappers -----------------------------------
def crypto_transformer_forward(x, packed):
    """Single grid-less pallas_call; all weights + activations resident in VMEM."""
    args = [packed["mask"]] + [packed[k] for k in _PACKED_ORDER]
    n_in = 1 + len(args)
    return pl.pallas_call(
        fused_transformer_kernel,
        out_shape=jax.ShapeDtypeStruct((N, 3), jnp.float32),
        in_specs=[pl.BlockSpec(memory_space=pltpu.MemorySpace.VMEM) for _ in range(n_in)],
        out_specs=pl.BlockSpec(memory_space=pltpu.MemorySpace.VMEM),
        cost_estimate=pl.CostEstimate(flops=2_400_000, transcendentals=6_400,
                                      bytes_accessed=130_000),
    )(x, *args)


def predict(x, packed):
    logits_all = crypto_transformer_forward(x, packed)       # (B*S, 3)
    return logits_all.reshape(B, S, 3)[:, -1, :]             # last timestep -> (B, 3)


# ----------------------------- pure-JAX f32 reference -----------------------------
def reference_forward(x, params):
    scale = 1.0 / (HD ** 0.5)
    b, s, _ = x.shape
    h = x
    for p in params["layers"]:
        q = (h @ p["wq"] + p["bq"]).reshape(b, s, H, HD).transpose(0, 2, 1, 3)
        k = (h @ p["wk"] + p["bk"]).reshape(b, s, H, HD).transpose(0, 2, 1, 3)
        v = (h @ p["wv"] + p["bv"]).reshape(b, s, H, HD).transpose(0, 2, 1, 3)
        sc = jnp.einsum('bhqd,bhkd->bhqk', q, k) * scale
        pa = jax.nn.softmax(sc, axis=-1)
        ctx = jnp.einsum('bhqk,bhkd->bhqd', pa, v).transpose(0, 2, 1, 3).reshape(b, s, D)
        attn = ctx @ p["wo"] + p["bo"]
        h1 = _layer_norm(h + attn, p["g1"], p["be1"])
        ffn = jnp.maximum(h1 @ p["w1"] + p["b1"], 0.0) @ p["w2"] + p["b2"]
        h = _layer_norm(h1 + ffn, p["g2"], p["be2"])
    return h[:, -1, :] @ params["wc"] + params["bc"]


# ----------------------------- parameter init -------------------------------------
def init_layer_params(key):
    ks = jax.random.split(key, 6)
    sc = 0.1
    return dict(
        wq=jax.random.normal(ks[0], (D, D), jnp.float32) * sc,
        wk=jax.random.normal(ks[1], (D, D), jnp.float32) * sc,
        wv=jax.random.normal(ks[2], (D, D), jnp.float32) * sc,
        bq=jnp.zeros((1, D), jnp.float32),
        bk=jnp.zeros((1, D), jnp.float32),
        bv=jnp.zeros((1, D), jnp.float32),
        wo=jax.random.normal(ks[3], (D, D), jnp.float32) * sc,
        bo=jnp.zeros((1, D), jnp.float32),
        g1=jnp.ones((1, D), jnp.float32),
        be1=jnp.zeros((1, D), jnp.float32),
        w1=jax.random.normal(ks[4], (D, F), jnp.float32) * sc,
        b1=jnp.zeros((1, F), jnp.float32),
        w2=jax.random.normal(ks[5], (F, D), jnp.float32) * sc,
        b2=jnp.zeros((1, D), jnp.float32),
        g2=jnp.ones((1, D), jnp.float32),
        be2=jnp.zeros((1, D), jnp.float32),
    )


def init_params(key):
    keys = jax.random.split(key, 6)
    layers = [init_layer_params(keys[i]) for i in range(L)]
    wc = jax.random.normal(keys[4], (D, 3), jnp.float32) * 0.1
    bc = jnp.zeros((1, 3), jnp.float32)
    return dict(layers=layers, wc=wc, bc=bc)


if __name__ == "__main__":
    key = jax.random.PRNGKey(0)
    k_x, k_p = jax.random.split(key)
    x = jax.random.normal(k_x, (B, S, D), jnp.float32)   # (batch, seq, num_features)
    params = init_params(k_p)

    packed = pack_params(params)          # packed ONCE, outside the jitted per-call path
    fwd = jax.jit(predict)

    out = jax.block_until_ready(fwd(x, packed))
    assert out.shape == (B, 3), out.shape
    assert bool(jnp.all(jnp.isfinite(out)))

    # f32 reference; tolerance accounts for bf16 MXU operands + approx reciprocal.
    ref = reference_forward(x, params)
    assert jnp.allclose(out, ref, rtol=1e-1, atol=5e-2), (out, ref)

    print("KERNEL_OK")
</pallas_src>

<mosaic_0001>
module attributes {stable_mosaic.version = 11 : i64} {
  func.func @fused_transformer_kernel(%arg0: memref<2x8x32xf32, #tpu.memory_space<vmem>>, %arg1: memref<64x32xf32, #tpu.memory_space<vmem>>, %arg2: memref<4x32x32xbf16, #tpu.memory_space<vmem>>, %arg3: memref<4x32x32xbf16, #tpu.memory_space<vmem>>, %arg4: memref<4x32x32xbf16, #tpu.memory_space<vmem>>, %arg5: memref<4x1x32xf32, #tpu.memory_space<vmem>>, %arg6: memref<4x1x32xf32, #tpu.memory_space<vmem>>, %arg7: memref<4x1x32xf32, #tpu.memory_space<vmem>>, %arg8: memref<4x32x32xbf16, #tpu.memory_space<vmem>>, %arg9: memref<4x1x32xf32, #tpu.memory_space<vmem>>, %arg10: memref<4x1x32xf32, #tpu.memory_space<vmem>>, %arg11: memref<4x1x32xf32, #tpu.memory_space<vmem>>, %arg12: memref<4x32x128xbf16, #tpu.memory_space<vmem>>, %arg13: memref<4x1x128xf32, #tpu.memory_space<vmem>>, %arg14: memref<4x128x32xbf16, #tpu.memory_space<vmem>>, %arg15: memref<4x1x32xf32, #tpu.memory_space<vmem>>, %arg16: memref<4x1x32xf32, #tpu.memory_space<vmem>>, %arg17: memref<4x1x32xf32, #tpu.memory_space<vmem>>, %arg18: memref<32x3xbf16, #tpu.memory_space<vmem>>, %arg19: memref<1x3xf32, #tpu.memory_space<vmem>>, %arg20: memref<16x3xf32, #tpu.memory_space<vmem>>) attributes {dimension_semantics = [], scalar_prefetch = 0 : i64, scratch_operands = 0 : i64, tpu.core_type = #tpu.core_type<tc>} {
    %c0 = arith.constant 0 : index
    %c0_0 = arith.constant 0 : index
    %c0_1 = arith.constant 0 : index
    %0 = vector.load %arg0[%c0, %c0_0, %c0_1] : memref<2x8x32xf32, #tpu.memory_space<vmem>>, vector<2x8x32xf32>
    %1 = vector.shape_cast %0 : vector<2x8x32xf32> to vector<16x32xf32>
    %c0_2 = arith.constant 0 : index
    %c0_3 = arith.constant 0 : index
    %2 = vector.load %arg1[%c0_2, %c0_3] : memref<64x32xf32, #tpu.memory_space<vmem>>, vector<64x32xf32>
    %3 = arith.truncf %2 : vector<64x32xf32> to vector<64x32xbf16>
    %4 = arith.truncf %1 : vector<16x32xf32> to vector<16x32xbf16>
    %c0_4 = arith.constant 0 : index
    %c0_5 = arith.constant 0 : index
    %c0_6 = arith.constant 0 : index
    %5 = vector.load %arg2[%c0_4, %c0_5, %c0_6] : memref<4x32x32xbf16, #tpu.memory_space<vmem>>, vector<1x32x32xbf16>
    %6 = vector.shape_cast %5 : vector<1x32x32xbf16> to vector<32x32xbf16>
    %cst = arith.constant dense<0.000000e+00> : vector<16x32xf32>
    %7 = tpu.matmul %4, %6, %cst {dimension_numbers = #tpu.dot_dimension_numbers<[1], [0], [0], [1], [0, 0, 1, 1], [], []>} : vector<16x32xbf16>, vector<32x32xbf16>, vector<16x32xf32> -> vector<16x32xf32>
    %c0_7 = arith.constant 0 : index
    %c0_8 = arith.constant 0 : index
    %c0_9 = arith.constant 0 : index
    %8 = vector.load %arg5[%c0_7, %c0_8, %c0_9] : memref<4x1x32xf32, #tpu.memory_space<vmem>>, vector<1x1x32xf32>
    %9 = vector.shape_cast %8 : vector<1x1x32xf32> to vector<1x32xf32>
    %10 = vector.broadcast %9 : vector<1x32xf32> to vector<16x32xf32>
    %11 = arith.addf %7, %10 : vector<16x32xf32>
    %c0_10 = arith.constant 0 : index
    %c0_11 = arith.constant 0 : index
    %c0_12 = arith.constant 0 : index
    %12 = vector.load %arg3[%c0_10, %c0_11, %c0_12] : memref<4x32x32xbf16, #tpu.memory_space<vmem>>, vector<1x32x32xbf16>
    %13 = vector.shape_cast %12 : vector<1x32x32xbf16> to vector<32x32xbf16>
    %cst_13 = arith.constant dense<0.000000e+00> : vector<16x32xf32>
    %14 = tpu.matmul %4, %13, %cst_13 {dimension_numbers = #tpu.dot_dimension_numbers<[1], [0], [0], [1], [0, 0, 1, 1], [], []>} : vector<16x32xbf16>, vector<32x32xbf16>, vector<16x32xf32> -> vector<16x32xf32>
    %c0_14 = arith.constant 0 : index
    %c0_15 = arith.constant 0 : index
    %c0_16 = arith.constant 0 : index
    %15 = vector.load %arg6[%c0_14, %c0_15, %c0_16] : memref<4x1x32xf32, #tpu.memory_space<vmem>>, vector<1x1x32xf32>
    %16 = vector.shape_cast %15 : vector<1x1x32xf32> to vector<1x32xf32>
    %17 = vector.broadcast %16 : vector<1x32xf32> to vector<16x32xf32>
    %18 = arith.addf %14, %17 : vector<16x32xf32>
    %c0_17 = arith.constant 0 : index
    %c0_18 = arith.constant 0 : index
    %c0_19 = arith.constant 0 : index
    %19 = vector.load %arg4[%c0_17, %c0_18, %c0_19] : memref<4x32x32xbf16, #tpu.memory_space<vmem>>, vector<1x32x32xbf16>
    %20 = vector.shape_cast %19 : vector<1x32x32xbf16> to vector<32x32xbf16>
    %cst_20 = arith.constant dense<0.000000e+00> : vector<16x32xf32>
    %21 = tpu.matmul %4, %20, %cst_20 {dimension_numbers = #tpu.dot_dimension_numbers<[1], [0], [0], [1], [0, 0, 1, 1], [], []>} : vector<16x32xbf16>, vector<32x32xbf16>, vector<16x32xf32> -> vector<16x32xf32>
    %c0_21 = arith.constant 0 : index
    %c0_22 = arith.constant 0 : index
    %c0_23 = arith.constant 0 : index
    %22 = vector.load %arg7[%c0_21, %c0_22, %c0_23] : memref<4x1x32xf32, #tpu.memory_space<vmem>>, vector<1x1x32xf32>
    %23 = vector.shape_cast %22 : vector<1x1x32xf32> to vector<1x32xf32>
    %24 = vector.broadcast %23 : vector<1x32xf32> to vector<16x32xf32>
    %25 = arith.addf %21, %24 : vector<16x32xf32>
    %26 = vector.shape_cast %18 : vector<16x32xf32> to vector<2x8x32xf32>
    %27 = vector.shape_cast %25 : vector<16x32xf32> to vector<2x8x32xf32>
    %28 = tpu.concatenate %26, %26, %26, %26, %26, %26, %26, %26 in 1 : vector<2x8x32xf32>, vector<2x8x32xf32>, vector<2x8x32xf32>, vector<2x8x32xf32>, vector<2x8x32xf32>, vector<2x8x32xf32>, vector<2x8x32xf32>, vector<2x8x32xf32> -> vector<2x64x32xf32>
    %29 = vector.shape_cast %2 : vector<64x32xf32> to vector<1x64x32xf32>
    %30 = vector.broadcast %29 : vector<1x64x32xf32> to vector<2x64x32xf32>
    %31 = arith.mulf %28, %30 : vector<2x64x32xf32>
    %32 = tpu.concatenate %27, %27, %27, %27, %27, %27, %27, %27 in 1 : vector<2x8x32xf32>, vector<2x8x32xf32>, vector<2x8x32xf32>, vector<2x8x32xf32>, vector<2x8x32xf32>, vector<2x8x32xf32>, vector<2x8x32xf32>, vector<2x8x32xf32> -> vector<2x64x32xf32>
    %33 = vector.shape_cast %2 : vector<64x32xf32> to vector<1x64x32xf32>
    %34 = vector.broadcast %33 : vector<1x64x32xf32> to vector<2x64x32xf32>
    %35 = arith.mulf %32, %34 : vector<2x64x32xf32>
    %36 = vector.shape_cast %11 : vector<16x32xf32> to vector<2x8x32xf32>
    %37 = arith.truncf %36 : vector<2x8x32xf32> to vector<2x8x32xbf16>
    %38 = arith.truncf %31 : vector<2x64x32xf32> to vector<2x64x32xbf16>
    "tpu.trace_start"() <{level = 10 : i32, message = "bqd,bmd->bqm"}> : () -> ()
    %cst_24 = arith.constant dense<0.000000e+00> : vector<2x8x64xf32>
    %39 = tpu.matmul %37, %38, %cst_24 {dimension_numbers = #tpu.dot_dimension_numbers<[2], [2], [1], [1], [0, 0, 0, 1, 1, 1], [0], [0]>} : vector<2x8x32xbf16>, vector<2x64x32xbf16>, vector<2x8x64xf32> -> vector<2x8x64xf32>
    "tpu.trace_stop"() : () -> ()
    %40 = vector.shape_cast %39 : vector<2x8x64xf32> to vector<16x64xf32>
    %cst_25 = arith.constant dense<0xFF800000> : vector<16xf32>
    %41 = vector.multi_reduction <maximumf>, %40, %cst_25 [1] : vector<16x64xf32> to vector<16xf32>
    %42 = vector.shape_cast %41 : vector<16xf32> to vector<16x1xf32>
    %43 = vector.broadcast %42 : vector<16x1xf32> to vector<16x64xf32>
    %44 = arith.subf %40, %43 : vector<16x64xf32>
    %45 = math.exp %44 : vector<16x64xf32>
    %46 = arith.truncf %45 : vector<16x64xf32> to vector<16x64xbf16>
    %cst_26 = arith.constant dense<0.000000e+00> : vector<16x32xf32>
    %47 = tpu.matmul %46, %3, %cst_26 {dimension_numbers = #tpu.dot_dimension_numbers<[1], [0], [0], [1], [0, 0, 1, 1], [], []>} : vector<16x64xbf16>, vector<64x32xbf16>, vector<16x32xf32> -> vector<16x32xf32>
    %48 = vector.shape_cast %45 : vector<16x64xf32> to vector<2x8x64xf32>
    %49 = arith.truncf %48 : vector<2x8x64xf32> to vector<2x8x64xbf16>
    %50 = arith.truncf %35 : vector<2x64x32xf32> to vector<2x64x32xbf16>
    "tpu.trace_start"() <{level = 10 : i32, message = "bqm,bmd->bqd"}> : () -> ()
    %cst_27 = arith.constant dense<0.000000e+00> : vector<2x8x32xf32>
    %51 = tpu.matmul %49, %50, %cst_27 {dimension_numbers = #tpu.dot_dimension_numbers<[2], [1], [1], [2], [0, 0, 0, 1, 1, 2], [0], [0]>} : vector<2x8x64xbf16>, vector<2x64x32xbf16>, vector<2x8x32xf32> -> vector<2x8x32xf32>
    "tpu.trace_stop"() : () -> ()
    %52 = vector.shape_cast %51 : vector<2x8x32xf32> to vector<16x32xf32>
    %53 = tpu.reciprocal %47 {approx = true} : vector<16x32xf32> -> vector<16x32xf32>
    %54 = arith.mulf %52, %53 : vector<16x32xf32>
    %55 = arith.truncf %54 : vector<16x32xf32> to vector<16x32xbf16>
    %c0_28 = arith.constant 0 : index
    %c0_29 = arith.constant 0 : index
    %c0_30 = arith.constant 0 : index
    %56 = vector.load %arg8[%c0_28, %c0_29, %c0_30] : memref<4x32x32xbf16, #tpu.memory_space<vmem>>, vector<1x32x32xbf16>
    %57 = vector.shape_cast %56 : vector<1x32x32xbf16> to vector<32x32xbf16>
    %cst_31 = arith.constant dense<0.000000e+00> : vector<16x32xf32>
    %58 = tpu.matmul %55, %57, %cst_31 {dimension_numbers = #tpu.dot_dimension_numbers<[1], [0], [0], [1], [0, 0, 1, 1], [], []>} : vector<16x32xbf16>, vector<32x32xbf16>, vector<16x32xf32> -> vector<16x32xf32>
    %c0_32 = arith.constant 0 : index
    %c0_33 = arith.constant 0 : index
    %c0_34 = arith.constant 0 : index
    %59 = vector.load %arg9[%c0_32, %c0_33, %c0_34] : memref<4x1x32xf32, #tpu.memory_space<vmem>>, vector<1x1x32xf32>
    %60 = vector.shape_cast %59 : vector<1x1x32xf32> to vector<1x32xf32>
    %61 = vector.broadcast %60 : vector<1x32xf32> to vector<16x32xf32>
    %62 = arith.addf %58, %61 : vector<16x32xf32>
    %63 = arith.addf %1, %62 : vector<16x32xf32>
    %c0_35 = arith.constant 0 : index
    %c0_36 = arith.constant 0 : index
    %c0_37 = arith.constant 0 : index
    %64 = vector.load %arg10[%c0_35, %c0_36, %c0_37] : memref<4x1x32xf32, #tpu.memory_space<vmem>>, vector<1x1x32xf32>
    %65 = vector.shape_cast %64 : vector<1x1x32xf32> to vector<1x32xf32>
    %c0_38 = arith.constant 0 : index
    %c0_39 = arith.constant 0 : index
    %c0_40 = arith.constant 0 : index
    %66 = vector.load %arg11[%c0_38, %c0_39, %c0_40] : memref<4x1x32xf32, #tpu.memory_space<vmem>>, vector<1x1x32xf32>
    %67 = vector.shape_cast %66 : vector<1x1x32xf32> to vector<1x32xf32>
    %cst_41 = arith.constant dense<0.000000e+00> : vector<16xf32>
    %68 = vector.multi_reduction <add>, %63, %cst_41 [1] : vector<16x32xf32> to vector<16xf32>
    %69 = vector.shape_cast %68 : vector<16xf32> to vector<16x1xf32>
    %cst_42 = arith.constant 3.200000e+01 : f32
    %70 = vector.broadcast %cst_42 : f32 to vector<16x1xf32>
    %71 = arith.divf %69, %70 : vector<16x1xf32>
    %72 = arith.mulf %63, %63 : vector<16x32xf32>
    %cst_43 = arith.constant dense<0.000000e+00> : vector<16xf32>
    %73 = vector.multi_reduction <add>, %72, %cst_43 [1] : vector<16x32xf32> to vector<16xf32>
    %74 = vector.shape_cast %73 : vector<16xf32> to vector<16x1xf32>
    %cst_44 = arith.constant 3.200000e+01 : f32
    %75 = vector.broadcast %cst_44 : f32 to vector<16x1xf32>
    %76 = arith.divf %74, %75 : vector<16x1xf32>
    %77 = arith.mulf %71, %71 : vector<16x1xf32>
    %78 = arith.subf %76, %77 : vector<16x1xf32>
    %cst_45 = arith.constant 9.99999974E-6 : f32
    %79 = vector.broadcast %cst_45 : f32 to vector<16x1xf32>
    %80 = arith.addf %78, %79 : vector<16x1xf32>
    %81 = math.rsqrt %80 : vector<16x1xf32>
    %82 = vector.broadcast %71 : vector<16x1xf32> to vector<16x32xf32>
    %83 = arith.subf %63, %82 : vector<16x32xf32>
    %84 = vector.broadcast %81 : vector<16x1xf32> to vector<16x32xf32>
    %85 = vector.broadcast %65 : vector<1x32xf32> to vector<16x32xf32>
    %86 = arith.mulf %84, %85 : vector<16x32xf32>
    %87 = arith.mulf %83, %86 : vector<16x32xf32>
    %88 = vector.broadcast %67 : vector<1x32xf32> to vector<16x32xf32>
    %89 = arith.addf %87, %88 : vector<16x32xf32>
    %90 = arith.truncf %89 : vector<16x32xf32> to vector<16x32xbf16>
    %c0_46 = arith.constant 0 : index
    %c0_47 = arith.constant 0 : index
    %c0_48 = arith.constant 0 : index
    %91 = vector.load %arg12[%c0_46, %c0_47, %c0_48] : memref<4x32x128xbf16, #tpu.memory_space<vmem>>, vector<1x32x128xbf16>
    %92 = vector.shape_cast %91 : vector<1x32x128xbf16> to vector<32x128xbf16>
    %cst_49 = arith.constant dense<0.000000e+00> : vector<16x128xf32>
    %93 = tpu.matmul %90, %92, %cst_49 {dimension_numbers = #tpu.dot_dimension_numbers<[1], [0], [0], [1], [0, 0, 1, 1], [], []>} : vector<16x32xbf16>, vector<32x128xbf16>, vector<16x128xf32> -> vector<16x128xf32>
    %c0_50 = arith.constant 0 : index
    %c0_51 = arith.constant 0 : index
    %c0_52 = arith.constant 0 : index
    %94 = vector.load %arg13[%c0_50, %c0_51, %c0_52] : memref<4x1x128xf32, #tpu.memory_space<vmem>>, vector<1x1x128xf32>
    %95 = vector.shape_cast %94 : vector<1x1x128xf32> to vector<1x128xf32>
    %96 = vector.broadcast %95 : vector<1x128xf32> to vector<16x128xf32>
    %97 = arith.addf %93, %96 : vector<16x128xf32>
    %cst_53 = arith.constant 0.000000e+00 : f32
    %98 = vector.broadcast %cst_53 : f32 to vector<16x128xf32>
    %99 = arith.maximumf %97, %98 : vector<16x128xf32>
    %100 = arith.truncf %99 : vector<16x128xf32> to vector<16x128xbf16>
    %c0_54 = arith.constant 0 : index
    %c0_55 = arith.constant 0 : index
    %c0_56 = arith.constant 0 : index
    %101 = vector.load %arg14[%c0_54, %c0_55, %c0_56] : memref<4x128x32xbf16, #tpu.memory_space<vmem>>, vector<1x128x32xbf16>
    %102 = vector.shape_cast %101 : vector<1x128x32xbf16> to vector<128x32xbf16>
    %cst_57 = arith.constant dense<0.000000e+00> : vector<16x32xf32>
    %103 = tpu.matmul %100, %102, %cst_57 {dimension_numbers = #tpu.dot_dimension_numbers<[1], [0], [0], [1], [0, 0, 1, 1], [], []>} : vector<16x128xbf16>, vector<128x32xbf16>, vector<16x32xf32> -> vector<16x32xf32>
    %c0_58 = arith.constant 0 : index
    %c0_59 = arith.constant 0 : index
    %c0_60 = arith.constant 0 : index
    %104 = vector.load %arg15[%c0_58, %c0_59, %c0_60] : memref<4x1x32xf32, #tpu.memory_space<vmem>>, vector<1x1x32xf32>
    %105 = vector.shape_cast %104 : vector<1x1x32xf32> to vector<1x32xf32>
    %106 = vector.broadcast %105 : vector<1x32xf32> to vector<16x32xf32>
    %107 = arith.addf %103, %106 : vector<16x32xf32>
    %108 = arith.addf %89, %107 : vector<16x32xf32>
    %c0_61 = arith.constant 0 : index
    %c0_62 = arith.constant 0 : index
    %c0_63 = arith.constant 0 : index
    %109 = vector.load %arg16[%c0_61, %c0_62, %c0_63] : memref<4x1x32xf32, #tpu.memory_space<vmem>>, vector<1x1x32xf32>
    %110 = vector.shape_cast %109 : vector<1x1x32xf32> to vector<1x32xf32>
    %c0_64 = arith.constant 0 : index
    %c0_65 = arith.constant 0 : index
    %c0_66 = arith.constant 0 : index
    %111 = vector.load %arg17[%c0_64, %c0_65, %c0_66] : memref<4x1x32xf32, #tpu.memory_space<vmem>>, vector<1x1x32xf32>
    %112 = vector.shape_cast %111 : vector<1x1x32xf32> to vector<1x32xf32>
    %cst_67 = arith.constant dense<0.000000e+00> : vector<16xf32>
    %113 = vector.multi_reduction <add>, %108, %cst_67 [1] : vector<16x32xf32> to vector<16xf32>
    %114 = vector.shape_cast %113 : vector<16xf32> to vector<16x1xf32>
    %cst_68 = arith.constant 3.200000e+01 : f32
    %115 = vector.broadcast %cst_68 : f32 to vector<16x1xf32>
    %116 = arith.divf %114, %115 : vector<16x1xf32>
    %117 = arith.mulf %108, %108 : vector<16x32xf32>
    %cst_69 = arith.constant dense<0.000000e+00> : vector<16xf32>
    %118 = vector.multi_reduction <add>, %117, %cst_69 [1] : vector<16x32xf32> to vector<16xf32>
    %119 = vector.shape_cast %118 : vector<16xf32> to vector<16x1xf32>
    %cst_70 = arith.constant 3.200000e+01 : f32
    %120 = vector.broadcast %cst_70 : f32 to vector<16x1xf32>
    %121 = arith.divf %119, %120 : vector<16x1xf32>
    %122 = arith.mulf %116, %116 : vector<16x1xf32>
    %123 = arith.subf %121, %122 : vector<16x1xf32>
    %cst_71 = arith.constant 9.99999974E-6 : f32
    %124 = vector.broadcast %cst_71 : f32 to vector<16x1xf32>
    %125 = arith.addf %123, %124 : vector<16x1xf32>
    %126 = math.rsqrt %125 : vector<16x1xf32>
    %127 = vector.broadcast %116 : vector<16x1xf32> to vector<16x32xf32>
    %128 = arith.subf %108, %127 : vector<16x32xf32>
    %129 = vector.broadcast %126 : vector<16x1xf32> to vector<16x32xf32>
    %130 = vector.broadcast %110 : vector<1x32xf32> to vector<16x32xf32>
    %131 = arith.mulf %129, %130 : vector<16x32xf32>
    %132 = arith.mulf %128, %131 : vector<16x32xf32>
    %133 = vector.broadcast %112 : vector<1x32xf32> to vector<16x32xf32>
    %134 = arith.addf %132, %133 : vector<16x32xf32>
    %135 = arith.truncf %134 : vector<16x32xf32> to vector<16x32xbf16>
    %c1 = arith.constant 1 : index
    %c0_72 = arith.constant 0 : index
    %c0_73 = arith.constant 0 : index
    %136 = vector.load %arg2[%c1, %c0_72, %c0_73] : memref<4x32x32xbf16, #tpu.memory_space<vmem>>, vector<1x32x32xbf16>
    %137 = vector.shape_cast %136 : vector<1x32x32xbf16> to vector<32x32xbf16>
    %cst_74 = arith.constant dense<0.000000e+00> : vector<16x32xf32>
    %138 = tpu.matmul %135, %137, %cst_74 {dimension_numbers = #tpu.dot_dimension_numbers<[1], [0], [0], [1], [0, 0, 1, 1], [], []>} : vector<16x32xbf16>, vector<32x32xbf16>, vector<16x32xf32> -> vector<16x32xf32>
    %c1_75 = arith.constant 1 : index
    %c0_76 = arith.constant 0 : index
    %c0_77 = arith.constant 0 : index
    %139 = vector.load %arg5[%c1_75, %c0_76, %c0_77] : memref<4x1x32xf32, #tpu.memory_space<vmem>>, vector<1x1x32xf32>
    %140 = vector.shape_cast %139 : vector<1x1x32xf32> to vector<1x32xf32>
    %141 = vector.broadcast %140 : vector<1x32xf32> to vector<16x32xf32>
    %142 = arith.addf %138, %141 : vector<16x32xf32>
    %c1_78 = arith.constant 1 : index
    %c0_79 = arith.constant 0 : index
    %c0_80 = arith.constant 0 : index
    %143 = vector.load %arg3[%c1_78, %c0_79, %c0_80] : memref<4x32x32xbf16, #tpu.memory_space<vmem>>, vector<1x32x32xbf16>
    %144 = vector.shape_cast %143 : vector<1x32x32xbf16> to vector<32x32xbf16>
    %cst_81 = arith.constant dense<0.000000e+00> : vector<16x32xf32>
    %145 = tpu.matmul %135, %144, %cst_81 {dimension_numbers = #tpu.dot_dimension_numbers<[1], [0], [0], [1], [0, 0, 1, 1], [], []>} : vector<16x32xbf16>, vector<32x32xbf16>, vector<16x32xf32> -> vector<16x32xf32>
    %c1_82 = arith.constant 1 : index
    %c0_83 = arith.constant 0 : index
    %c0_84 = arith.constant 0 : index
    %146 = vector.load %arg6[%c1_82, %c0_83, %c0_84] : memref<4x1x32xf32, #tpu.memory_space<vmem>>, vector<1x1x32xf32>
    %147 = vector.shape_cast %146 : vector<1x1x32xf32> to vector<1x32xf32>
    %148 = vector.broadcast %147 : vector<1x32xf32> to vector<16x32xf32>
    %149 = arith.addf %145, %148 : vector<16x32xf32>
    %c1_85 = arith.constant 1 : index
    %c0_86 = arith.constant 0 : index
    %c0_87 = arith.constant 0 : index
    %150 = vector.load %arg4[%c1_85, %c0_86, %c0_87] : memref<4x32x32xbf16, #tpu.memory_space<vmem>>, vector<1x32x32xbf16>
    %151 = vector.shape_cast %150 : vector<1x32x32xbf16> to vector<32x32xbf16>
    %cst_88 = arith.constant dense<0.000000e+00> : vector<16x32xf32>
    %152 = tpu.matmul %135, %151, %cst_88 {dimension_numbers = #tpu.dot_dimension_numbers<[1], [0], [0], [1], [0, 0, 1, 1], [], []>} : vector<16x32xbf16>, vector<32x32xbf16>, vector<16x32xf32> -> vector<16x32xf32>
    %c1_89 = arith.constant 1 : index
    %c0_90 = arith.constant 0 : index
    %c0_91 = arith.constant 0 : index
    %153 = vector.load %arg7[%c1_89, %c0_90, %c0_91] : memref<4x1x32xf32, #tpu.memory_space<vmem>>, vector<1x1x32xf32>
    %154 = vector.shape_cast %153 : vector<1x1x32xf32> to vector<1x32xf32>
    %155 = vector.broadcast %154 : vector<1x32xf32> to vector<16x32xf32>
    %156 = arith.addf %152, %155 : vector<16x32xf32>
    %157 = vector.shape_cast %149 : vector<16x32xf32> to vector<2x8x32xf32>
    %158 = vector.shape_cast %156 : vector<16x32xf32> to vector<2x8x32xf32>
    %159 = tpu.concatenate %157, %157, %157, %157, %157, %157, %157, %157 in 1 : vector<2x8x32xf32>, vector<2x8x32xf32>, vector<2x8x32xf32>, vector<2x8x32xf32>, vector<2x8x32xf32>, vector<2x8x32xf32>, vector<2x8x32xf32>, vector<2x8x32xf32> -> vector<2x64x32xf32>
    %160 = vector.shape_cast %2 : vector<64x32xf32> to vector<1x64x32xf32>
    %161 = vector.broadcast %160 : vector<1x64x32xf32> to vector<2x64x32xf32>
    %162 = arith.mulf %159, %161 : vector<2x64x32xf32>
    %163 = tpu.concatenate %158, %158, %158, %158, %158, %158, %158, %158 in 1 : vector<2x8x32xf32>, vector<2x8x32xf32>, vector<2x8x32xf32>, vector<2x8x32xf32>, vector<2x8x32xf32>, vector<2x8x32xf32>, vector<2x8x32xf32>, vector<2x8x32xf32> -> vector<2x64x32xf32>
    %164 = vector.shape_cast %2 : vector<64x32xf32> to vector<1x64x32xf32>
    %165 = vector.broadcast %164 : vector<1x64x32xf32> to vector<2x64x32xf32>
    %166 = arith.mulf %163, %165 : vector<2x64x32xf32>
    %167 = vector.shape_cast %142 : vector<16x32xf32> to vector<2x8x32xf32>
    %168 = arith.truncf %167 : vector<2x8x32xf32> to vector<2x8x32xbf16>
    %169 = arith.truncf %162 : vector<2x64x32xf32> to vector<2x64x32xbf16>
    "tpu.trace_start"() <{level = 10 : i32, message = "bqd,bmd->bqm"}> : () -> ()
    %cst_92 = arith.constant dense<0.000000e+00> : vector<2x8x64xf32>
    %170 = tpu.matmul %168, %169, %cst_92 {dimension_numbers = #tpu.dot_dimension_numbers<[2], [2], [1], [1], [0, 0, 0, 1, 1, 1], [0], [0]>} : vector<2x8x32xbf16>, vector<2x64x32xbf16>, vector<2x8x64xf32> -> vector<2x8x64xf32>
    "tpu.trace_stop"() : () -> ()
    %171 = vector.shape_cast %170 : vector<2x8x64xf32> to vector<16x64xf32>
    %cst_93 = arith.constant dense<0xFF800000> : vector<16xf32>
    %172 = vector.multi_reduction <maximumf>, %171, %cst_93 [1] : vector<16x64xf32> to vector<16xf32>
    %173 = vector.shape_cast %172 : vector<16xf32> to vector<16x1xf32>
    %174 = vector.broadcast %173 : vector<16x1xf32> to vector<16x64xf32>
    %175 = arith.subf %171, %174 : vector<16x64xf32>
    %176 = math.exp %175 : vector<16x64xf32>
    %177 = arith.truncf %176 : vector<16x64xf32> to vector<16x64xbf16>
    %cst_94 = arith.constant dense<0.000000e+00> : vector<16x32xf32>
    %178 = tpu.matmul %177, %3, %cst_94 {dimension_numbers = #tpu.dot_dimension_numbers<[1], [0], [0], [1], [0, 0, 1, 1], [], []>} : vector<16x64xbf16>, vector<64x32xbf16>, vector<16x32xf32> -> vector<16x32xf32>
    %179 = vector.shape_cast %176 : vector<16x64xf32> to vector<2x8x64xf32>
    %180 = arith.truncf %179 : vector<2x8x64xf32> to vector<2x8x64xbf16>
    %181 = arith.truncf %166 : vector<2x64x32xf32> to vector<2x64x32xbf16>
    "tpu.trace_start"() <{level = 10 : i32, message = "bqm,bmd->bqd"}> : () -> ()
    %cst_95 = arith.constant dense<0.000000e+00> : vector<2x8x32xf32>
    %182 = tpu.matmul %180, %181, %cst_95 {dimension_numbers = #tpu.dot_dimension_numbers<[2], [1], [1], [2], [0, 0, 0, 1, 1, 2], [0], [0]>} : vector<2x8x64xbf16>, vector<2x64x32xbf16>, vector<2x8x32xf32> -> vector<2x8x32xf32>
    "tpu.trace_stop"() : () -> ()
    %183 = vector.shape_cast %182 : vector<2x8x32xf32> to vector<16x32xf32>
    %184 = tpu.reciprocal %178 {approx = true} : vector<16x32xf32> -> vector<16x32xf32>
    %185 = arith.mulf %183, %184 : vector<16x32xf32>
    %186 = arith.truncf %185 : vector<16x32xf32> to vector<16x32xbf16>
    %c1_96 = arith.constant 1 : index
    %c0_97 = arith.constant 0 : index
    %c0_98 = arith.constant 0 : index
    %187 = vector.load %arg8[%c1_96, %c0_97, %c0_98] : memref<4x32x32xbf16, #tpu.memory_space<vmem>>, vector<1x32x32xbf16>
    %188 = vector.shape_cast %187 : vector<1x32x32xbf16> to vector<32x32xbf16>
    %cst_99 = arith.constant dense<0.000000e+00> : vector<16x32xf32>
    %189 = tpu.matmul %186, %188, %cst_99 {dimension_numbers = #tpu.dot_dimension_numbers<[1], [0], [0], [1], [0, 0, 1, 1], [], []>} : vector<16x32xbf16>, vector<32x32xbf16>, vector<16x32xf32> -> vector<16x32xf32>
    %c1_100 = arith.constant 1 : index
    %c0_101 = arith.constant 0 : index
    %c0_102 = arith.constant 0 : index
    %190 = vector.load %arg9[%c1_100, %c0_101, %c0_102] : memref<4x1x32xf32, #tpu.memory_space<vmem>>, vector<1x1x32xf32>
    %191 = vector.shape_cast %190 : vector<1x1x32xf32> to vector<1x32xf32>
    %192 = vector.broadcast %191 : vector<1x32xf32> to vector<16x32xf32>
    %193 = arith.addf %189, %192 : vector<16x32xf32>
    %194 = arith.addf %134, %193 : vector<16x32xf32>
    %c1_103 = arith.constant 1 : index
    %c0_104 = arith.constant 0 : index
    %c0_105 = arith.constant 0 : index
    %195 = vector.load %arg10[%c1_103, %c0_104, %c0_105] : memref<4x1x32xf32, #tpu.memory_space<vmem>>, vector<1x1x32xf32>
    %196 = vector.shape_cast %195 : vector<1x1x32xf32> to vector<1x32xf32>
    %c1_106 = arith.constant 1 : index
    %c0_107 = arith.constant 0 : index
    %c0_108 = arith.constant 0 : index
    %197 = vector.load %arg11[%c1_106, %c0_107, %c0_108] : memref<4x1x32xf32, #tpu.memory_space<vmem>>, vector<1x1x32xf32>
    %198 = vector.shape_cast %197 : vector<1x1x32xf32> to vector<1x32xf32>
    %cst_109 = arith.constant dense<0.000000e+00> : vector<16xf32>
    %199 = vector.multi_reduction <add>, %194, %cst_109 [1] : vector<16x32xf32> to vector<16xf32>
    %200 = vector.shape_cast %199 : vector<16xf32> to vector<16x1xf32>
    %cst_110 = arith.constant 3.200000e+01 : f32
    %201 = vector.broadcast %cst_110 : f32 to vector<16x1xf32>
    %202 = arith.divf %200, %201 : vector<16x1xf32>
    %203 = arith.mulf %194, %194 : vector<16x32xf32>
    %cst_111 = arith.constant dense<0.000000e+00> : vector<16xf32>
    %204 = vector.multi_reduction <add>, %203, %cst_111 [1] : vector<16x32xf32> to vector<16xf32>
    %205 = vector.shape_cast %204 : vector<16xf32> to vector<16x1xf32>
    %cst_112 = arith.constant 3.200000e+01 : f32
    %206 = vector.broadcast %cst_112 : f32 to vector<16x1xf32>
    %207 = arith.divf %205, %206 : vector<16x1xf32>
    %208 = arith.mulf %202, %202 : vector<16x1xf32>
    %209 = arith.subf %207, %208 : vector<16x1xf32>
    %cst_113 = arith.constant 9.99999974E-6 : f32
    %210 = vector.broadcast %cst_113 : f32 to vector<16x1xf32>
    %211 = arith.addf %209, %210 : vector<16x1xf32>
    %212 = math.rsqrt %211 : vector<16x1xf32>
    %213 = vector.broadcast %202 : vector<16x1xf32> to vector<16x32xf32>
    %214 = arith.subf %194, %213 : vector<16x32xf32>
    %215 = vector.broadcast %212 : vector<16x1xf32> to vector<16x32xf32>
    %216 = vector.broadcast %196 : vector<1x32xf32> to vector<16x32xf32>
    %217 = arith.mulf %215, %216 : vector<16x32xf32>
    %218 = arith.mulf %214, %217 : vector<16x32xf32>
    %219 = vector.broadcast %198 : vector<1x32xf32> to vector<16x32xf32>
    %220 = arith.addf %218, %219 : vector<16x32xf32>
    %221 = arith.truncf %220 : vector<16x32xf32> to vector<16x32xbf16>
    %c1_114 = arith.constant 1 : index
    %c0_115 = arith.constant 0 : index
    %c0_116 = arith.constant 0 : index
    %222 = vector.load %arg12[%c1_114, %c0_115, %c0_116] : memref<4x32x128xbf16, #tpu.memory_space<vmem>>, vector<1x32x128xbf16>
    %223 = vector.shape_cast %222 : vector<1x32x128xbf16> to vector<32x128xbf16>
    %cst_117 = arith.constant dense<0.000000e+00> : vector<16x128xf32>
    %224 = tpu.matmul %221, %223, %cst_117 {dimension_numbers = #tpu.dot_dimension_numbers<[1], [0], [0], [1], [0, 0, 1, 1], [], []>} : vector<16x32xbf16>, vector<32x128xbf16>, vector<16x128xf32> -> vector<16x128xf32>
    %c1_118 = arith.constant 1 : index
    %c0_119 = arith.constant 0 : index
    %c0_120 = arith.constant 0 : index
    %225 = vector.load %arg13[%c1_118, %c0_119, %c0_120] : memref<4x1x128xf32, #tpu.memory_space<vmem>>, vector<1x1x128xf32>
    %226 = vector.shape_cast %225 : vector<1x1x128xf32> to vector<1x128xf32>
    %227 = vector.broadcast %226 : vector<1x128xf32> to vector<16x128xf32>
    %228 = arith.addf %224, %227 : vector<16x128xf32>
    %cst_121 = arith.constant 0.000000e+00 : f32
    %229 = vector.broadcast %cst_121 : f32 to vector<16x128xf32>
    %230 = arith.maximumf %228, %229 : vector<16x128xf32>
    %231 = arith.truncf %230 : vector<16x128xf32> to vector<16x128xbf16>
    %c1_122 = arith.constant 1 : index
    %c0_123 = arith.constant 0 : index
    %c0_124 = arith.constant 0 : index
    %232 = vector.load %arg14[%c1_122, %c0_123, %c0_124] : memref<4x128x32xbf16, #tpu.memory_space<vmem>>, vector<1x128x32xbf16>
    %233 = vector.shape_cast %232 : vector<1x128x32xbf16> to vector<128x32xbf16>
    %cst_125 = arith.constant dense<0.000000e+00> : vector<16x32xf32>
    %234 = tpu.matmul %231, %233, %cst_125 {dimension_numbers = #tpu.dot_dimension_numbers<[1], [0], [0], [1], [0, 0, 1, 1], [], []>} : vector<16x128xbf16>, vector<128x32xbf16>, vector<16x32xf32> -> vector<16x32xf32>
    %c1_126 = arith.constant 1 : index
    %c0_127 = arith.constant 0 : index
    %c0_128 = arith.constant 0 : index
    %235 = vector.load %arg15[%c1_126, %c0_127, %c0_128] : memref<4x1x32xf32, #tpu.memory_space<vmem>>, vector<1x1x32xf32>
    %236 = vector.shape_cast %235 : vector<1x1x32xf32> to vector<1x32xf32>
    %237 = vector.broadcast %236 : vector<1x32xf32> to vector<16x32xf32>
    %238 = arith.addf %234, %237 : vector<16x32xf32>
    %239 = arith.addf %220, %238 : vector<16x32xf32>
    %c1_129 = arith.constant 1 : index
    %c0_130 = arith.constant 0 : index
    %c0_131 = arith.constant 0 : index
    %240 = vector.load %arg16[%c1_129, %c0_130, %c0_131] : memref<4x1x32xf32, #tpu.memory_space<vmem>>, vector<1x1x32xf32>
    %241 = vector.shape_cast %240 : vector<1x1x32xf32> to vector<1x32xf32>
    %c1_132 = arith.constant 1 : index
    %c0_133 = arith.constant 0 : index
    %c0_134 = arith.constant 0 : index
    %242 = vector.load %arg17[%c1_132, %c0_133, %c0_134] : memref<4x1x32xf32, #tpu.memory_space<vmem>>, vector<1x1x32xf32>
    %243 = vector.shape_cast %242 : vector<1x1x32xf32> to vector<1x32xf32>
    %cst_135 = arith.constant dense<0.000000e+00> : vector<16xf32>
    %244 = vector.multi_reduction <add>, %239, %cst_135 [1] : vector<16x32xf32> to vector<16xf32>
    %245 = vector.shape_cast %244 : vector<16xf32> to vector<16x1xf32>
    %cst_136 = arith.constant 3.200000e+01 : f32
    %246 = vector.broadcast %cst_136 : f32 to vector<16x1xf32>
    %247 = arith.divf %245, %246 : vector<16x1xf32>
    %248 = arith.mulf %239, %239 : vector<16x32xf32>
    %cst_137 = arith.constant dense<0.000000e+00> : vector<16xf32>
    %249 = vector.multi_reduction <add>, %248, %cst_137 [1] : vector<16x32xf32> to vector<16xf32>
    %250 = vector.shape_cast %249 : vector<16xf32> to vector<16x1xf32>
    %cst_138 = arith.constant 3.200000e+01 : f32
    %251 = vector.broadcast %cst_138 : f32 to vector<16x1xf32>
    %252 = arith.divf %250, %251 : vector<16x1xf32>
    %253 = arith.mulf %247, %247 : vector<16x1xf32>
    %254 = arith.subf %252, %253 : vector<16x1xf32>
    %cst_139 = arith.constant 9.99999974E-6 : f32
    %255 = vector.broadcast %cst_139 : f32 to vector<16x1xf32>
    %256 = arith.addf %254, %255 : vector<16x1xf32>
    %257 = math.rsqrt %256 : vector<16x1xf32>
    %258 = vector.broadcast %247 : vector<16x1xf32> to vector<16x32xf32>
    %259 = arith.subf %239, %258 : vector<16x32xf32>
    %260 = vector.broadcast %257 : vector<16x1xf32> to vector<16x32xf32>
    %261 = vector.broadcast %241 : vector<1x32xf32> to vector<16x32xf32>
    %262 = arith.mulf %260, %261 : vector<16x32xf32>
    %263 = arith.mulf %259, %262 : vector<16x32xf32>
    %264 = vector.broadcast %243 : vector<1x32xf32> to vector<16x32xf32>
    %265 = arith.addf %263, %264 : vector<16x32xf32>
    %266 = arith.truncf %265 : vector<16x32xf32> to vector<16x32xbf16>
    %c2 = arith.constant 2 : index
    %c0_140 = arith.constant 0 : index
    %c0_141 = arith.constant 0 : index
    %267 = vector.load %arg2[%c2, %c0_140, %c0_141] : memref<4x32x32xbf16, #tpu.memory_space<vmem>>, vector<1x32x32xbf16>
    %268 = vector.shape_cast %267 : vector<1x32x32xbf16> to vector<32x32xbf16>
    %cst_142 = arith.constant dense<0.000000e+00> : vector<16x32xf32>
    %269 = tpu.matmul %266, %268, %cst_142 {dimension_numbers = #tpu.dot_dimension_numbers<[1], [0], [0], [1], [0, 0, 1, 1], [], []>} : vector<16x32xbf16>, vector<32x32xbf16>, vector<16x32xf32> -> vector<16x32xf32>
    %c2_143 = arith.constant 2 : index
    %c0_144 = arith.constant 0 : index
    %c0_145 = arith.constant 0 : index
    %270 = vector.load %arg5[%c2_143, %c0_144, %c0_145] : memref<4x1x32xf32, #tpu.memory_space<vmem>>, vector<1x1x32xf32>
    %271 = vector.shape_cast %270 : vector<1x1x32xf32> to vector<1x32xf32>
    %272 = vector.broadcast %271 : vector<1x32xf32> to vector<16x32xf32>
    %273 = arith.addf %269, %272 : vector<16x32xf32>
    %c2_146 = arith.constant 2 : index
    %c0_147 = arith.constant 0 : index
    %c0_148 = arith.constant 0 : index
    %274 = vector.load %arg3[%c2_146, %c0_147, %c0_148] : memref<4x32x32xbf16, #tpu.memory_space<vmem>>, vector<1x32x32xbf16>
    %275 = vector.shape_cast %274 : vector<1x32x32xbf16> to vector<32x32xbf16>
    %cst_149 = arith.constant dense<0.000000e+00> : vector<16x32xf32>
    %276 = tpu.matmul %266, %275, %cst_149 {dimension_numbers = #tpu.dot_dimension_numbers<[1], [0], [0], [1], [0, 0, 1, 1], [], []>} : vector<16x32xbf16>, vector<32x32xbf16>, vector<16x32xf32> -> vector<16x32xf32>
    %c2_150 = arith.constant 2 : index
    %c0_151 = arith.constant 0 : index
    %c0_152 = arith.constant 0 : index
    %277 = vector.load %arg6[%c2_150, %c0_151, %c0_152] : memref<4x1x32xf32, #tpu.memory_space<vmem>>, vector<1x1x32xf32>
    %278 = vector.shape_cast %277 : vector<1x1x32xf32> to vector<1x32xf32>
    %279 = vector.broadcast %278 : vector<1x32xf32> to vector<16x32xf32>
    %280 = arith.addf %276, %279 : vector<16x32xf32>
    %c2_153 = arith.constant 2 : index
    %c0_154 = arith.constant 0 : index
    %c0_155 = arith.constant 0 : index
    %281 = vector.load %arg4[%c2_153, %c0_154, %c0_155] : memref<4x32x32xbf16, #tpu.memory_space<vmem>>, vector<1x32x32xbf16>
    %282 = vector.shape_cast %281 : vector<1x32x32xbf16> to vector<32x32xbf16>
    %cst_156 = arith.constant dense<0.000000e+00> : vector<16x32xf32>
    %283 = tpu.matmul %266, %282, %cst_156 {dimension_numbers = #tpu.dot_dimension_numbers<[1], [0], [0], [1], [0, 0, 1, 1], [], []>} : vector<16x32xbf16>, vector<32x32xbf16>, vector<16x32xf32> -> vector<16x32xf32>
    %c2_157 = arith.constant 2 : index
    %c0_158 = arith.constant 0 : index
    %c0_159 = arith.constant 0 : index
    %284 = vector.load %arg7[%c2_157, %c0_158, %c0_159] : memref<4x1x32xf32, #tpu.memory_space<vmem>>, vector<1x1x32xf32>
    %285 = vector.shape_cast %284 : vector<1x1x32xf32> to vector<1x32xf32>
    %286 = vector.broadcast %285 : vector<1x32xf32> to vector<16x32xf32>
    %287 = arith.addf %283, %286 : vector<16x32xf32>
    %288 = vector.shape_cast %280 : vector<16x32xf32> to vector<2x8x32xf32>
    %289 = vector.shape_cast %287 : vector<16x32xf32> to vector<2x8x32xf32>
    %290 = tpu.concatenate %288, %288, %288, %288, %288, %288, %288, %288 in 1 : vector<2x8x32xf32>, vector<2x8x32xf32>, vector<2x8x32xf32>, vector<2x8x32xf32>, vector<2x8x32xf32>, vector<2x8x32xf32>, vector<2x8x32xf32>, vector<2x8x32xf32> -> vector<2x64x32xf32>
    %291 = vector.shape_cast %2 : vector<64x32xf32> to vector<1x64x32xf32>
    %292 = vector.broadcast %291 : vector<1x64x32xf32> to vector<2x64x32xf32>
    %293 = arith.mulf %290, %292 : vector<2x64x32xf32>
    %294 = tpu.concatenate %289, %289, %289, %289, %289, %289, %289, %289 in 1 : vector<2x8x32xf32>, vector<2x8x32xf32>, vector<2x8x32xf32>, vector<2x8x32xf32>, vector<2x8x32xf32>, vector<2x8x32xf32>, vector<2x8x32xf32>, vector<2x8x32xf32> -> vector<2x64x32xf32>
    %295 = vector.shape_cast %2 : vector<64x32xf32> to vector<1x64x32xf32>
    %296 = vector.broadcast %295 : vector<1x64x32xf32> to vector<2x64x32xf32>
    %297 = arith.mulf %294, %296 : vector<2x64x32xf32>
    %298 = vector.shape_cast %273 : vector<16x32xf32> to vector<2x8x32xf32>
    %299 = arith.truncf %298 : vector<2x8x32xf32> to vector<2x8x32xbf16>
    %300 = arith.truncf %293 : vector<2x64x32xf32> to vector<2x64x32xbf16>
    "tpu.trace_start"() <{level = 10 : i32, message = "bqd,bmd->bqm"}> : () -> ()
    %cst_160 = arith.constant dense<0.000000e+00> : vector<2x8x64xf32>
    %301 = tpu.matmul %299, %300, %cst_160 {dimension_numbers = #tpu.dot_dimension_numbers<[2], [2], [1], [1], [0, 0, 0, 1, 1, 1], [0], [0]>} : vector<2x8x32xbf16>, vector<2x64x32xbf16>, vector<2x8x64xf32> -> vector<2x8x64xf32>
    "tpu.trace_stop"() : () -> ()
    %302 = vector.shape_cast %301 : vector<2x8x64xf32> to vector<16x64xf32>
    %cst_161 = arith.constant dense<0xFF800000> : vector<16xf32>
    %303 = vector.multi_reduction <maximumf>, %302, %cst_161 [1] : vector<16x64xf32> to vector<16xf32>
    %304 = vector.shape_cast %303 : vector<16xf32> to vector<16x1xf32>
    %305 = vector.broadcast %304 : vector<16x1xf32> to vector<16x64xf32>
    %306 = arith.subf %302, %305 : vector<16x64xf32>
    %307 = math.exp %306 : vector<16x64xf32>
    %308 = arith.truncf %307 : vector<16x64xf32> to vector<16x64xbf16>
    %cst_162 = arith.constant dense<0.000000e+00> : vector<16x32xf32>
    %309 = tpu.matmul %308, %3, %cst_162 {dimension_numbers = #tpu.dot_dimension_numbers<[1], [0], [0], [1], [0, 0, 1, 1], [], []>} : vector<16x64xbf16>, vector<64x32xbf16>, vector<16x32xf32> -> vector<16x32xf32>
    %310 = vector.shape_cast %307 : vector<16x64xf32> to vector<2x8x64xf32>
    %311 = arith.truncf %310 : vector<2x8x64xf32> to vector<2x8x64xbf16>
    %312 = arith.truncf %297 : vector<2x64x32xf32> to vector<2x64x32xbf16>
    "tpu.trace_start"() <{level = 10 : i32, message = "bqm,bmd->bqd"}> : () -> ()
    %cst_163 = arith.constant dense<0.000000e+00> : vector<2x8x32xf32>
    %313 = tpu.matmul %311, %312, %cst_163 {dimension_numbers = #tpu.dot_dimension_numbers<[2], [1], [1], [2], [0, 0, 0, 1, 1, 2], [0], [0]>} : vector<2x8x64xbf16>, vector<2x64x32xbf16>, vector<2x8x32xf32> -> vector<2x8x32xf32>
    "tpu.trace_stop"() : () -> ()
    %314 = vector.shape_cast %313 : vector<2x8x32xf32> to vector<16x32xf32>
    %315 = tpu.reciprocal %309 {approx = true} : vector<16x32xf32> -> vector<16x32xf32>
    %316 = arith.mulf %314, %315 : vector<16x32xf32>
    %317 = arith.truncf %316 : vector<16x32xf32> to vector<16x32xbf16>
    %c2_164 = arith.constant 2 : index
    %c0_165 = arith.constant 0 : index
    %c0_166 = arith.constant 0 : index
    %318 = vector.load %arg8[%c2_164, %c0_165, %c0_166] : memref<4x32x32xbf16, #tpu.memory_space<vmem>>, vector<1x32x32xbf16>
    %319 = vector.shape_cast %318 : vector<1x32x32xbf16> to vector<32x32xbf16>
    %cst_167 = arith.constant dense<0.000000e+00> : vector<16x32xf32>
    %320 = tpu.matmul %317, %319, %cst_167 {dimension_numbers = #tpu.dot_dimension_numbers<[1], [0], [0], [1], [0, 0, 1, 1], [], []>} : vector<16x32xbf16>, vector<32x32xbf16>, vector<16x32xf32> -> vector<16x32xf32>
    %c2_168 = arith.constant 2 : index
    %c0_169 = arith.constant 0 : index
    %c0_170 = arith.constant 0 : index
    %321 = vector.load %arg9[%c2_168, %c0_169, %c0_170] : memref<4x1x32xf32, #tpu.memory_space<vmem>>, vector<1x1x32xf32>
    %322 = vector.shape_cast %321 : vector<1x1x32xf32> to vector<1x32xf32>
    %323 = vector.broadcast %322 : vector<1x32xf32> to vector<16x32xf32>
    %324 = arith.addf %320, %323 : vector<16x32xf32>
    %325 = arith.addf %265, %324 : vector<16x32xf32>
    %c2_171 = arith.constant 2 : index
    %c0_172 = arith.constant 0 : index
    %c0_173 = arith.constant 0 : index
    %326 = vector.load %arg10[%c2_171, %c0_172, %c0_173] : memref<4x1x32xf32, #tpu.memory_space<vmem>>, vector<1x1x32xf32>
    %327 = vector.shape_cast %326 : vector<1x1x32xf32> to vector<1x32xf32>
    %c2_174 = arith.constant 2 : index
    %c0_175 = arith.constant 0 : index
    %c0_176 = arith.constant 0 : index
    %328 = vector.load %arg11[%c2_174, %c0_175, %c0_176] : memref<4x1x32xf32, #tpu.memory_space<vmem>>, vector<1x1x32xf32>
    %329 = vector.shape_cast %328 : vector<1x1x32xf32> to vector<1x32xf32>
    %cst_177 = arith.constant dense<0.000000e+00> : vector<16xf32>
    %330 = vector.multi_reduction <add>, %325, %cst_177 [1] : vector<16x32xf32> to vector<16xf32>
    %331 = vector.shape_cast %330 : vector<16xf32> to vector<16x1xf32>
    %cst_178 = arith.constant 3.200000e+01 : f32
    %332 = vector.broadcast %cst_178 : f32 to vector<16x1xf32>
    %333 = arith.divf %331, %332 : vector<16x1xf32>
    %334 = arith.mulf %325, %325 : vector<16x32xf32>
    %cst_179 = arith.constant dense<0.000000e+00> : vector<16xf32>
    %335 = vector.multi_reduction <add>, %334, %cst_179 [1] : vector<16x32xf32> to vector<16xf32>
    %336 = vector.shape_cast %335 : vector<16xf32> to vector<16x1xf32>
    %cst_180 = arith.constant 3.200000e+01 : f32
    %337 = vector.broadcast %cst_180 : f32 to vector<16x1xf32>
    %338 = arith.divf %336, %337 : vector<16x1xf32>
    %339 = arith.mulf %333, %333 : vector<16x1xf32>
    %340 = arith.subf %338, %339 : vector<16x1xf32>
    %cst_181 = arith.constant 9.99999974E-6 : f32
    %341 = vector.broadcast %cst_181 : f32 to vector<16x1xf32>
    %342 = arith.addf %340, %341 : vector<16x1xf32>
    %343 = math.rsqrt %342 : vector<16x1xf32>
    %344 = vector.broadcast %333 : vector<16x1xf32> to vector<16x32xf32>
    %345 = arith.subf %325, %344 : vector<16x32xf32>
    %346 = vector.broadcast %343 : vector<16x1xf32> to vector<16x32xf32>
    %347 = vector.broadcast %327 : vector<1x32xf32> to vector<16x32xf32>
    %348 = arith.mulf %346, %347 : vector<16x32xf32>
    %349 = arith.mulf %345, %348 : vector<16x32xf32>
    %350 = vector.broadcast %329 : vector<1x32xf32> to vector<16x32xf32>
    %351 = arith.addf %349, %350 : vector<16x32xf32>
    %352 = arith.truncf %351 : vector<16x32xf32> to vector<16x32xbf16>
    %c2_182 = arith.constant 2 : index
    %c0_183 = arith.constant 0 : index
    %c0_184 = arith.constant 0 : index
    %353 = vector.load %arg12[%c2_182, %c0_183, %c0_184] : memref<4x32x128xbf16, #tpu.memory_space<vmem>>, vector<1x32x128xbf16>
    %354 = vector.shape_cast %353 : vector<1x32x128xbf16> to vector<32x128xbf16>
    %cst_185 = arith.constant dense<0.000000e+00> : vector<16x128xf32>
    %355 = tpu.matmul %352, %354, %cst_185 {dimension_numbers = #tpu.dot_dimension_numbers<[1], [0], [0], [1], [0, 0, 1, 1], [], []>} : vector<16x32xbf16>, vector<32x128xbf16>, vector<16x128xf32> -> vector<16x128xf32>
    %c2_186 = arith.constant 2 : index
    %c0_187 = arith.constant 0 : index
    %c0_188 = arith.constant 0 : index
    %356 = vector.load %arg13[%c2_186, %c0_187, %c0_188] : memref<4x1x128xf32, #tpu.memory_space<vmem>>, vector<1x1x128xf32>
    %357 = vector.shape_cast %356 : vector<1x1x128xf32> to vector<1x128xf32>
    %358 = vector.broadcast %357 : vector<1x128xf32> to vector<16x128xf32>
    %359 = arith.addf %355, %358 : vector<16x128xf32>
    %cst_189 = arith.constant 0.000000e+00 : f32
    %360 = vector.broadcast %cst_189 : f32 to vector<16x128xf32>
    %361 = arith.maximumf %359, %360 : vector<16x128xf32>
    %362 = arith.truncf %361 : vector<16x128xf32> to vector<16x128xbf16>
    %c2_190 = arith.constant 2 : index
    %c0_191 = arith.constant 0 : index
    %c0_192 = arith.constant 0 : index
    %363 = vector.load %arg14[%c2_190, %c0_191, %c0_192] : memref<4x128x32xbf16, #tpu.memory_space<vmem>>, vector<1x128x32xbf16>
    %364 = vector.shape_cast %363 : vector<1x128x32xbf16> to vector<128x32xbf16>
    %cst_193 = arith.constant dense<0.000000e+00> : vector<16x32xf32>
    %365 = tpu.matmul %362, %364, %cst_193 {dimension_numbers = #tpu.dot_dimension_numbers<[1], [0], [0], [1], [0, 0, 1, 1], [], []>} : vector<16x128xbf16>, vector<128x32xbf16>, vector<16x32xf32> -> vector<16x32xf32>
    %c2_194 = arith.constant 2 : index
    %c0_195 = arith.constant 0 : index
    %c0_196 = arith.constant 0 : index
    %366 = vector.load %arg15[%c2_194, %c0_195, %c0_196] : memref<4x1x32xf32, #tpu.memory_space<vmem>>, vector<1x1x32xf32>
    %367 = vector.shape_cast %366 : vector<1x1x32xf32> to vector<1x32xf32>
    %368 = vector.broadcast %367 : vector<1x32xf32> to vector<16x32xf32>
    %369 = arith.addf %365, %368 : vector<16x32xf32>
    %370 = arith.addf %351, %369 : vector<16x32xf32>
    %c2_197 = arith.constant 2 : index
    %c0_198 = arith.constant 0 : index
    %c0_199 = arith.constant 0 : index
    %371 = vector.load %arg16[%c2_197, %c0_198, %c0_199] : memref<4x1x32xf32, #tpu.memory_space<vmem>>, vector<1x1x32xf32>
    %372 = vector.shape_cast %371 : vector<1x1x32xf32> to vector<1x32xf32>
    %c2_200 = arith.constant 2 : index
    %c0_201 = arith.constant 0 : index
    %c0_202 = arith.constant 0 : index
    %373 = vector.load %arg17[%c2_200, %c0_201, %c0_202] : memref<4x1x32xf32, #tpu.memory_space<vmem>>, vector<1x1x32xf32>
    %374 = vector.shape_cast %373 : vector<1x1x32xf32> to vector<1x32xf32>
    %cst_203 = arith.constant dense<0.000000e+00> : vector<16xf32>
    %375 = vector.multi_reduction <add>, %370, %cst_203 [1] : vector<16x32xf32> to vector<16xf32>
    %376 = vector.shape_cast %375 : vector<16xf32> to vector<16x1xf32>
    %cst_204 = arith.constant 3.200000e+01 : f32
    %377 = vector.broadcast %cst_204 : f32 to vector<16x1xf32>
    %378 = arith.divf %376, %377 : vector<16x1xf32>
    %379 = arith.mulf %370, %370 : vector<16x32xf32>
    %cst_205 = arith.constant dense<0.000000e+00> : vector<16xf32>
    %380 = vector.multi_reduction <add>, %379, %cst_205 [1] : vector<16x32xf32> to vector<16xf32>
    %381 = vector.shape_cast %380 : vector<16xf32> to vector<16x1xf32>
    %cst_206 = arith.constant 3.200000e+01 : f32
    %382 = vector.broadcast %cst_206 : f32 to vector<16x1xf32>
    %383 = arith.divf %381, %382 : vector<16x1xf32>
    %384 = arith.mulf %378, %378 : vector<16x1xf32>
    %385 = arith.subf %383, %384 : vector<16x1xf32>
    %cst_207 = arith.constant 9.99999974E-6 : f32
    %386 = vector.broadcast %cst_207 : f32 to vector<16x1xf32>
    %387 = arith.addf %385, %386 : vector<16x1xf32>
    %388 = math.rsqrt %387 : vector<16x1xf32>
    %389 = vector.broadcast %378 : vector<16x1xf32> to vector<16x32xf32>
    %390 = arith.subf %370, %389 : vector<16x32xf32>
    %391 = vector.broadcast %388 : vector<16x1xf32> to vector<16x32xf32>
    %392 = vector.broadcast %372 : vector<1x32xf32> to vector<16x32xf32>
    %393 = arith.mulf %391, %392 : vector<16x32xf32>
    %394 = arith.mulf %390, %393 : vector<16x32xf32>
    %395 = vector.broadcast %374 : vector<1x32xf32> to vector<16x32xf32>
    %396 = arith.addf %394, %395 : vector<16x32xf32>
    %397 = arith.truncf %396 : vector<16x32xf32> to vector<16x32xbf16>
    %c3 = arith.constant 3 : index
    %c0_208 = arith.constant 0 : index
    %c0_209 = arith.constant 0 : index
    %398 = vector.load %arg2[%c3, %c0_208, %c0_209] : memref<4x32x32xbf16, #tpu.memory_space<vmem>>, vector<1x32x32xbf16>
    %399 = vector.shape_cast %398 : vector<1x32x32xbf16> to vector<32x32xbf16>
    %cst_210 = arith.constant dense<0.000000e+00> : vector<16x32xf32>
    %400 = tpu.matmul %397, %399, %cst_210 {dimension_numbers = #tpu.dot_dimension_numbers<[1], [0], [0], [1], [0, 0, 1, 1], [], []>} : vector<16x32xbf16>, vector<32x32xbf16>, vector<16x32xf32> -> vector<16x32xf32>
    %c3_211 = arith.constant 3 : index
    %c0_212 = arith.constant 0 : index
    %c0_213 = arith.constant 0 : index
    %401 = vector.load %arg5[%c3_211, %c0_212, %c0_213] : memref<4x1x32xf32, #tpu.memory_space<vmem>>, vector<1x1x32xf32>
    %402 = vector.shape_cast %401 : vector<1x1x32xf32> to vector<1x32xf32>
    %403 = vector.broadcast %402 : vector<1x32xf32> to vector<16x32xf32>
    %404 = arith.addf %400, %403 : vector<16x32xf32>
    %c3_214 = arith.constant 3 : index
    %c0_215 = arith.constant 0 : index
    %c0_216 = arith.constant 0 : index
    %405 = vector.load %arg3[%c3_214, %c0_215, %c0_216] : memref<4x32x32xbf16, #tpu.memory_space<vmem>>, vector<1x32x32xbf16>
    %406 = vector.shape_cast %405 : vector<1x32x32xbf16> to vector<32x32xbf16>
    %cst_217 = arith.constant dense<0.000000e+00> : vector<16x32xf32>
    %407 = tpu.matmul %397, %406, %cst_217 {dimension_numbers = #tpu.dot_dimension_numbers<[1], [0], [0], [1], [0, 0, 1, 1], [], []>} : vector<16x32xbf16>, vector<32x32xbf16>, vector<16x32xf32> -> vector<16x32xf32>
    %c3_218 = arith.constant 3 : index
    %c0_219 = arith.constant 0 : index
    %c0_220 = arith.constant 0 : index
    %408 = vector.load %arg6[%c3_218, %c0_219, %c0_220] : memref<4x1x32xf32, #tpu.memory_space<vmem>>, vector<1x1x32xf32>
    %409 = vector.shape_cast %408 : vector<1x1x32xf32> to vector<1x32xf32>
    %410 = vector.broadcast %409 : vector<1x32xf32> to vector<16x32xf32>
    %411 = arith.addf %407, %410 : vector<16x32xf32>
    %c3_221 = arith.constant 3 : index
    %c0_222 = arith.constant 0 : index
    %c0_223 = arith.constant 0 : index
    %412 = vector.load %arg4[%c3_221, %c0_222, %c0_223] : memref<4x32x32xbf16, #tpu.memory_space<vmem>>, vector<1x32x32xbf16>
    %413 = vector.shape_cast %412 : vector<1x32x32xbf16> to vector<32x32xbf16>
    %cst_224 = arith.constant dense<0.000000e+00> : vector<16x32xf32>
    %414 = tpu.matmul %397, %413, %cst_224 {dimension_numbers = #tpu.dot_dimension_numbers<[1], [0], [0], [1], [0, 0, 1, 1], [], []>} : vector<16x32xbf16>, vector<32x32xbf16>, vector<16x32xf32> -> vector<16x32xf32>
    %c3_225 = arith.constant 3 : index
    %c0_226 = arith.constant 0 : index
    %c0_227 = arith.constant 0 : index
    %415 = vector.load %arg7[%c3_225, %c0_226, %c0_227] : memref<4x1x32xf32, #tpu.memory_space<vmem>>, vector<1x1x32xf32>
    %416 = vector.shape_cast %415 : vector<1x1x32xf32> to vector<1x32xf32>
    %417 = vector.broadcast %416 : vector<1x32xf32> to vector<16x32xf32>
    %418 = arith.addf %414, %417 : vector<16x32xf32>
    %419 = vector.shape_cast %411 : vector<16x32xf32> to vector<2x8x32xf32>
    %420 = vector.shape_cast %418 : vector<16x32xf32> to vector<2x8x32xf32>
    %421 = tpu.concatenate %419, %419, %419, %419, %419, %419, %419, %419 in 1 : vector<2x8x32xf32>, vector<2x8x32xf32>, vector<2x8x32xf32>, vector<2x8x32xf32>, vector<2x8x32xf32>, vector<2x8x32xf32>, vector<2x8x32xf32>, vector<2x8x32xf32> -> vector<2x64x32xf32>
    %422 = vector.shape_cast %2 : vector<64x32xf32> to vector<1x64x32xf32>
    %423 = vector.broadcast %422 : vector<1x64x32xf32> to vector<2x64x32xf32>
    %424 = arith.mulf %421, %423 : vector<2x64x32xf32>
    %425 = tpu.concatenate %420, %420, %420, %420, %420, %420, %420, %420 in 1 : vector<2x8x32xf32>, vector<2x8x32xf32>, vector<2x8x32xf32>, vector<2x8x32xf32>, vector<2x8x32xf32>, vector<2x8x32xf32>, vector<2x8x32xf32>, vector<2x8x32xf32> -> vector<2x64x32xf32>
    %426 = vector.shape_cast %2 : vector<64x32xf32> to vector<1x64x32xf32>
    %427 = vector.broadcast %426 : vector<1x64x32xf32> to vector<2x64x32xf32>
    %428 = arith.mulf %425, %427 : vector<2x64x32xf32>
    %429 = vector.shape_cast %404 : vector<16x32xf32> to vector<2x8x32xf32>
    %430 = arith.truncf %429 : vector<2x8x32xf32> to vector<2x8x32xbf16>
    %431 = arith.truncf %424 : vector<2x64x32xf32> to vector<2x64x32xbf16>
    "tpu.trace_start"() <{level = 10 : i32, message = "bqd,bmd->bqm"}> : () -> ()
    %cst_228 = arith.constant dense<0.000000e+00> : vector<2x8x64xf32>
    %432 = tpu.matmul %430, %431, %cst_228 {dimension_numbers = #tpu.dot_dimension_numbers<[2], [2], [1], [1], [0, 0, 0, 1, 1, 1], [0], [0]>} : vector<2x8x32xbf16>, vector<2x64x32xbf16>, vector<2x8x64xf32> -> vector<2x8x64xf32>
    "tpu.trace_stop"() : () -> ()
    %433 = vector.shape_cast %432 : vector<2x8x64xf32> to vector<16x64xf32>
    %cst_229 = arith.constant dense<0xFF800000> : vector<16xf32>
    %434 = vector.multi_reduction <maximumf>, %433, %cst_229 [1] : vector<16x64xf32> to vector<16xf32>
    %435 = vector.shape_cast %434 : vector<16xf32> to vector<16x1xf32>
    %436 = vector.broadcast %435 : vector<16x1xf32> to vector<16x64xf32>
    %437 = arith.subf %433, %436 : vector<16x64xf32>
    %438 = math.exp %437 : vector<16x64xf32>
    %439 = arith.truncf %438 : vector<16x64xf32> to vector<16x64xbf16>
    %cst_230 = arith.constant dense<0.000000e+00> : vector<16x32xf32>
    %440 = tpu.matmul %439, %3, %cst_230 {dimension_numbers = #tpu.dot_dimension_numbers<[1], [0], [0], [1], [0, 0, 1, 1], [], []>} : vector<16x64xbf16>, vector<64x32xbf16>, vector<16x32xf32> -> vector<16x32xf32>
    %441 = vector.shape_cast %438 : vector<16x64xf32> to vector<2x8x64xf32>
    %442 = arith.truncf %441 : vector<2x8x64xf32> to vector<2x8x64xbf16>
    %443 = arith.truncf %428 : vector<2x64x32xf32> to vector<2x64x32xbf16>
    "tpu.trace_start"() <{level = 10 : i32, message = "bqm,bmd->bqd"}> : () -> ()
    %cst_231 = arith.constant dense<0.000000e+00> : vector<2x8x32xf32>
    %444 = tpu.matmul %442, %443, %cst_231 {dimension_numbers = #tpu.dot_dimension_numbers<[2], [1], [1], [2], [0, 0, 0, 1, 1, 2], [0], [0]>} : vector<2x8x64xbf16>, vector<2x64x32xbf16>, vector<2x8x32xf32> -> vector<2x8x32xf32>
    "tpu.trace_stop"() : () -> ()
    %445 = vector.shape_cast %444 : vector<2x8x32xf32> to vector<16x32xf32>
    %446 = tpu.reciprocal %440 {approx = true} : vector<16x32xf32> -> vector<16x32xf32>
    %447 = arith.mulf %445, %446 : vector<16x32xf32>
    %448 = arith.truncf %447 : vector<16x32xf32> to vector<16x32xbf16>
    %c3_232 = arith.constant 3 : index
    %c0_233 = arith.constant 0 : index
    %c0_234 = arith.constant 0 : index
    %449 = vector.load %arg8[%c3_232, %c0_233, %c0_234] : memref<4x32x32xbf16, #tpu.memory_space<vmem>>, vector<1x32x32xbf16>
    %450 = vector.shape_cast %449 : vector<1x32x32xbf16> to vector<32x32xbf16>
    %cst_235 = arith.constant dense<0.000000e+00> : vector<16x32xf32>
    %451 = tpu.matmul %448, %450, %cst_235 {dimension_numbers = #tpu.dot_dimension_numbers<[1], [0], [0], [1], [0, 0, 1, 1], [], []>} : vector<16x32xbf16>, vector<32x32xbf16>, vector<16x32xf32> -> vector<16x32xf32>
    %c3_236 = arith.constant 3 : index
    %c0_237 = arith.constant 0 : index
    %c0_238 = arith.constant 0 : index
    %452 = vector.load %arg9[%c3_236, %c0_237, %c0_238] : memref<4x1x32xf32, #tpu.memory_space<vmem>>, vector<1x1x32xf32>
    %453 = vector.shape_cast %452 : vector<1x1x32xf32> to vector<1x32xf32>
    %454 = vector.broadcast %453 : vector<1x32xf32> to vector<16x32xf32>
    %455 = arith.addf %451, %454 : vector<16x32xf32>
    %456 = arith.addf %396, %455 : vector<16x32xf32>
    %c3_239 = arith.constant 3 : index
    %c0_240 = arith.constant 0 : index
    %c0_241 = arith.constant 0 : index
    %457 = vector.load %arg10[%c3_239, %c0_240, %c0_241] : memref<4x1x32xf32, #tpu.memory_space<vmem>>, vector<1x1x32xf32>
    %458 = vector.shape_cast %457 : vector<1x1x32xf32> to vector<1x32xf32>
    %c3_242 = arith.constant 3 : index
    %c0_243 = arith.constant 0 : index
    %c0_244 = arith.constant 0 : index
    %459 = vector.load %arg11[%c3_242, %c0_243, %c0_244] : memref<4x1x32xf32, #tpu.memory_space<vmem>>, vector<1x1x32xf32>
    %460 = vector.shape_cast %459 : vector<1x1x32xf32> to vector<1x32xf32>
    %cst_245 = arith.constant dense<0.000000e+00> : vector<16xf32>
    %461 = vector.multi_reduction <add>, %456, %cst_245 [1] : vector<16x32xf32> to vector<16xf32>
    %462 = vector.shape_cast %461 : vector<16xf32> to vector<16x1xf32>
    %cst_246 = arith.constant 3.200000e+01 : f32
    %463 = vector.broadcast %cst_246 : f32 to vector<16x1xf32>
    %464 = arith.divf %462, %463 : vector<16x1xf32>
    %465 = arith.mulf %456, %456 : vector<16x32xf32>
    %cst_247 = arith.constant dense<0.000000e+00> : vector<16xf32>
    %466 = vector.multi_reduction <add>, %465, %cst_247 [1] : vector<16x32xf32> to vector<16xf32>
    %467 = vector.shape_cast %466 : vector<16xf32> to vector<16x1xf32>
    %cst_248 = arith.constant 3.200000e+01 : f32
    %468 = vector.broadcast %cst_248 : f32 to vector<16x1xf32>
    %469 = arith.divf %467, %468 : vector<16x1xf32>
    %470 = arith.mulf %464, %464 : vector<16x1xf32>
    %471 = arith.subf %469, %470 : vector<16x1xf32>
    %cst_249 = arith.constant 9.99999974E-6 : f32
    %472 = vector.broadcast %cst_249 : f32 to vector<16x1xf32>
    %473 = arith.addf %471, %472 : vector<16x1xf32>
    %474 = math.rsqrt %473 : vector<16x1xf32>
    %475 = vector.broadcast %464 : vector<16x1xf32> to vector<16x32xf32>
    %476 = arith.subf %456, %475 : vector<16x32xf32>
    %477 = vector.broadcast %474 : vector<16x1xf32> to vector<16x32xf32>
    %478 = vector.broadcast %458 : vector<1x32xf32> to vector<16x32xf32>
    %479 = arith.mulf %477, %478 : vector<16x32xf32>
    %480 = arith.mulf %476, %479 : vector<16x32xf32>
    %481 = vector.broadcast %460 : vector<1x32xf32> to vector<16x32xf32>
    %482 = arith.addf %480, %481 : vector<16x32xf32>
    %483 = arith.truncf %482 : vector<16x32xf32> to vector<16x32xbf16>
    %c3_250 = arith.constant 3 : index
    %c0_251 = arith.constant 0 : index
    %c0_252 = arith.constant 0 : index
    %484 = vector.load %arg12[%c3_250, %c0_251, %c0_252] : memref<4x32x128xbf16, #tpu.memory_space<vmem>>, vector<1x32x128xbf16>
    %485 = vector.shape_cast %484 : vector<1x32x128xbf16> to vector<32x128xbf16>
    %cst_253 = arith.constant dense<0.000000e+00> : vector<16x128xf32>
    %486 = tpu.matmul %483, %485, %cst_253 {dimension_numbers = #tpu.dot_dimension_numbers<[1], [0], [0], [1], [0, 0, 1, 1], [], []>} : vector<16x32xbf16>, vector<32x128xbf16>, vector<16x128xf32> -> vector<16x128xf32>
    %c3_254 = arith.constant 3 : index
    %c0_255 = arith.constant 0 : index
    %c0_256 = arith.constant 0 : index
    %487 = vector.load %arg13[%c3_254, %c0_255, %c0_256] : memref<4x1x128xf32, #tpu.memory_space<vmem>>, vector<1x1x128xf32>
    %488 = vector.shape_cast %487 : vector<1x1x128xf32> to vector<1x128xf32>
    %489 = vector.broadcast %488 : vector<1x128xf32> to vector<16x128xf32>
    %490 = arith.addf %486, %489 : vector<16x128xf32>
    %cst_257 = arith.constant 0.000000e+00 : f32
    %491 = vector.broadcast %cst_257 : f32 to vector<16x128xf32>
    %492 = arith.maximumf %490, %491 : vector<16x128xf32>
    %493 = arith.truncf %492 : vector<16x128xf32> to vector<16x128xbf16>
    %c3_258 = arith.constant 3 : index
    %c0_259 = arith.constant 0 : index
    %c0_260 = arith.constant 0 : index
    %494 = vector.load %arg14[%c3_258, %c0_259, %c0_260] : memref<4x128x32xbf16, #tpu.memory_space<vmem>>, vector<1x128x32xbf16>
    %495 = vector.shape_cast %494 : vector<1x128x32xbf16> to vector<128x32xbf16>
    %cst_261 = arith.constant dense<0.000000e+00> : vector<16x32xf32>
    %496 = tpu.matmul %493, %495, %cst_261 {dimension_numbers = #tpu.dot_dimension_numbers<[1], [0], [0], [1], [0, 0, 1, 1], [], []>} : vector<16x128xbf16>, vector<128x32xbf16>, vector<16x32xf32> -> vector<16x32xf32>
    %c3_262 = arith.constant 3 : index
    %c0_263 = arith.constant 0 : index
    %c0_264 = arith.constant 0 : index
    %497 = vector.load %arg15[%c3_262, %c0_263, %c0_264] : memref<4x1x32xf32, #tpu.memory_space<vmem>>, vector<1x1x32xf32>
    %498 = vector.shape_cast %497 : vector<1x1x32xf32> to vector<1x32xf32>
    %499 = vector.broadcast %498 : vector<1x32xf32> to vector<16x32xf32>
    %500 = arith.addf %496, %499 : vector<16x32xf32>
    %501 = arith.addf %482, %500 : vector<16x32xf32>
    %c3_265 = arith.constant 3 : index
    %c0_266 = arith.constant 0 : index
    %c0_267 = arith.constant 0 : index
    %502 = vector.load %arg16[%c3_265, %c0_266, %c0_267] : memref<4x1x32xf32, #tpu.memory_space<vmem>>, vector<1x1x32xf32>
    %503 = vector.shape_cast %502 : vector<1x1x32xf32> to vector<1x32xf32>
    %c3_268 = arith.constant 3 : index
    %c0_269 = arith.constant 0 : index
    %c0_270 = arith.constant 0 : index
    %504 = vector.load %arg17[%c3_268, %c0_269, %c0_270] : memref<4x1x32xf32, #tpu.memory_space<vmem>>, vector<1x1x32xf32>
    %505 = vector.shape_cast %504 : vector<1x1x32xf32> to vector<1x32xf32>
    %cst_271 = arith.constant dense<0.000000e+00> : vector<16xf32>
    %506 = vector.multi_reduction <add>, %501, %cst_271 [1] : vector<16x32xf32> to vector<16xf32>
    %507 = vector.shape_cast %506 : vector<16xf32> to vector<16x1xf32>
    %cst_272 = arith.constant 3.200000e+01 : f32
    %508 = vector.broadcast %cst_272 : f32 to vector<16x1xf32>
    %509 = arith.divf %507, %508 : vector<16x1xf32>
    %510 = arith.mulf %501, %501 : vector<16x32xf32>
    %cst_273 = arith.constant dense<0.000000e+00> : vector<16xf32>
    %511 = vector.multi_reduction <add>, %510, %cst_273 [1] : vector<16x32xf32> to vector<16xf32>
    %512 = vector.shape_cast %511 : vector<16xf32> to vector<16x1xf32>
    %cst_274 = arith.constant 3.200000e+01 : f32
    %513 = vector.broadcast %cst_274 : f32 to vector<16x1xf32>
    %514 = arith.divf %512, %513 : vector<16x1xf32>
    %515 = arith.mulf %509, %509 : vector<16x1xf32>
    %516 = arith.subf %514, %515 : vector<16x1xf32>
    %cst_275 = arith.constant 9.99999974E-6 : f32
    %517 = vector.broadcast %cst_275 : f32 to vector<16x1xf32>
    %518 = arith.addf %516, %517 : vector<16x1xf32>
    %519 = math.rsqrt %518 : vector<16x1xf32>
    %520 = vector.broadcast %509 : vector<16x1xf32> to vector<16x32xf32>
    %521 = arith.subf %501, %520 : vector<16x32xf32>
    %522 = vector.broadcast %519 : vector<16x1xf32> to vector<16x32xf32>
    %523 = vector.broadcast %503 : vector<1x32xf32> to vector<16x32xf32>
    %524 = arith.mulf %522, %523 : vector<16x32xf32>
    %525 = arith.mulf %521, %524 : vector<16x32xf32>
    %526 = vector.broadcast %505 : vector<1x32xf32> to vector<16x32xf32>
    %527 = arith.addf %525, %526 : vector<16x32xf32>
    %528 = arith.truncf %527 : vector<16x32xf32> to vector<16x32xbf16>
    %c0_276 = arith.constant 0 : index
    %c0_277 = arith.constant 0 : index
    %529 = vector.load %arg18[%c0_276, %c0_277] : memref<32x3xbf16, #tpu.memory_space<vmem>>, vector<32x3xbf16>
    %cst_278 = arith.constant dense<0.000000e+00> : vector<16x3xf32>
    %530 = tpu.matmul %528, %529, %cst_278 {dimension_numbers = #tpu.dot_dimension_numbers<[1], [0], [0], [1], [0, 0, 1, 1], [], []>} : vector<16x32xbf16>, vector<32x3xbf16>, vector<16x3xf32> -> vector<16x3xf32>
    %c0_279 = arith.constant 0 : index
    %c0_280 = arith.constant 0 : index
    %531 = vector.load %arg19[%c0_279, %c0_280] : memref<1x3xf32, #tpu.memory_space<vmem>>, vector<1x3xf32>
    %532 = vector.broadcast %531 : vector<1x3xf32> to vector<16x3xf32>
    %533 = arith.addf %530, %532 : vector<16x3xf32>
    %c0_281 = arith.constant 0 : index
    %c0_282 = arith.constant 0 : index
    %534 = vector.load %arg20[%c0_281, %c0_282] : memref<16x3xf32, #tpu.memory_space<vmem>>, vector<16x3xf32>
    tpu.vector_store %arg20[%c0_281, %c0_282], %533 {strides = array<i32>} : memref<16x3xf32, #tpu.memory_space<vmem>>, vector<16x3xf32>,
    return
  }
}

</mosaic_0001>

<llo_original>
// kernel: predict.1
$region0: #{predict.1}
  #allocation0 [shape = 'u32[]', space=smem, size = 0x4, offset = 0x4, fixed_abs, tag = 'smem constant byte address 0x4 - core index']
  #allocation1 [shape = 'u32[144,128]{1,0:T(1,128)}', space=vmem, size = 0x12000, scoped, tag = 'internal scratch']
  %s0 = inlined_call_operand.vmem [shape: f32[2,8,32], index: 0, kind: input, shape index: {}]
  %s1 = inlined_call_operand.vmem [shape: f32[64,32], index: 1, kind: input, shape index: {}]
  %s2 = inlined_call_operand.vmem [shape: bf16[4,32,32], index: 2, kind: input, shape index: {}]
  %s3 = inlined_call_operand.vmem [shape: bf16[4,32,32], index: 3, kind: input, shape index: {}]
  %s4 = inlined_call_operand.vmem [shape: bf16[4,32,32], index: 4, kind: input, shape index: {}]
  %s5 = inlined_call_operand.vmem [shape: f32[4,1,32], index: 5, kind: input, shape index: {}]
  %s6 = inlined_call_operand.vmem [shape: f32[4,1,32], index: 6, kind: input, shape index: {}]
  %s7 = inlined_call_operand.vmem [shape: f32[4,1,32], index: 7, kind: input, shape index: {}]
  %s8 = inlined_call_operand.vmem [shape: bf16[4,32,32], index: 8, kind: input, shape index: {}]
  %s9 = inlined_call_operand.vmem [shape: f32[4,1,32], index: 9, kind: input, shape index: {}]
  %s10 = inlined_call_operand.vmem [shape: f32[4,1,32], index: 10, kind: input, shape index: {}]
  %s11 = inlined_call_operand.vmem [shape: f32[4,1,32], index: 11, kind: input, shape index: {}]
  %s12 = inlined_call_operand.vmem [shape: bf16[4,32,128], index: 12, kind: input, shape index: {}]
  %s13 = inlined_call_operand.vmem [shape: f32[4,1,128], index: 13, kind: input, shape index: {}]
  %s14 = inlined_call_operand.vmem [shape: bf16[4,128,32], index: 14, kind: input, shape index: {}]
  %s15 = inlined_call_operand.vmem [shape: f32[4,1,32], index: 15, kind: input, shape index: {}]
  %s16 = inlined_call_operand.vmem [shape: f32[4,1,32], index: 16, kind: input, shape index: {}]
  %s17 = inlined_call_operand.vmem [shape: f32[4,1,32], index: 17, kind: input, shape index: {}]
  %s18 = inlined_call_operand.vmem [shape: bf16[32,3], index: 18, kind: input, shape index: {}]
  %s19 = inlined_call_operand.vmem [shape: f32[1,3], index: 19, kind: input, shape index: {}]
  %s20 = inlined_call_operand.vmem [shape: f32[16,3], index: 20, kind: output, shape index: {}]
  %s21 = sld [smem:[#allocation0]]
  $region90: #{predict.1} parent=0
    _
  %s23 = ssub.s32 1, %s21
  %s24 = scalar_select 0, %s23, %s21
  // Predicated region
  $region2: #{predict.1} parent=0 // pred_check
    _
  $region3: #{predict.1} parent=0 // pred_check_branch
    %26 = sbr.rel (0) target = $region5
  $region4: #{predict.1} parent=0 // pred_region
    _
  $region5: #{predict.1} parent=0 // pred_fallthru
    _
  // Predicated region
  $region6: #{predict.1} parent=0 // pred_check
    _
  $region7: #{predict.1} parent=0 // pred_check_branch
    %28 = sbr.rel (0) target = $region9
  $region8: #{predict.1} parent=0 // pred_region
    _
  $region9: #{predict.1} parent=0 // pred_fallthru
    _
  // Predicated region
  $region10: #{predict.1} parent=0 // pred_check
    _
  $region11: #{predict.1} parent=0 // pred_check_branch
    %30 = sbr.rel (0) target = $region13
  $region12: #{predict.1} parent=0 // pred_region
    _
  $region13: #{predict.1} parent=0 // pred_fallthru
    _
  // Predicated region
  $region14: #{predict.1} parent=0 // pred_check
    _
  $region15: #{predict.1} parent=0 // pred_check_branch
    %32 = sbr.rel (0) target = $region17
  $region16: #{predict.1} parent=0 // pred_region
    _
  $region17: #{predict.1} parent=0 // pred_fallthru
    _
  // Predicated region
  $region18: #{predict.1} parent=0 // pred_check
    _
  $region19: #{predict.1} parent=0 // pred_check_branch
    %34 = sbr.rel (0) target = $region21
  $region20: #{predict.1} parent=0 // pred_region
    _
  $region21: #{predict.1} parent=0 // pred_fallthru
    _
  // Predicated region
  $region22: #{predict.1} parent=0 // pred_check
    _
  $region23: #{predict.1} parent=0 // pred_check_branch
    %36 = sbr.rel (0) target = $region25
  $region24: #{predict.1} parent=0 // pred_region
    _
  $region25: #{predict.1} parent=0 // pred_fallthru
    _
  // Predicated region
  $region26: #{predict.1} parent=0 // pred_check
    _
  $region27: #{predict.1} parent=0 // pred_check_branch
    %38 = sbr.rel (0) target = $region29
  $region28: #{predict.1} parent=0 // pred_region
    _
  $region29: #{predict.1} parent=0 // pred_fallthru
    _
  // Predicated region
  $region30: #{predict.1} parent=0 // pred_check
    _
  $region31: #{predict.1} parent=0 // pred_check_branch
    %40 = sbr.rel (0) target = $region33
  $region32: #{predict.1} parent=0 // pred_region
    _
  $region33: #{predict.1} parent=0 // pred_fallthru
    _
  // Predicated region
  $region34: #{predict.1} parent=0 // pred_check
    _
  $region35: #{predict.1} parent=0 // pred_check_branch
    %42 = sbr.rel (0) target = $region37
  $region36: #{predict.1} parent=0 // pred_region
    _
  $region37: #{predict.1} parent=0 // pred_fallthru
    _
  // Predicated region
  $region38: #{predict.1} parent=0 // pred_check
    _
  $region39: #{predict.1} parent=0 // pred_check_branch
    %44 = sbr.rel (0) target = $region41
  $region40: #{predict.1} parent=0 // pred_region
    _
  $region41: #{predict.1} parent=0 // pred_fallthru
    _
  // Predicated region
  $region42: #{predict.1} parent=0 // pred_check
    _
  $region43: #{predict.1} parent=0 // pred_check_branch
    %46 = sbr.rel (0) target = $region45
  $region44: #{predict.1} parent=0 // pred_region
    _
  $region45: #{predict.1} parent=0 // pred_fallthru
    _
  // Predicated region
  $region46: #{predict.1} parent=0 // pred_check
    _
  $region47: #{predict.1} parent=0 // pred_check_branch
    %48 = sbr.rel (0) target = $region49
  $region48: #{predict.1} parent=0 // pred_region
    _
  $region49: #{predict.1} parent=0 // pred_fallthru
    _
  // Predicated region
  $region50: #{predict.1} parent=0 // pred_check
    _
  $region51: #{predict.1} parent=0 // pred_check_branch
    %50 = sbr.rel (0) target = $region53
  $region52: #{predict.1} parent=0 // pred_region
    _
  $region53: #{predict.1} parent=0 // pred_fallthru
    _
  // Predicated region
  $region54: #{predict.1} parent=0 // pred_check
    _
  $region55: #{predict.1} parent=0 // pred_check_branch
    %52 = sbr.rel (0) target = $region57
  $region56: #{predict.1} parent=0 // pred_region
    _
  $region57: #{predict.1} parent=0 // pred_fallthru
    _
  // Predicated region
  $region58: #{predict.1} parent=0 // pred_check
    _
  $region59: #{predict.1} parent=0 // pred_check_branch
    %54 = sbr.rel (0) target = $region61
  $region60: #{predict.1} parent=0 // pred_region
    _
  $region61: #{predict.1} parent=0 // pred_fallthru
    _
  // Predicated region
  $region62: #{predict.1} parent=0 // pred_check
    _
  $region63: #{predict.1} parent=0 // pred_check_branch
    %56 = sbr.rel (0) target = $region65
  $region64: #{predict.1} parent=0 // pred_region
    _
  $region65: #{predict.1} parent=0 // pred_fallthru
    _
  // Predicated region
  $region66: #{predict.1} parent=0 // pred_check
    _
  $region67: #{predict.1} parent=0 // pred_check_branch
    %58 = sbr.rel (0) target = $region69
  $region68: #{predict.1} parent=0 // pred_region
    _
  $region69: #{predict.1} parent=0 // pred_fallthru
    _
  // Predicated region
  $region70: #{predict.1} parent=0 // pred_check
    _
  $region71: #{predict.1} parent=0 // pred_check_branch
    %60 = sbr.rel (0) target = $region73
  $region72: #{predict.1} parent=0 // pred_region
    _
  $region73: #{predict.1} parent=0 // pred_fallthru
    _
  // Predicated region
  $region74: #{predict.1} parent=0 // pred_check
    _
  $region75: #{predict.1} parent=0 // pred_check_branch
    %62 = sbr.rel (0) target = $region77
  $region76: #{predict.1} parent=0 // pred_region
    _
  $region77: #{predict.1} parent=0 // pred_fallthru
    _
  // Predicated region
  $region78: #{predict.1} parent=0 // pred_check
    _
  $region79: #{predict.1} parent=0 // pred_check_branch
    %64 = sbr.rel (0) target = $region81
  $region80: #{predict.1} parent=0 // pred_region
    _
  $region81: #{predict.1} parent=0 // pred_fallthru
    _
  %v66 = vld [vmem:[%s0] sm:$0xff]
  %v67 = vld [vmem:[%s0 + $0x8] sm:$0xff]
  %v68 = vld [vmem:[%s1] sm:$0xff]
  %v69 = vld [vmem:[%s1 + $0x8] sm:$0xff]
  %v70 = vld [vmem:[%s1 + $0x10] sm:$0xff]
  %v71 = vld [vmem:[%s1 + $0x18] sm:$0xff]
  %v72 = vld [vmem:[%s1 + $0x20] sm:$0xff]
  %v73 = vld [vmem:[%s1 + $0x28] sm:$0xff]
  %v74 = vld [vmem:[%s1 + $0x30] sm:$0xff]
  %v75 = vld [vmem:[%s1 + $0x38] sm:$0xff]
  %v76 = vpack.c.bf16 %v69, %v68
  %v77 = vpack.c.bf16 %v71, %v70
  %v78 = vpack.c.bf16 %v73, %v72
  %v79 = vpack.c.bf16 %v75, %v74
  %v80 = vpack.c.bf16 %v67, %v66
  %v81 = vld [vmem:[%s2] sm:$0xf]
  %v82 = vld [vmem:[%s2 + $0x4] sm:$0xf]
  %v83 = vld [vmem:[%s2 + $0x8] sm:$0xf]
  %v84 = vld [vmem:[%s2 + $0xc] sm:$0xf]
  %v85 = vld [vmem:[%s5] sm:$0x1]
  %v87 = vlaneseq
  %v88 = vshrl.u32 %v87, 7
  %v89 = vsub.s32 0, %v88
  %v90 = vrot.slane %v85, %v89
  %v96 = vunpack.c.l.b16 %v81
  %v97 = vunpack.c.l.b16 %v82
  %v98 = vunpack.c.l.b16 %v83
  %v99 = vunpack.c.l.b16 %v84
  %v100 = vpack.c.b16 %v97, %v96
  %v101 = vpack.c.b16 %v99, %v98
  %vm104 = vcmask 261120
  %v106 = vsel %vm104, %v80, 0
  %108 = vmatprep.subr.bf16.mxu0 0
  %109 = vmatpush1.bf16.msra.mxu0 %v100
  %110 = vmatprep.subr.bf16.mxu0 0
  %111 = vmatpush1.bf16.msra.mxu0 %v101
  %112 = vmatprep.subr.bf16.mxu0 0
  %113 = vmatpush1.bf16.msra.mxu0 0
  %114 = vmatprep.subr.bf16.mxu0 0
  %115 = vmatpush1.bf16.msra.mxu0 0
  %116 = vmatprep.subr.bf16.mxu0 0
  %117 = vmatpush1.bf16.msra.mxu0 0
  %118 = vmatprep.subr.bf16.mxu0 0
  %119 = vmatpush1.bf16.msra.mxu0 0
  %120 = vmatprep.subr.bf16.mxu0 0
  %121 = vmatpush1.bf16.msra.mxu0 0
  %122 = vmatprep.subr.bf16.mxu0 0
  %123 = vmatpush1.bf16.msra.mxu0 0
  %124 = vmatprep.subr.bf16.mxu0 0
  %125 = vmatpush1.bf16.msra.mxu0 0
  %126 = vmatprep.subr.bf16.mxu0 0
  %127 = vmatpush1.bf16.msra.mxu0 0
  %128 = vmatprep.subr.bf16.mxu0 0
  %129 = vmatpush1.bf16.msra.mxu0 0
  %130 = vmatprep.subr.bf16.mxu0 0
  %131 = vmatpush1.bf16.msra.mxu0 0
  %132 = vmatprep.subr.bf16.mxu0 0
  %133 = vmatpush1.bf16.msra.mxu0 0
  %134 = vmatprep.subr.bf16.mxu0 0
  %135 = vmatpush1.bf16.msra.mxu0 0
  %136 = vmatprep.subr.bf16.mxu0 0
  %137 = vmatpush1.bf16.msra.mxu0 0
  %138 = vmatprep.subr.bf16.mxu0 0
  %139 = vmatpush1.bf16.msra.mxu0 0
  %140 = vmatprep.mubr.bf16.mxu0 0
  %141 = vmatmul.mubr.bf16.gmra.mrb[0].mxu0 %v106
  %v142 = vpop.f32.mrb[0].mxu0
  %v143 = vadd.f32 %v90, %v142
  %v144 = vpop.f32.mrb[0].mxu0
  %v145 = vpop.f32.mrb[0].mxu0
  %v146 = vadd.f32 %v90, %v145
  %v147 = vpop.f32.mrb[0].mxu0
  %148 = vdwg.mxu0
  %v149 = vld [vmem:[%s3] sm:$0xf]
  %v150 = vld [vmem:[%s3 + $0x4] sm:$0xf]
  %v151 = vld [vmem:[%s3 + $0x8] sm:$0xf]
  %v152 = vld [vmem:[%s3 + $0xc] sm:$0xf]
  %v153 = vld [vmem:[%s6] sm:$0x1]
  %v155 = vlaneseq
  %v156 = vshrl.u32 %v155, 7
  %v157 = vsub.s32 0, %v156
  %v158 = vrot.slane %v153, %v157
  %v164 = vunpack.c.l.b16 %v149
  %v165 = vunpack.c.l.b16 %v150
  %v166 = vunpack.c.l.b16 %v151
  %v167 = vunpack.c.l.b16 %v152
  %v168 = vpack.c.b16 %v165, %v164
  %v169 = vpack.c.b16 %v167, %v166
  %172 = vmatprep.subr.bf16.mxu0 0
  %173 = vmatpush1.bf16.msra.mxu0 %v168
  %174 = vmatprep.subr.bf16.mxu0 0
  %175 = vmatpush1.bf16.msra.mxu0 %v169
  %176 = vmatprep.subr.bf16.mxu0 0
  %177 = vmatpush1.bf16.msra.mxu0 0
  %178 = vmatprep.subr.bf16.mxu0 0
  %179 = vmatpush1.bf16.msra.mxu0 0
  %180 = vmatprep.subr.bf16.mxu0 0
  %181 = vmatpush1.bf16.msra.mxu0 0
  %182 = vmatprep.subr.bf16.mxu0 0
  %183 = vmatpush1.bf16.msra.mxu0 0
  %184 = vmatprep.subr.bf16.mxu0 0
  %185 = vmatpush1.bf16.msra.mxu0 0
  %186 = vmatprep.subr.bf16.mxu0 0
  %187 = vmatpush1.bf16.msra.mxu0 0
  %188 = vmatprep.subr.bf16.mxu0 0
  %189 = vmatpush1.bf16.msra.mxu0 0
  %190 = vmatprep.subr.bf16.mxu0 0
  %191 = vmatpush1.bf16.msra.mxu0 0
  %192 = vmatprep.subr.bf16.mxu0 0
  %193 = vmatpush1.bf16.msra.mxu0 0
  %194 = vmatprep.subr.bf16.mxu0 0
  %195 = vmatpush1.bf16.msra.mxu0 0
  %196 = vmatprep.subr.bf16.mxu0 0
  %197 = vmatpush1.bf16.msra.mxu0 0
  %198 = vmatprep.subr.bf16.mxu0 0
  %199 = vmatpush1.bf16.msra.mxu0 0
  %200 = vmatprep.subr.bf16.mxu0 0
  %201 = vmatpush1.bf16.msra.mxu0 0
  %202 = vmatprep.subr.bf16.mxu0 0
  %203 = vmatpush1.bf16.msra.mxu0 0
  %204 = vmatprep.mubr.bf16.mxu0 0
  %205 = vmatmul.mubr.bf16.gmra.mrb[0].mxu0 %v106
  %v206 = vpop.f32.mrb[0].mxu0
  %v207 = vadd.f32 %v158, %v206
  %v208 = vpop.f32.mrb[0].mxu0
  %v209 = vpop.f32.mrb[0].mxu0
  %v210 = vadd.f32 %v158, %v209
  %v211 = vpop.f32.mrb[0].mxu0
  %212 = vdwg.mxu0
  %v213 = vld [vmem:[%s4] sm:$0xf]
  %v214 = vld [vmem:[%s4 + $0x4] sm:$0xf]
  %v215 = vld [vmem:[%s4 + $0x8] sm:$0xf]
  %v216 = vld [vmem:[%s4 + $0xc] sm:$0xf]
  %v217 = vld [vmem:[%s7] sm:$0x1]
  %v219 = vlaneseq
  %v220 = vshrl.u32 %v219, 7
  %v221 = vsub.s32 0, %v220
  %v222 = vrot.slane %v217, %v221
  %v228 = vunpack.c.l.b16 %v213
  %v229 = vunpack.c.l.b16 %v214
  %v230 = vunpack.c.l.b16 %v215
  %v231 = vunpack.c.l.b16 %v216
  %v232 = vpack.c.b16 %v229, %v228
  %v233 = vpack.c.b16 %v231, %v230
  %236 = vmatprep.subr.bf16.mxu0 0
  %237 = vmatpush1.bf16.msra.mxu0 %v232
  %238 = vmatprep.subr.bf16.mxu0 0
  %239 = vmatpush1.bf16.msra.mxu0 %v233
  %240 = vmatprep.subr.bf16.mxu0 0
  %241 = vmatpush1.bf16.msra.mxu0 0
  %242 = vmatprep.subr.bf16.mxu0 0
  %243 = vmatpush1.bf16.msra.mxu0 0
  %244 = vmatprep.subr.bf16.mxu0 0
  %245 = vmatpush1.bf16.msra.mxu0 0
  %246 = vmatprep.subr.bf16.mxu0 0
  %247 = vmatpush1.bf16.msra.mxu0 0
  %248 = vmatprep.subr.bf16.mxu0 0
  %249 = vmatpush1.bf16.msra.mxu0 0
  %250 = vmatprep.subr.bf16.mxu0 0
  %251 = vmatpush1.bf16.msra.mxu0 0
  %252 = vmatprep.subr.bf16.mxu0 0
  %253 = vmatpush1.bf16.msra.mxu0 0
  %254 = vmatprep.subr.bf16.mxu0 0
  %255 = vmatpush1.bf16.msra.mxu0 0
  %256 = vmatprep.subr.bf16.mxu0 0
  %257 = vmatpush1.bf16.msra.mxu0 0
  %258 = vmatprep.subr.bf16.mxu0 0
  %259 = vmatpush1.bf16.msra.mxu0 0
  %260 = vmatprep.subr.bf16.mxu0 0
  %261 = vmatpush1.bf16.msra.mxu0 0
  %262 = vmatprep.subr.bf16.mxu0 0
  %263 = vmatpush1.bf16.msra.mxu0 0
  %264 = vmatprep.subr.bf16.mxu0 0
  %265 = vmatpush1.bf16.msra.mxu0 0
  %266 = vmatprep.subr.bf16.mxu0 0
  %267 = vmatpush1.bf16.msra.mxu0 0
  %268 = vmatprep.mubr.bf16.mxu0 0
  %269 = vmatmul.mubr.bf16.gmra.mrb[0].mxu0 %v106
  %v270 = vpop.f32.mrb[0].mxu0
  %v271 = vadd.f32 %v222, %v270
  %v272 = vpop.f32.mrb[0].mxu0
  %v273 = vpop.f32.mrb[0].mxu0
  %v274 = vadd.f32 %v222, %v273
  %v275 = vpop.f32.mrb[0].mxu0
  %276 = vdwg.mxu0
  %v277 = vmul.f32 %v207, %v68
  %v278 = vmul.f32 %v207, %v69
  %v279 = vmul.f32 %v207, %v70
  %v280 = vmul.f32 %v207, %v71
  %v281 = vmul.f32 %v207, %v72
  %v282 = vmul.f32 %v207, %v73
  %v283 = vmul.f32 %v207, %v74
  %v284 = vmul.f32 %v207, %v75
  %v285 = vmul.f32 %v210, %v68
  %v286 = vmul.f32 %v210, %v69
  %v287 = vmul.f32 %v210, %v70
  %v288 = vmul.f32 %v210, %v71
  %v289 = vmul.f32 %v210, %v72
  %v290 = vmul.f32 %v210, %v73
  %v291 = vmul.f32 %v210, %v74
  %v292 = vmul.f32 %v210, %v75
  %v293 = vmul.f32 %v271, %v68
  %v294 = vmul.f32 %v271, %v69
  %v295 = vmul.f32 %v271, %v70
  %v296 = vmul.f32 %v271, %v71
  %v297 = vmul.f32 %v271, %v72
  %v298 = vmul.f32 %v271, %v73
  %v299 = vmul.f32 %v271, %v74
  %v300 = vmul.f32 %v271, %v75
  %v301 = vmul.f32 %v274, %v68
  %v302 = vmul.f32 %v274, %v69
  %v303 = vmul.f32 %v274, %v70
  %v304 = vmul.f32 %v274, %v71
  %v305 = vmul.f32 %v274, %v72
  %v306 = vmul.f32 %v274, %v73
  %v307 = vmul.f32 %v274, %v74
  %v308 = vmul.f32 %v274, %v75
  %v309 = vpack.c.bf16 %v143, %v143
  %v310 = vpack.c.bf16 %v146, %v146
  %v311 = vpack.c.bf16 %v278, %v277
  %v312 = vpack.c.bf16 %v280, %v279
  %v313 = vpack.c.bf16 %v282, %v281
  %v314 = vpack.c.bf16 %v284, %v283
  %v315 = vpack.c.bf16 %v286, %v285
  %v316 = vpack.c.bf16 %v288, %v287
  %v317 = vpack.c.bf16 %v290, %v289
  %v318 = vpack.c.bf16 %v292, %v291
  %v320 = vsel %vm104, %v309, 0
  %v323 = vsel %vm104, %v311, 0
  %v326 = vsel %vm104, %v312, 0
  %v329 = vsel %vm104, %v313, 0
  %v332 = vsel %vm104, %v314, 0
  %334 = vmatprep.subr.bf16.mxu0 0
  %335 = vmatpush1.bf16.xpose.msra.mxu0 %v323
  %336 = vmatprep.subr.bf16.mxu0 0
  %337 = vmatpush1.bf16.xpose.msra.mxu0 %v326
  %338 = vmatprep.subr.bf16.mxu0 0
  %339 = vmatpush1.bf16.xpose.msra.mxu0 %v329
  %340 = vmatprep.subr.bf16.mxu0 0
  %341 = vmatpush1.bf16.xpose.msra.mxu0 %v332
  %342 = vmatprep.subr.bf16.mxu0 0
  %343 = vmatpush1.bf16.xpose.msra.mxu0 0
  %344 = vmatprep.subr.bf16.mxu0 0
  %345 = vmatpush1.bf16.xpose.msra.mxu0 0
  %346 = vmatprep.subr.bf16.mxu0 0
  %347 = vmatpush1.bf16.xpose.msra.mxu0 0
  %348 = vmatprep.subr.bf16.mxu0 0
  %349 = vmatpush1.bf16.xpose.msra.mxu0 0
  %350 = vmatprep.subr.bf16.mxu0 0
  %351 = vmatpush1.bf16.xpose.msra.mxu0 0
  %352 = vmatprep.subr.bf16.mxu0 0
  %353 = vmatpush1.bf16.xpose.msra.mxu0 0
  %354 = vmatprep.subr.bf16.mxu0 0
  %355 = vmatpush1.bf16.xpose.msra.mxu0 0
  %356 = vmatprep.subr.bf16.mxu0 0
  %357 = vmatpush1.bf16.xpose.msra.mxu0 0
  %358 = vmatprep.subr.bf16.mxu0 0
  %359 = vmatpush1.bf16.xpose.msra.mxu0 0
  %360 = vmatprep.subr.bf16.mxu0 0
  %361 = vmatpush1.bf16.xpose.msra.mxu0 0
  %362 = vmatprep.subr.bf16.mxu0 0
  %363 = vmatpush1.bf16.xpose.msra.mxu0 0
  %364 = vmatprep.subr.bf16.mxu0 0
  %365 = vmatpush1.bf16.xpose.msra.mxu0 0
  %366 = vmatprep.mubr.bf16.mxu0 0
  %367 = vmatmul.mubr.bf16.gmra.mrb[0].mxu0 %v320
  %v368 = vpop.f32.mrb[0].mxu0
  %v369 = vadd.f32 0.0, %v368
  %v370 = vpop.f32.mrb[0].mxu0
  %v371 = vpop.f32.mrb[0].mxu0
  %v372 = vpop.f32.mrb[0].mxu0
  %373 = vdwg.mxu0
  %v375 = vsel %vm104, %v310, 0
  %v378 = vsel %vm104, %v315, 0
  %v381 = vsel %vm104, %v316, 0
  %v384 = vsel %vm104, %v317, 0
  %v387 = vsel %vm104, %v318, 0
  %389 = vmatprep.subr.bf16.mxu0 0
  %390 = vmatpush1.bf16.xpose.msra.mxu0 %v378
  %391 = vmatprep.subr.bf16.mxu0 0
  %392 = vmatpush1.bf16.xpose.msra.mxu0 %v381
  %393 = vmatprep.subr.bf16.mxu0 0
  %394 = vmatpush1.bf16.xpose.msra.mxu0 %v384
  %395 = vmatprep.subr.bf16.mxu0 0
  %396 = vmatpush1.bf16.xpose.msra.mxu0 %v387
  %397 = vmatprep.subr.bf16.mxu0 0
  %398 = vmatpush1.bf16.xpose.msra.mxu0 0
  %399 = vmatprep.subr.bf16.mxu0 0
  %400 = vmatpush1.bf16.xpose.msra.mxu0 0
  %401 = vmatprep.subr.bf16.mxu0 0
  %402 = vmatpush1.bf16.xpose.msra.mxu0 0
  %403 = vmatprep.subr.bf16.mxu0 0
  %404 = vmatpush1.bf16.xpose.msra.mxu0 0
  %405 = vmatprep.subr.bf16.mxu0 0
  %406 = vmatpush1.bf16.xpose.msra.mxu0 0
  %407 = vmatprep.subr.bf16.mxu0 0
  %408 = vmatpush1.bf16.xpose.msra.mxu0 0
  %409 = vmatprep.subr.bf16.mxu0 0
  %410 = vmatpush1.bf16.xpose.msra.mxu0 0
  %411 = vmatprep.subr.bf16.mxu0 0
  %412 = vmatpush1.bf16.xpose.msra.mxu0 0
  %413 = vmatprep.subr.bf16.mxu0 0
  %414 = vmatpush1.bf16.xpose.msra.mxu0 0
  %415 = vmatprep.subr.bf16.mxu0 0
  %416 = vmatpush1.bf16.xpose.msra.mxu0 0
  %417 = vmatprep.subr.bf16.mxu0 0
  %418 = vmatpush1.bf16.xpose.msra.mxu0 0
  %419 = vmatprep.subr.bf16.mxu0 0
  %420 = vmatpush1.bf16.xpose.msra.mxu0 0
  %421 = vmatprep.mubr.bf16.mxu0 0
  %422 = vmatmul.mubr.bf16.gmra.mrb[0].mxu0 %v375
  %v423 = vpop.f32.mrb[0].mxu0
  %v424 = vadd.f32 0.0, %v423
  %v425 = vpop.f32.mrb[0].mxu0
  %v426 = vpop.f32.mrb[0].mxu0
  %v427 = vpop.f32.mrb[0].mxu0
  %428 = vdwg.mxu0
  %vm429 = vcmask 523264
  %v430 = vsel %vm429, %v369, -inf
  %431 = vmax.xlane.f32.xlu0 %v430
  %v432 = vpop.xlane.xlu0 %431
  %v433 = vsel %vm429, %v424, -inf
  %434 = vmax.xlane.f32.xlu0 %v433
  %v435 = vpop.xlane.xlu0 %434
  %v436 = vsub.f32 %v369, %v432
  %v437 = vsub.f32 %v424, %v435
  %v438 = vmul.f32 %v436, 1.442695
  %v439 = vpow.pop %v438
  %v440 = vmul.f32 %v437, 1.442695
  %v441 = vpow.pop %v440
  %v442 = vpack.c.bf16 %v441, %v439
  %v444 = vsel %vm429, %v442, 0
  %446 = vmatprep.subr.bf16.mxu0 0
  %447 = vmatpush1.bf16.msra.mxu0 %v76
  %448 = vmatprep.subr.bf16.mxu0 0
  %449 = vmatpush1.bf16.msra.mxu0 %v77
  %450 = vmatprep.subr.bf16.mxu0 0
  %451 = vmatpush1.bf16.msra.mxu0 %v78
  %452 = vmatprep.subr.bf16.mxu0 0
  %453 = vmatpush1.bf16.msra.mxu0 %v79
  %454 = vmatprep.subr.bf16.mxu0 0
  %455 = vmatpush1.bf16.msra.mxu0 0
  %456 = vmatprep.subr.bf16.mxu0 0
  %457 = vmatpush1.bf16.msra.mxu0 0
  %458 = vmatprep.subr.bf16.mxu0 0
  %459 = vmatpush1.bf16.msra.mxu0 0
  %460 = vmatprep.subr.bf16.mxu0 0
  %461 = vmatpush1.bf16.msra.mxu0 0
  %462 = vmatprep.subr.bf16.mxu0 0
  %463 = vmatpush1.bf16.msra.mxu0 0
  %464 = vmatprep.subr.bf16.mxu0 0
  %465 = vmatpush1.bf16.msra.mxu0 0
  %466 = vmatprep.subr.bf16.mxu0 0
  %467 = vmatpush1.bf16.msra.mxu0 0
  %468 = vmatprep.subr.bf16.mxu0 0
  %469 = vmatpush1.bf16.msra.mxu0 0
  %470 = vmatprep.subr.bf16.mxu0 0
  %471 = vmatpush1.bf16.msra.mxu0 0
  %472 = vmatprep.subr.bf16.mxu0 0
  %473 = vmatpush1.bf16.msra.mxu0 0
  %474 = vmatprep.subr.bf16.mxu0 0
  %475 = vmatpush1.bf16.msra.mxu0 0
  %476 = vmatprep.subr.bf16.mxu0 0
  %477 = vmatpush1.bf16.msra.mxu0 0
  %478 = vmatprep.mubr.bf16.mxu0 0
  %479 = vmatmul.mubr.bf16.gmra.mrb[0].mxu0 %v444
  %v480 = vpop.f32.mrb[0].mxu0
  %v481 = vadd.f32 0.0, %v480
  %v482 = vpop.f32.mrb[0].mxu0
  %v483 = vpop.f32.mrb[0].mxu0
  %v484 = vadd.f32 0.0, %v483
  %v485 = vpop.f32.mrb[0].mxu0
  %486 = vdwg.mxu0
  %v487 = vpack.c.bf16 %v439, %v439
  %v488 = vpack.c.bf16 %v441, %v441
  %v489 = vpack.c.bf16 %v294, %v293
  %v490 = vpack.c.bf16 %v296, %v295
  %v491 = vpack.c.bf16 %v298, %v297
  %v492 = vpack.c.bf16 %v300, %v299
  %v493 = vpack.c.bf16 %v302, %v301
  %v494 = vpack.c.bf16 %v304, %v303
  %v495 = vpack.c.bf16 %v306, %v305
  %v496 = vpack.c.bf16 %v308, %v307
  %v498 = vsel %vm429, %v487, 0
  %500 = vmatprep.subr.bf16.mxu0 0
  %501 = vmatpush1.bf16.msra.mxu0 %v489
  %502 = vmatprep.subr.bf16.mxu0 0
  %503 = vmatpush1.bf16.msra.mxu0 %v490
  %504 = vmatprep.subr.bf16.mxu0 0
  %505 = vmatpush1.bf16.msra.mxu0 %v491
  %506 = vmatprep.subr.bf16.mxu0 0
  %507 = vmatpush1.bf16.msra.mxu0 %v492
  %508 = vmatprep.subr.bf16.mxu0 0
  %509 = vmatpush1.bf16.msra.mxu0 0
  %510 = vmatprep.subr.bf16.mxu0 0
  %511 = vmatpush1.bf16.msra.mxu0 0
  %512 = vmatprep.subr.bf16.mxu0 0
  %513 = vmatpush1.bf16.msra.mxu0 0
  %514 = vmatprep.subr.bf16.mxu0 0
  %515 = vmatpush1.bf16.msra.mxu0 0
  %516 = vmatprep.subr.bf16.mxu0 0
  %517 = vmatpush1.bf16.msra.mxu0 0
  %518 = vmatprep.subr.bf16.mxu0 0
  %519 = vmatpush1.bf16.msra.mxu0 0
  %520 = vmatprep.subr.bf16.mxu0 0
  %521 = vmatpush1.bf16.msra.mxu0 0
  %522 = vmatprep.subr.bf16.mxu0 0
  %523 = vmatpush1.bf16.msra.mxu0 0
  %524 = vmatprep.subr.bf16.mxu0 0
  %525 = vmatpush1.bf16.msra.mxu0 0
  %526 = vmatprep.subr.bf16.mxu0 0
  %527 = vmatpush1.bf16.msra.mxu0 0
  %528 = vmatprep.subr.bf16.mxu0 0
  %529 = vmatpush1.bf16.msra.mxu0 0
  %530 = vmatprep.subr.bf16.mxu0 0
  %531 = vmatpush1.bf16.msra.mxu0 0
  %532 = vmatprep.mubr.bf16.mxu0 0
  %533 = vmatmul.mubr.bf16.gmra.mrb[0].mxu0 %v498
  %v534 = vpop.f32.mrb[0].mxu0
  %v535 = vadd.f32 0.0, %v534
  %v536 = vpop.f32.mrb[0].mxu0
  %v537 = vpop.f32.mrb[0].mxu0
  %v538 = vpop.f32.mrb[0].mxu0
  %539 = vdwg.mxu0
  %v541 = vsel %vm429, %v488, 0
  %543 = vmatprep.subr.bf16.mxu0 0
  %544 = vmatpush1.bf16.msra.mxu0 %v493
  %545 = vmatprep.subr.bf16.mxu0 0
  %546 = vmatpush1.bf16.msra.mxu0 %v494
  %547 = vmatprep.subr.bf16.mxu0 0
  %548 = vmatpush1.bf16.msra.mxu0 %v495
  %549 = vmatprep.subr.bf16.mxu0 0
  %550 = vmatpush1.bf16.msra.mxu0 %v496
  %551 = vmatprep.subr.bf16.mxu0 0
  %552 = vmatpush1.bf16.msra.mxu0 0
  %553 = vmatprep.subr.bf16.mxu0 0
  %554 = vmatpush1.bf16.msra.mxu0 0
  %555 = vmatprep.subr.bf16.mxu0 0
  %556 = vmatpush1.bf16.msra.mxu0 0
  %557 = vmatprep.subr.bf16.mxu0 0
  %558 = vmatpush1.bf16.msra.mxu0 0
  %559 = vmatprep.subr.bf16.mxu0 0
  %560 = vmatpush1.bf16.msra.mxu0 0
  %561 = vmatprep.subr.bf16.mxu0 0
  %562 = vmatpush1.bf16.msra.mxu0 0
  %563 = vmatprep.subr.bf16.mxu0 0
  %564 = vmatpush1.bf16.msra.mxu0 0
  %565 = vmatprep.subr.bf16.mxu0 0
  %566 = vmatpush1.bf16.msra.mxu0 0
  %567 = vmatprep.subr.bf16.mxu0 0
  %568 = vmatpush1.bf16.msra.mxu0 0
  %569 = vmatprep.subr.bf16.mxu0 0
  %570 = vmatpush1.bf16.msra.mxu0 0
  %571 = vmatprep.subr.bf16.mxu0 0
  %572 = vmatpush1.bf16.msra.mxu0 0
  %573 = vmatprep.subr.bf16.mxu0 0
  %574 = vmatpush1.bf16.msra.mxu0 0
  %575 = vmatprep.mubr.bf16.mxu0 0
  %576 = vmatmul.mubr.bf16.gmra.mrb[0].mxu0 %v541
  %v577 = vpop.f32.mrb[0].mxu0
  %v578 = vadd.f32 0.0, %v577
  %v579 = vpop.f32.mrb[0].mxu0
  %v580 = vpop.f32.mrb[0].mxu0
  %v581 = vpop.f32.mrb[0].mxu0
  %582 = vdwg.mxu0
  %v583 = vrcp.pop %v481
  %v584 = vrcp.pop %v484
  %v585 = vmul.f32 %v535, %v583
  %v586 = vmul.f32 %v578, %v584
  %v587 = vpack.c.bf16 %v586, %v585
  %v588 = vld [vmem:[%s8] sm:$0xf]
  %v589 = vld [vmem:[%s8 + $0x4] sm:$0xf]
  %v590 = vld [vmem:[%s8 + $0x8] sm:$0xf]
  %v591 = vld [vmem:[%s8 + $0xc] sm:$0xf]
  %v592 = vld [vmem:[%s9] sm:$0x1]
  %v594 = vlaneseq
  %v595 = vshrl.u32 %v594, 7
  %v596 = vsub.s32 0, %v595
  %v597 = vrot.slane %v592, %v596
  %v603 = vunpack.c.l.b16 %v588
  %v604 = vunpack.c.l.b16 %v589
  %v605 = vunpack.c.l.b16 %v590
  %v606 = vunpack.c.l.b16 %v591
  %v607 = vpack.c.b16 %v604, %v603
  %v608 = vpack.c.b16 %v606, %v605
  %v612 = vsel %vm104, %v587, 0
  %614 = vmatprep.subr.bf16.mxu0 0
  %615 = vmatpush1.bf16.msra.mxu0 %v607
  %616 = vmatprep.subr.bf16.mxu0 0
  %617 = vmatpush1.bf16.msra.mxu0 %v608
  %618 = vmatprep.subr.bf16.mxu0 0
  %619 = vmatpush1.bf16.msra.mxu0 0
  %620 = vmatprep.subr.bf16.mxu0 0
  %621 = vmatpush1.bf16.msra.mxu0 0
  %622 = vmatprep.subr.bf16.mxu0 0
  %623 = vmatpush1.bf16.msra.mxu0 0
  %624 = vmatprep.subr.bf16.mxu0 0
  %625 = vmatpush1.bf16.msra.mxu0 0
  %626 = vmatprep.subr.bf16.mxu0 0
  %627 = vmatpush1.bf16.msra.mxu0 0
  %628 = vmatprep.subr.bf16.mxu0 0
  %629 = vmatpush1.bf16.msra.mxu0 0
  %630 = vmatprep.subr.bf16.mxu0 0
  %631 = vmatpush1.bf16.msra.mxu0 0
  %632 = vmatprep.subr.bf16.mxu0 0
  %633 = vmatpush1.bf16.msra.mxu0 0
  %634 = vmatprep.subr.bf16.mxu0 0
  %635 = vmatpush1.bf16.msra.mxu0 0
  %636 = vmatprep.subr.bf16.mxu0 0
  %637 = vmatpush1.bf16.msra.mxu0 0
  %638 = vmatprep.subr.bf16.mxu0 0
  %639 = vmatpush1.bf16.msra.mxu0 0
  %640 = vmatprep.subr.bf16.mxu0 0
  %641 = vmatpush1.bf16.msra.mxu0 0
  %642 = vmatprep.subr.bf16.mxu0 0
  %643 = vmatpush1.bf16.msra.mxu0 0
  %644 = vmatprep.subr.bf16.mxu0 0
  %645 = vmatpush1.bf16.msra.mxu0 0
  %646 = vmatprep.mubr.bf16.mxu0 0
  %647 = vmatmul.mubr.bf16.gmra.mrb[0].mxu0 %v612
  %v648 = vpop.f32.mrb[0].mxu0
  %v649 = vadd.f32 %v597, %v648
  %v650 = vpop.f32.mrb[0].mxu0
  %v651 = vpop.f32.mrb[0].mxu0
  %v652 = vadd.f32 %v597, %v651
  %v653 = vpop.f32.mrb[0].mxu0
  %654 = vdwg.mxu0
  %v655 = vadd.f32 %v66, %v649
  %v656 = vadd.f32 %v67, %v652
  %v657 = vld [vmem:[%s10] sm:$0x1]
  %v658 = vld [vmem:[%s11] sm:$0x1]
  %v659 = vsel %vm104, %v655, 0.0
  %660 = vadd.xlane.f32.xlu0 %v659
  %v661 = vpop.xlane.xlu0 %660
  %v662 = vsel %vm104, %v656, 0.0
  %663 = vadd.xlane.f32.xlu0 %v662
  %v664 = vpop.xlane.xlu0 %663
  %v665 = vrcp.pop 32.0
  %v666 = vmul.f32 %v661, %v665
  %v667 = vmul.f32 %v664, %v665
  %v668 = vmul.f32 %v655, %v655
  %v669 = vmul.f32 %v656, %v656
  %v670 = vsel %vm104, %v668, 0.0
  %671 = vadd.xlane.f32.xlu0 %v670
  %v672 = vpop.xlane.xlu0 %671
  %v673 = vsel %vm104, %v669, 0.0
  %674 = vadd.xlane.f32.xlu0 %v673
  %v675 = vpop.xlane.xlu0 %674
  %v676 = vmul.f32 %v672, %v665
  %v677 = vmul.f32 %v675, %v665
  %v678 = vmul.f32 %v666, %v666
  %v679 = vmul.f32 %v667, %v667
  %v680 = vsub.f32 %v676, %v678
  %v681 = vsub.f32 %v677, %v679
  %v682 = vadd.f32 %v680, 1e-05
  %v683 = vadd.f32 %v681, 1e-05
  %v684 = vrsqrt.pop %v682
  %v685 = vrsqrt.pop %v683
  %v686 = vsub.f32 %v655, %v666
  %v687 = vsub.f32 %v656, %v667
  %v689 = vlaneseq
  %v690 = vshrl.u32 %v689, 7
  %v691 = vsub.s32 0, %v690
  %v692 = vrot.slane %v657, %v691
  %v694 = vmul.f32 %v684, %v692
  %v695 = vmul.f32 %v685, %v692
  %v696 = vmul.f32 %v686, %v694
  %v697 = vmul.f32 %v687, %v695
  %v699 = vlaneseq
  %v700 = vshrl.u32 %v699, 7
  %v701 = vsub.s32 0, %v700
  %v702 = vrot.slane %v658, %v701
  %v704 = vadd.f32 %v696, %v702
  %v705 = vadd.f32 %v697, %v702
  %v706 = vpack.c.bf16 %v705, %v704
  %v707 = vld [vmem:[%s12] sm:$0xf]
  %v708 = vld [vmem:[%s12 + $0x4] sm:$0xf]
  %v709 = vld [vmem:[%s12 + $0x8] sm:$0xf]
  %v710 = vld [vmem:[%s12 + $0xc] sm:$0xf]
  %v711 = vld [vmem:[%s13] sm:$0x1]
  %v713 = vlaneseq
  %v714 = vshrl.u32 %v713, 7
  %v715 = vsub.s32 0, %v714
  %v716 = vrot.slane %v711, %v715
  %v722 = vunpack.c.l.b16 %v707
  %v723 = vunpack.c.l.b16 %v708
  %v724 = vunpack.c.l.b16 %v709
  %v725 = vunpack.c.l.b16 %v710
  %v726 = vpack.c.b16 %v723, %v722
  %v727 = vpack.c.b16 %v725, %v724
  %v731 = vsel %vm104, %v706, 0
  %733 = vmatprep.subr.bf16.mxu0 0
  %734 = vmatpush1.bf16.msra.mxu0 %v726
  %735 = vmatprep.subr.bf16.mxu0 0
  %736 = vmatpush1.bf16.msra.mxu0 %v727
  %737 = vmatprep.subr.bf16.mxu0 0
  %738 = vmatpush1.bf16.msra.mxu0 0
  %739 = vmatprep.subr.bf16.mxu0 0
  %740 = vmatpush1.bf16.msra.mxu0 0
  %741 = vmatprep.subr.bf16.mxu0 0
  %742 = vmatpush1.bf16.msra.mxu0 0
  %743 = vmatprep.subr.bf16.mxu0 0
  %744 = vmatpush1.bf16.msra.mxu0 0
  %745 = vmatprep.subr.bf16.mxu0 0
  %746 = vmatpush1.bf16.msra.mxu0 0
  %747 = vmatprep.subr.bf16.mxu0 0
  %748 = vmatpush1.bf16.msra.mxu0 0
  %749 = vmatprep.subr.bf16.mxu0 0
  %750 = vmatpush1.bf16.msra.mxu0 0
  %751 = vmatprep.subr.bf16.mxu0 0
  %752 = vmatpush1.bf16.msra.mxu0 0
  %753 = vmatprep.subr.bf16.mxu0 0
  %754 = vmatpush1.bf16.msra.mxu0 0
  %755 = vmatprep.subr.bf16.mxu0 0
  %756 = vmatpush1.bf16.msra.mxu0 0
  %757 = vmatprep.subr.bf16.mxu0 0
  %758 = vmatpush1.bf16.msra.mxu0 0
  %759 = vmatprep.subr.bf16.mxu0 0
  %760 = vmatpush1.bf16.msra.mxu0 0
  %761 = vmatprep.subr.bf16.mxu0 0
  %762 = vmatpush1.bf16.msra.mxu0 0
  %763 = vmatprep.subr.bf16.mxu0 0
  %764 = vmatpush1.bf16.msra.mxu0 0
  %765 = vmatprep.mubr.bf16.mxu0 0
  %766 = vmatmul.mubr.bf16.gmra.mrb[0].mxu0 %v731
  %v767 = vpop.f32.mrb[0].mxu0
  %v768 = vadd.f32 %v716, %v767
  %v769 = vpop.f32.mrb[0].mxu0
  %v770 = vpop.f32.mrb[0].mxu0
  %v771 = vadd.f32 %v716, %v770
  %v772 = vpop.f32.mrb[0].mxu0
  %773 = vdwg.mxu0
  %v774 = vmax.f32 %v768, 0.0
  %v775 = vmax.f32 %v771, 0.0
  %v776 = vpack.c.bf16 %v775, %v774
  %v777 = vld [vmem:[%s14] sm:$0xf]
  %v778 = vld [vmem:[%s14 + $0x4] sm:$0xf]
  %v779 = vld [vmem:[%s14 + $0x8] sm:$0xf]
  %v780 = vld [vmem:[%s14 + $0xc] sm:$0xf]
  %v781 = vld [vmem:[%s14 + $0x10] sm:$0xf]
  %v782 = vld [vmem:[%s14 + $0x14] sm:$0xf]
  %v783 = vld [vmem:[%s14 + $0x18] sm:$0xf]
  %v784 = vld [vmem:[%s14 + $0x1c] sm:$0xf]
  %v785 = vld [vmem:[%s14 + $0x20] sm:$0xf]
  %v786 = vld [vmem:[%s14 + $0x24] sm:$0xf]
  %v787 = vld [vmem:[%s14 + $0x28] sm:$0xf]
  %v788 = vld [vmem:[%s14 + $0x2c] sm:$0xf]
  %v789 = vld [vmem:[%s14 + $0x30] sm:$0xf]
  %v790 = vld [vmem:[%s14 + $0x34] sm:$0xf]
  %v791 = vld [vmem:[%s14 + $0x38] sm:$0xf]
  %v792 = vld [vmem:[%s14 + $0x3c] sm:$0xf]
  %v793 = vld [vmem:[%s15] sm:$0x1]
  %v795 = vlaneseq
  %v796 = vshrl.u32 %v795, 7
  %v797 = vsub.s32 0, %v796
  %v798 = vrot.slane %v793, %v797
  %v816 = vunpack.c.l.b16 %v777
  %v817 = vunpack.c.l.b16 %v778
  %v818 = vunpack.c.l.b16 %v779
  %v819 = vunpack.c.l.b16 %v780
  %v820 = vunpack.c.l.b16 %v781
  %v821 = vunpack.c.l.b16 %v782
  %v822 = vunpack.c.l.b16 %v783
  %v823 = vunpack.c.l.b16 %v784
  %v824 = vunpack.c.l.b16 %v785
  %v825 = vunpack.c.l.b16 %v786
  %v826 = vunpack.c.l.b16 %v787
  %v827 = vunpack.c.l.b16 %v788
  %v828 = vunpack.c.l.b16 %v789
  %v829 = vunpack.c.l.b16 %v790
  %v830 = vunpack.c.l.b16 %v791
  %v831 = vunpack.c.l.b16 %v792
  %v832 = vpack.c.b16 %v817, %v816
  %v833 = vpack.c.b16 %v819, %v818
  %v834 = vpack.c.b16 %v821, %v820
  %v835 = vpack.c.b16 %v823, %v822
  %v836 = vpack.c.b16 %v825, %v824
  %v837 = vpack.c.b16 %v827, %v826
  %v838 = vpack.c.b16 %v829, %v828
  %v839 = vpack.c.b16 %v831, %v830
  %848 = vmatprep.subr.bf16.mxu0 0
  %849 = vmatpush1.bf16.msra.mxu0 %v832
  %850 = vmatprep.subr.bf16.mxu0 0
  %851 = vmatpush1.bf16.msra.mxu0 %v833
  %852 = vmatprep.subr.bf16.mxu0 0
  %853 = vmatpush1.bf16.msra.mxu0 %v834
  %854 = vmatprep.subr.bf16.mxu0 0
  %855 = vmatpush1.bf16.msra.mxu0 %v835
  %856 = vmatprep.subr.bf16.mxu0 0
  %857 = vmatpush1.bf16.msra.mxu0 %v836
  %858 = vmatprep.subr.bf16.mxu0 0
  %859 = vmatpush1.bf16.msra.mxu0 %v837
  %860 = vmatprep.subr.bf16.mxu0 0
  %861 = vmatpush1.bf16.msra.mxu0 %v838
  %862 = vmatprep.subr.bf16.mxu0 0
  %863 = vmatpush1.bf16.msra.mxu0 %v839
  %864 = vmatprep.subr.bf16.mxu0 0
  %865 = vmatpush1.bf16.msra.mxu0 0
  %866 = vmatprep.subr.bf16.mxu0 0
  %867 = vmatpush1.bf16.msra.mxu0 0
  %868 = vmatprep.subr.bf16.mxu0 0
  %869 = vmatpush1.bf16.msra.mxu0 0
  %870 = vmatprep.subr.bf16.mxu0 0
  %871 = vmatpush1.bf16.msra.mxu0 0
  %872 = vmatprep.subr.bf16.mxu0 0
  %873 = vmatpush1.bf16.msra.mxu0 0
  %874 = vmatprep.subr.bf16.mxu0 0
  %875 = vmatpush1.bf16.msra.mxu0 0
  %876 = vmatprep.subr.bf16.mxu0 0
  %877 = vmatpush1.bf16.msra.mxu0 0
  %878 = vmatprep.subr.bf16.mxu0 0
  %879 = vmatpush1.bf16.msra.mxu0 0
  %880 = vmatprep.mubr.bf16.mxu0 0
  %881 = vmatmul.mubr.bf16.gmra.mrb[0].mxu0 %v776
  %v882 = vpop.f32.mrb[0].mxu0
  %v883 = vadd.f32 %v798, %v882
  %v884 = vpop.f32.mrb[0].mxu0
  %v885 = vpop.f32.mrb[0].mxu0
  %v886 = vadd.f32 %v798, %v885
  %v887 = vpop.f32.mrb[0].mxu0
  %888 = vdwg.mxu0
  %v889 = vadd.f32 %v704, %v883
  %v890 = vadd.f32 %v705, %v886
  %v891 = vld [vmem:[%s16] sm:$0x1]
  %v892 = vld [vmem:[%s17] sm:$0x1]
  %v893 = vsel %vm104, %v889, 0.0
  %894 = vadd.xlane.f32.xlu0 %v893
  %v895 = vpop.xlane.xlu0 %894
  %v896 = vsel %vm104, %v890, 0.0
  %897 = vadd.xlane.f32.xlu0 %v896
  %v898 = vpop.xlane.xlu0 %897
  %v899 = vmul.f32 %v895, %v665
  %v900 = vmul.f32 %v898, %v665
  %v901 = vmul.f32 %v889, %v889
  %v902 = vmul.f32 %v890, %v890
  %v903 = vsel %vm104, %v901, 0.0
  %904 = vadd.xlane.f32.xlu0 %v903
  %v905 = vpop.xlane.xlu0 %904
  %v906 = vsel %vm104, %v902, 0.0
  %907 = vadd.xlane.f32.xlu0 %v906
  %v908 = vpop.xlane.xlu0 %907
  %v909 = vmul.f32 %v905, %v665
  %v910 = vmul.f32 %v908, %v665
  %v911 = vmul.f32 %v899, %v899
  %v912 = vmul.f32 %v900, %v900
  %v913 = vsub.f32 %v909, %v911
  %v914 = vsub.f32 %v910, %v912
  %v915 = vadd.f32 %v913, 1e-05
  %v916 = vadd.f32 %v914, 1e-05
  %v917 = vrsqrt.pop %v915
  %v918 = vrsqrt.pop %v916
  %v919 = vsub.f32 %v889, %v899
  %v920 = vsub.f32 %v890, %v900
  %v922 = vlaneseq
  %v923 = vshrl.u32 %v922, 7
  %v924 = vsub.s32 0, %v923
  %v925 = vrot.slane %v891, %v924
  %v927 = vmul.f32 %v917, %v925
  %v928 = vmul.f32 %v918, %v925
  %v929 = vmul.f32 %v919, %v927
  %v930 = vmul.f32 %v920, %v928
  %v932 = vlaneseq
  %v933 = vshrl.u32 %v932, 7
  %v934 = vsub.s32 0, %v933
  %v935 = vrot.slane %v892, %v934
  %v937 = vadd.f32 %v929, %v935
  %v938 = vadd.f32 %v930, %v935
  %v939 = vpack.c.bf16 %v938, %v937
  %s940 = scalar_lea.vmem %s2, 16
  %v941 = vld [vmem:[%s940] sm:$0xf]
  %v942 = vld [vmem:[%s940 + $0x4] sm:$0xf]
  %v943 = vld [vmem:[%s940 + $0x8] sm:$0xf]
  %v944 = vld [vmem:[%s940 + $0xc] sm:$0xf]
  %s945 = scalar_lea.vmem %s5, 1
  %v946 = vld [vmem:[%s945] sm:$0x1]
  %v948 = vlaneseq
  %v949 = vshrl.u32 %v948, 7
  %v950 = vsub.s32 0, %v949
  %v951 = vrot.slane %v946, %v950
  %v957 = vunpack.c.l.b16 %v941
  %v958 = vunpack.c.l.b16 %v942
  %v959 = vunpack.c.l.b16 %v943
  %v960 = vunpack.c.l.b16 %v944
  %v961 = vpack.c.b16 %v958, %v957
  %v962 = vpack.c.b16 %v960, %v959
  %v966 = vsel %vm104, %v939, 0
  %968 = vmatprep.subr.bf16.mxu0 0
  %969 = vmatpush1.bf16.msra.mxu0 %v961
  %970 = vmatprep.subr.bf16.mxu0 0
  %971 = vmatpush1.bf16.msra.mxu0 %v962
  %972 = vmatprep.subr.bf16.mxu0 0
  %973 = vmatpush1.bf16.msra.mxu0 0
  %974 = vmatprep.subr.bf16.mxu0 0
  %975 = vmatpush1.bf16.msra.mxu0 0
  %976 = vmatprep.subr.bf16.mxu0 0
  %977 = vmatpush1.bf16.msra.mxu0 0
  %978 = vmatprep.subr.bf16.mxu0 0
  %979 = vmatpush1.bf16.msra.mxu0 0
  %980 = vmatprep.subr.bf16.mxu0 0
  %981 = vmatpush1.bf16.msra.mxu0 0
  %982 = vmatprep.subr.bf16.mxu0 0
  %983 = vmatpush1.bf16.msra.mxu0 0
  %984 = vmatprep.subr.bf16.mxu0 0
  %985 = vmatpush1.bf16.msra.mxu0 0
  %986 = vmatprep.subr.bf16.mxu0 0
  %987 = vmatpush1.bf16.msra.mxu0 0
  %988 = vmatprep.subr.bf16.mxu0 0
  %989 = vmatpush1.bf16.msra.mxu0 0
  %990 = vmatprep.subr.bf16.mxu0 0
  %991 = vmatpush1.bf16.msra.mxu0 0
  %992 = vmatprep.subr.bf16.mxu0 0
  %993 = vmatpush1.bf16.msra.mxu0 0
  %994 = vmatprep.subr.bf16.mxu0 0
  %995 = vmatpush1.bf16.msra.mxu0 0
  %996 = vmatprep.subr.bf16.mxu0 0
  %997 = vmatpush1.bf16.msra.mxu0 0
  %998 = vmatprep.subr.bf16.mxu0 0
  %999 = vmatpush1.bf16.msra.mxu0 0
  %1000 = vmatprep.mubr.bf16.mxu0 0
  %1001 = vmatmul.mubr.bf16.gmra.mrb[0].mxu0 %v966
  %v1002 = vpop.f32.mrb[0].mxu0
  %v1003 = vadd.f32 %v951, %v1002
  %v1004 = vpop.f32.mrb[0].mxu0
  %v1005 = vpop.f32.mrb[0].mxu0
  %v1006 = vadd.f32 %v951, %v1005
  %v1007 = vpop.f32.mrb[0].mxu0
  %1008 = vdwg.mxu0
  %s1009 = scalar_lea.vmem %s3, 16
  %v1010 = vld [vmem:[%s1009] sm:$0xf]
  %v1011 = vld [vmem:[%s1009 + $0x4] sm:$0xf]
  %v1012 = vld [vmem:[%s1009 + $0x8] sm:$0xf]
  %v1013 = vld [vmem:[%s1009 + $0xc] sm:$0xf]
  %s1014 = scalar_lea.vmem %s6, 1
  %v1015 = vld [vmem:[%s1014] sm:$0x1]
  %v1017 = vlaneseq
  %v1018 = vshrl.u32 %v1017, 7
  %v1019 = vsub.s32 0, %v1018
  %v1020 = vrot.slane %v1015, %v1019
  %v1026 = vunpack.c.l.b16 %v1010
  %v1027 = vunpack.c.l.b16 %v1011
  %v1028 = vunpack.c.l.b16 %v1012
  %v1029 = vunpack.c.l.b16 %v1013
  %v1030 = vpack.c.b16 %v1027, %v1026
  %v1031 = vpack.c.b16 %v1029, %v1028
  %1034 = vmatprep.subr.bf16.mxu0 0
  %1035 = vmatpush1.bf16.msra.mxu0 %v1030
  %1036 = vmatprep.subr.bf16.mxu0 0
  %1037 = vmatpush1.bf16.msra.mxu0 %v1031
  %1038 = vmatprep.subr.bf16.mxu0 0
  %1039 = vmatpush1.bf16.msra.mxu0 0
  %1040 = vmatprep.subr.bf16.mxu0 0
  %1041 = vmatpush1.bf16.msra.mxu0 0
  %1042 = vmatprep.subr.bf16.mxu0 0
  %1043 = vmatpush1.bf16.msra.mxu0 0
  %1044 = vmatprep.subr.bf16.mxu0 0
  %1045 = vmatpush1.bf16.msra.mxu0 0
  %1046 = vmatprep.subr.bf16.mxu0 0
  %1047 = vmatpush1.bf16.msra.mxu0 0
  %1048 = vmatprep.subr.bf16.mxu0 0
  %1049 = vmatpush1.bf16.msra.mxu0 0
  %1050 = vmatprep.subr.bf16.mxu0 0
  %1051 = vmatpush1.bf16.msra.mxu0 0
  %1052 = vmatprep.subr.bf16.mxu0 0
  %1053 = vmatpush1.bf16.msra.mxu0 0
  %1054 = vmatprep.subr.bf16.mxu0 0
  %1055 = vmatpush1.bf16.msra.mxu0 0
  %1056 = vmatprep.subr.bf16.mxu0 0
  %1057 = vmatpush1.bf16.msra.mxu0 0
  %1058 = vmatprep.subr.bf16.mxu0 0
  %1059 = vmatpush1.bf16.msra.mxu0 0
  %1060 = vmatprep.subr.bf16.mxu0 0
  %1061 = vmatpush1.bf16.msra.mxu0 0
  %1062 = vmatprep.subr.bf16.mxu0 0
  %1063 = vmatpush1.bf16.msra.mxu0 0
  %1064 = vmatprep.subr.bf16.mxu0 0
  %1065 = vmatpush1.bf16.msra.mxu0 0
  %1066 = vmatprep.mubr.bf16.mxu0 0
  %1067 = vmatmul.mubr.bf16.gmra.mrb[0].mxu0 %v966
  %v1068 = vpop.f32.mrb[0].mxu0
  %v1069 = vadd.f32 %v1020, %v1068
  %v1070 = vpop.f32.mrb[0].mxu0
  %v1071 = vpop.f32.mrb[0].mxu0
  %v1072 = vadd.f32 %v1020, %v1071
  %v1073 = vpop.f32.mrb[0].mxu0
  %1074 = vdwg.mxu0
  %s1075 = scalar_lea.vmem %s4, 16
  %v1076 = vld [vmem:[%s1075] sm:$0xf]
  %v1077 = vld [vmem:[%s1075 + $0x4] sm:$0xf]
  %v1078 = vld [vmem:[%s1075 + $0x8] sm:$0xf]
  %v1079 = vld [vmem:[%s1075 + $0xc] sm:$0xf]
  %s1080 = scalar_lea.vmem %s7, 1
  %v1081 = vld [vmem:[%s1080] sm:$0x1]
  %v1083 = vlaneseq
  %v1084 = vshrl.u32 %v1083, 7
  %v1085 = vsub.s32 0, %v1084
  %v1086 = vrot.slane %v1081, %v1085
  %v1092 = vunpack.c.l.b16 %v1076
  %v1093 = vunpack.c.l.b16 %v1077
  %v1094 = vunpack.c.l.b16 %v1078
  %v1095 = vunpack.c.l.b16 %v1079
  %v1096 = vpack.c.b16 %v1093, %v1092
  %v1097 = vpack.c.b16 %v1095, %v1094
  %1100 = vmatprep.subr.bf16.mxu0 0
  %1101 = vmatpush1.bf16.msra.mxu0 %v1096
  %1102 = vmatprep.subr.bf16.mxu0 0
  %1103 = vmatpush1.bf16.msra.mxu0 %v1097
  %1104 = vmatprep.subr.bf16.mxu0 0
  %1105 = vmatpush1.bf16.msra.mxu0 0
  %1106 = vmatprep.subr.bf16.mxu0 0
  %1107 = vmatpush1.bf16.msra.mxu0 0
  %1108 = vmatprep.subr.bf16.mxu0 0
  %1109 = vmatpush1.bf16.msra.mxu0 0
  %1110 = vmatprep.subr.bf16.mxu0 0
  %1111 = vmatpush1.bf16.msra.mxu0 0
  %1112 = vmatprep.subr.bf16.mxu0 0
  %1113 = vmatpush1.bf16.msra.mxu0 0
  %1114 = vmatprep.subr.bf16.mxu0 0
  %1115 = vmatpush1.bf16.msra.mxu0 0
  %1116 = vmatprep.subr.bf16.mxu0 0
  %1117 = vmatpush1.bf16.msra.mxu0 0
  %1118 = vmatprep.subr.bf16.mxu0 0
  %1119 = vmatpush1.bf16.msra.mxu0 0
  %1120 = vmatprep.subr.bf16.mxu0 0
  %1121 = vmatpush1.bf16.msra.mxu0 0
  %1122 = vmatprep.subr.bf16.mxu0 0
  %1123 = vmatpush1.bf16.msra.mxu0 0
  %1124 = vmatprep.subr.bf16.mxu0 0
  %1125 = vmatpush1.bf16.msra.mxu0 0
  %1126 = vmatprep.subr.bf16.mxu0 0
  %1127 = vmatpush1.bf16.msra.mxu0 0
  %1128 = vmatprep.subr.bf16.mxu0 0
  %1129 = vmatpush1.bf16.msra.mxu0 0
  %1130 = vmatprep.subr.bf16.mxu0 0
  %1131 = vmatpush1.bf16.msra.mxu0 0
  %1132 = vmatprep.mubr.bf16.mxu0 0
  %1133 = vmatmul.mubr.bf16.gmra.mrb[0].mxu0 %v966
  %v1134 = vpop.f32.mrb[0].mxu0
  %v1135 = vadd.f32 %v1086, %v1134
  %v1136 = vpop.f32.mrb[0].mxu0
  %v1137 = vpop.f32.mrb[0].mxu0
  %v1138 = vadd.f32 %v1086, %v1137
  %v1139 = vpop.f32.mrb[0].mxu0
  %1140 = vdwg.mxu0
  %v1141 = vmul.f32 %v1069, %v68
  %v1142 = vmul.f32 %v1069, %v69
  %v1143 = vmul.f32 %v1069, %v70
  %v1144 = vmul.f32 %v1069, %v71
  %v1145 = vmul.f32 %v1069, %v72
  %v1146 = vmul.f32 %v1069, %v73
  %v1147 = vmul.f32 %v1069, %v74
  %v1148 = vmul.f32 %v1069, %v75
  %v1149 = vmul.f32 %v1072, %v68
  %v1150 = vmul.f32 %v1072, %v69
  %v1151 = vmul.f32 %v1072, %v70
  %v1152 = vmul.f32 %v1072, %v71
  %v1153 = vmul.f32 %v1072, %v72
  %v1154 = vmul.f32 %v1072, %v73
  %v1155 = vmul.f32 %v1072, %v74
  %v1156 = vmul.f32 %v1072, %v75
  %v1157 = vmul.f32 %v1135, %v68
  %v1158 = vmul.f32 %v1135, %v69
  %v1159 = vmul.f32 %v1135, %v70
  %v1160 = vmul.f32 %v1135, %v71
  %v1161 = vmul.f32 %v1135, %v72
  %v1162 = vmul.f32 %v1135, %v73
  %v1163 = vmul.f32 %v1135, %v74
  %v1164 = vmul.f32 %v1135, %v75
  %v1165 = vmul.f32 %v1138, %v68
  %v1166 = vmul.f32 %v1138, %v69
  %v1167 = vmul.f32 %v1138, %v70
  %v1168 = vmul.f32 %v1138, %v71
  %v1169 = vmul.f32 %v1138, %v72
  %v1170 = vmul.f32 %v1138, %v73
  %v1171 = vmul.f32 %v1138, %v74
  %v1172 = vmul.f32 %v1138, %v75
  %v1173 = vpack.c.bf16 %v1003, %v1003
  %v1174 = vpack.c.bf16 %v1006, %v1006
  %v1175 = vpack.c.bf16 %v1142, %v1141
  %v1176 = vpack.c.bf16 %v1144, %v1143
  %v1177 = vpack.c.bf16 %v1146, %v1145
  %v1178 = vpack.c.bf16 %v1148, %v1147
  %v1179 = vpack.c.bf16 %v1150, %v1149
  %v1180 = vpack.c.bf16 %v1152, %v1151
  %v1181 = vpack.c.bf16 %v1154, %v1153
  %v1182 = vpack.c.bf16 %v1156, %v1155
  %v1184 = vsel %vm104, %v1173, 0
  %v1187 = vsel %vm104, %v1175, 0
  %v1190 = vsel %vm104, %v1176, 0
  %v1193 = vsel %vm104, %v1177, 0
  %v1196 = vsel %vm104, %v1178, 0
  %1198 = vmatprep.subr.bf16.mxu0 0
  %1199 = vmatpush1.bf16.xpose.msra.mxu0 %v1187
  %1200 = vmatprep.subr.bf16.mxu0 0
  %1201 = vmatpush1.bf16.xpose.msra.mxu0 %v1190
  %1202 = vmatprep.subr.bf16.mxu0 0
  %1203 = vmatpush1.bf16.xpose.msra.mxu0 %v1193
  %1204 = vmatprep.subr.bf16.mxu0 0
  %1205 = vmatpush1.bf16.xpose.msra.mxu0 %v1196
  %1206 = vmatprep.subr.bf16.mxu0 0
  %1207 = vmatpush1.bf16.xpose.msra.mxu0 0
  %1208 = vmatprep.subr.bf16.mxu0 0
  %1209 = vmatpush1.bf16.xpose.msra.mxu0 0
  %1210 = vmatprep.subr.bf16.mxu0 0
  %1211 = vmatpush1.bf16.xpose.msra.mxu0 0
  %1212 = vmatprep.subr.bf16.mxu0 0
  %1213 = vmatpush1.bf16.xpose.msra.mxu0 0
  %1214 = vmatprep.subr.bf16.mxu0 0
  %1215 = vmatpush1.bf16.xpose.msra.mxu0 0
  %1216 = vmatprep.subr.bf16.mxu0 0
  %1217 = vmatpush1.bf16.xpose.msra.mxu0 0
  %1218 = vmatprep.subr.bf16.mxu0 0
  %1219 = vmatpush1.bf16.xpose.msra.mxu0 0
  %1220 = vmatprep.subr.bf16.mxu0 0
  %1221 = vmatpush1.bf16.xpose.msra.mxu0 0
  %1222 = vmatprep.subr.bf16.mxu0 0
  %1223 = vmatpush1.bf16.xpose.msra.mxu0 0
  %1224 = vmatprep.subr.bf16.mxu0 0
  %1225 = vmatpush1.bf16.xpose.msra.mxu0 0
  %1226 = vmatprep.subr.bf16.mxu0 0
  %1227 = vmatpush1.bf16.xpose.msra.mxu0 0
  %1228 = vmatprep.subr.bf16.mxu0 0
  %1229 = vmatpush1.bf16.xpose.msra.mxu0 0
  %1230 = vmatprep.mubr.bf16.mxu0 0
  %1231 = vmatmul.mubr.bf16.gmra.mrb[0].mxu0 %v1184
  %v1232 = vpop.f32.mrb[0].mxu0
  %v1233 = vadd.f32 0.0, %v1232
  %v1234 = vpop.f32.mrb[0].mxu0
  %v1235 = vpop.f32.mrb[0].mxu0
  %v1236 = vpop.f32.mrb[0].mxu0
  %1237 = vdwg.mxu0
  %v1239 = vsel %vm104, %v1174, 0
  %v1242 = vsel %vm104, %v1179, 0
  %v1245 = vsel %vm104, %v1180, 0
  %v1248 = vsel %vm104, %v1181, 0
  %v1251 = vsel %vm104, %v1182, 0
  %1253 = vmatprep.subr.bf16.mxu0 0
  %1254 = vmatpush1.bf16.xpose.msra.mxu0 %v1242
  %1255 = vmatprep.subr.bf16.mxu0 0
  %1256 = vmatpush1.bf16.xpose.msra.mxu0 %v1245
  %1257 = vmatprep.subr.bf16.mxu0 0
  %1258 = vmatpush1.bf16.xpose.msra.mxu0 %v1248
  %1259 = vmatprep.subr.bf16.mxu0 0
  %1260 = vmatpush1.bf16.xpose.msra.mxu0 %v1251
  %1261 = vmatprep.subr.bf16.mxu0 0
  %1262 = vmatpush1.bf16.xpose.msra.mxu0 0
  %1263 = vmatprep.subr.bf16.mxu0 0
  %1264 = vmatpush1.bf16.xpose.msra.mxu0 0
  %1265 = vmatprep.subr.bf16.mxu0 0
  %1266 = vmatpush1.bf16.xpose.msra.mxu0 0
  %1267 = vmatprep.subr.bf16.mxu0 0
  %1268 = vmatpush1.bf16.xpose.msra.mxu0 0
  %1269 = vmatprep.subr.bf16.mxu0 0
  %1270 = vmatpush1.bf16.xpose.msra.mxu0 0
  %1271 = vmatprep.subr.bf16.mxu0 0
  %1272 = vmatpush1.bf16.xpose.msra.mxu0 0
  %1273 = vmatprep.subr.bf16.mxu0 0
  %1274 = vmatpush1.bf16.xpose.msra.mxu0 0
  %1275 = vmatprep.subr.bf16.mxu0 0
  %1276 = vmatpush1.bf16.xpose.msra.mxu0 0
  %1277 = vmatprep.subr.bf16.mxu0 0
  %1278 = vmatpush1.bf16.xpose.msra.mxu0 0
  %1279 = vmatprep.subr.bf16.mxu0 0
  %1280 = vmatpush1.bf16.xpose.msra.mxu0 0
  %1281 = vmatprep.subr.bf16.mxu0 0
  %1282 = vmatpush1.bf16.xpose.msra.mxu0 0
  %1283 = vmatprep.subr.bf16.mxu0 0
  %1284 = vmatpush1.bf16.xpose.msra.mxu0 0
  %1285 = vmatprep.mubr.bf16.mxu0 0
  %1286 = vmatmul.mubr.bf16.gmra.mrb[0].mxu0 %v1239
  %v1287 = vpop.f32.mrb[0].mxu0
  %v1288 = vadd.f32 0.0, %v1287
  %v1289 = vpop.f32.mrb[0].mxu0
  %v1290 = vpop.f32.mrb[0].mxu0
  %v1291 = vpop.f32.mrb[0].mxu0
  %1292 = vdwg.mxu0
  %v1293 = vsel %vm429, %v1233, -inf
  %1294 = vmax.xlane.f32.xlu0 %v1293
  %v1295 = vpop.xlane.xlu0 %1294
  %v1296 = vsel %vm429, %v1288, -inf
  %1297 = vmax.xlane.f32.xlu0 %v1296
  %v1298 = vpop.xlane.xlu0 %1297
  %v1299 = vsub.f32 %v1233, %v1295
  %v1300 = vsub.f32 %v1288, %v1298
  %v1301 = vmul.f32 %v1299, 1.442695
  %v1302 = vpow.pop %v1301
  %v1303 = vmul.f32 %v1300, 1.442695
  %v1304 = vpow.pop %v1303
  %v1305 = vpack.c.bf16 %v1304, %v1302
  %v1307 = vsel %vm429, %v1305, 0
  %1309 = vmatprep.subr.bf16.mxu0 0
  %1310 = vmatpush1.bf16.msra.mxu0 %v76
  %1311 = vmatprep.subr.bf16.mxu0 0
  %1312 = vmatpush1.bf16.msra.mxu0 %v77
  %1313 = vmatprep.subr.bf16.mxu0 0
  %1314 = vmatpush1.bf16.msra.mxu0 %v78
  %1315 = vmatprep.subr.bf16.mxu0 0
  %1316 = vmatpush1.bf16.msra.mxu0 %v79
  %1317 = vmatprep.subr.bf16.mxu0 0
  %1318 = vmatpush1.bf16.msra.mxu0 0
  %1319 = vmatprep.subr.bf16.mxu0 0
  %1320 = vmatpush1.bf16.msra.mxu0 0
  %1321 = vmatprep.subr.bf16.mxu0 0
  %1322 = vmatpush1.bf16.msra.mxu0 0
  %1323 = vmatprep.subr.bf16.mxu0 0
  %1324 = vmatpush1.bf16.msra.mxu0 0
  %1325 = vmatprep.subr.bf16.mxu0 0
  %1326 = vmatpush1.bf16.msra.mxu0 0
  %1327 = vmatprep.subr.bf16.mxu0 0
  %1328 = vmatpush1.bf16.msra.mxu0 0
  %1329 = vmatprep.subr.bf16.mxu0 0
  %1330 = vmatpush1.bf16.msra.mxu0 0
  %1331 = vmatprep.subr.bf16.mxu0 0
  %1332 = vmatpush1.bf16.msra.mxu0 0
  %1333 = vmatprep.subr.bf16.mxu0 0
  %1334 = vmatpush1.bf16.msra.mxu0 0
  %1335 = vmatprep.subr.bf16.mxu0 0
  %1336 = vmatpush1.bf16.msra.mxu0 0
  %1337 = vmatprep.subr.bf16.mxu0 0
  %1338 = vmatpush1.bf16.msra.mxu0 0
  %1339 = vmatprep.subr.bf16.mxu0 0
  %1340 = vmatpush1.bf16.msra.mxu0 0
  %1341 = vmatprep.mubr.bf16.mxu0 0
  %1342 = vmatmul.mubr.bf16.gmra.mrb[0].mxu0 %v1307
  %v1343 = vpop.f32.mrb[0].mxu0
  %v1344 = vadd.f32 0.0, %v1343
  %v1345 = vpop.f32.mrb[0].mxu0
  %v1346 = vpop.f32.mrb[0].mxu0
  %v1347 = vadd.f32 0.0, %v1346
  %v1348 = vpop.f32.mrb[0].mxu0
  %1349 = vdwg.mxu0
  %v1350 = vpack.c.bf16 %v1302, %v1302
  %v1351 = vpack.c.bf16 %v1304, %v1304
  %v1352 = vpack.c.bf16 %v1158, %v1157
  %v1353 = vpack.c.bf16 %v1160, %v1159
  %v1354 = vpack.c.bf16 %v1162, %v1161
  %v1355 = vpack.c.bf16 %v1164, %v1163
  %v1356 = vpack.c.bf16 %v1166, %v1165
  %v1357 = vpack.c.bf16 %v1168, %v1167
  %v1358 = vpack.c.bf16 %v1170, %v1169
  %v1359 = vpack.c.bf16 %v1172, %v1171
  %v1361 = vsel %vm429, %v1350, 0
  %1363 = vmatprep.subr.bf16.mxu0 0
  %1364 = vmatpush1.bf16.msra.mxu0 %v1352
  %1365 = vmatprep.subr.bf16.mxu0 0
  %1366 = vmatpush1.bf16.msra.mxu0 %v1353
  %1367 = vmatprep.subr.bf16.mxu0 0
  %1368 = vmatpush1.bf16.msra.mxu0 %v1354
  %1369 = vmatprep.subr.bf16.mxu0 0
  %1370 = vmatpush1.bf16.msra.mxu0 %v1355
  %1371 = vmatprep.subr.bf16.mxu0 0
  %1372 = vmatpush1.bf16.msra.mxu0 0
  %1373 = vmatprep.subr.bf16.mxu0 0
  %1374 = vmatpush1.bf16.msra.mxu0 0
  %1375 = vmatprep.subr.bf16.mxu0 0
  %1376 = vmatpush1.bf16.msra.mxu0 0
  %1377 = vmatprep.subr.bf16.mxu0 0
  %1378 = vmatpush1.bf16.msra.mxu0 0
  %1379 = vmatprep.subr.bf16.mxu0 0
  %1380 = vmatpush1.bf16.msra.mxu0 0
  %1381 = vmatprep.subr.bf16.mxu0 0
  %1382 = vmatpush1.bf16.msra.mxu0 0
  %1383 = vmatprep.subr.bf16.mxu0 0
  %1384 = vmatpush1.bf16.msra.mxu0 0
  %1385 = vmatprep.subr.bf16.mxu0 0
  %1386 = vmatpush1.bf16.msra.mxu0 0
  %1387 = vmatprep.subr.bf16.mxu0 0
  %1388 = vmatpush1.bf16.msra.mxu0 0
  %1389 = vmatprep.subr.bf16.mxu0 0
  %1390 = vmatpush1.bf16.msra.mxu0 0
  %1391 = vmatprep.subr.bf16.mxu0 0
  %1392 = vmatpush1.bf16.msra.mxu0 0
  %1393 = vmatprep.subr.bf16.mxu0 0
  %1394 = vmatpush1.bf16.msra.mxu0 0
  %1395 = vmatprep.mubr.bf16.mxu0 0
  %1396 = vmatmul.mubr.bf16.gmra.mrb[0].mxu0 %v1361
  %v1397 = vpop.f32.mrb[0].mxu0
  %v1398 = vadd.f32 0.0, %v1397
  %v1399 = vpop.f32.mrb[0].mxu0
  %v1400 = vpop.f32.mrb[0].mxu0
  %v1401 = vpop.f32.mrb[0].mxu0
  %1402 = vdwg.mxu0
  %v1404 = vsel %vm429, %v1351, 0
  %1406 = vmatprep.subr.bf16.mxu0 0
  %1407 = vmatpush1.bf16.msra.mxu0 %v1356
  %1408 = vmatprep.subr.bf16.mxu0 0
  %1409 = vmatpush1.bf16.msra.mxu0 %v1357
  %1410 = vmatprep.subr.bf16.mxu0 0
  %1411 = vmatpush1.bf16.msra.mxu0 %v1358
  %1412 = vmatprep.subr.bf16.mxu0 0
  %1413 = vmatpush1.bf16.msra.mxu0 %v1359
  %1414 = vmatprep.subr.bf16.mxu0 0
  %1415 = vmatpush1.bf16.msra.mxu0 0
  %1416 = vmatprep.subr.bf16.mxu0 0
  %1417 = vmatpush1.bf16.msra.mxu0 0
  %1418 = vmatprep.subr.bf16.mxu0 0
  %1419 = vmatpush1.bf16.msra.mxu0 0
  %1420 = vmatprep.subr.bf16.mxu0 0
  %1421 = vmatpush1.bf16.msra.mxu0 0
  %1422 = vmatprep.subr.bf16.mxu0 0
  %1423 = vmatpush1.bf16.msra.mxu0 0
  %1424 = vmatprep.subr.bf16.mxu0 0
  %1425 = vmatpush1.bf16.msra.mxu0 0
  %1426 = vmatprep.subr.bf16.mxu0 0
  %1427 = vmatpush1.bf16.msra.mxu0 0
  %1428 = vmatprep.subr.bf16.mxu0 0
  %1429 = vmatpush1.bf16.msra.mxu0 0
  %1430 = vmatprep.subr.bf16.mxu0 0
  %1431 = vmatpush1.bf16.msra.mxu0 0
  %1432 = vmatprep.subr.bf16.mxu0 0
  %1433 = vmatpush1.bf16.msra.mxu0 0
  %1434 = vmatprep.subr.bf16.mxu0 0
  %1435 = vmatpush1.bf16.msra.mxu0 0
  %1436 = vmatprep.subr.bf16.mxu0 0
  %1437 = vmatpush1.bf16.msra.mxu0 0
  %1438 = vmatprep.mubr.bf16.mxu0 0
  %1439 = vmatmul.mubr.bf16.gmra.mrb[0].mxu0 %v1404
  %v1440 = vpop.f32.mrb[0].mxu0
  %v1441 = vadd.f32 0.0, %v1440
  %v1442 = vpop.f32.mrb[0].mxu0
  %v1443 = vpop.f32.mrb[0].mxu0
  %v1444 = vpop.f32.mrb[0].mxu0
  %1445 = vdwg.mxu0
  %v1446 = vrcp.pop %v1344
  %v1447 = vrcp.pop %v1347
  %v1448 = vmul.f32 %v1398, %v1446
  %v1449 = vmul.f32 %v1441, %v1447
  %v1450 = vpack.c.bf16 %v1449, %v1448
  %s1451 = scalar_lea.vmem %s8, 16
  %v1452 = vld [vmem:[%s1451] sm:$0xf]
  %v1453 = vld [vmem:[%s1451 + $0x4] sm:$0xf]
  %v1454 = vld [vmem:[%s1451 + $0x8] sm:$0xf]
  %v1455 = vld [vmem:[%s1451 + $0xc] sm:$0xf]
  %s1456 = scalar_lea.vmem %s9, 1
  %v1457 = vld [vmem:[%s1456] sm:$0x1]
  %v1459 = vlaneseq
  %v1460 = vshrl.u32 %v1459, 7
  %v1461 = vsub.s32 0, %v1460
  %v1462 = vrot.slane %v1457, %v1461
  %v1468 = vunpack.c.l.b16 %v1452
  %v1469 = vunpack.c.l.b16 %v1453
  %v1470 = vunpack.c.l.b16 %v1454
  %v1471 = vunpack.c.l.b16 %v1455
  %v1472 = vpack.c.b16 %v1469, %v1468
  %v1473 = vpack.c.b16 %v1471, %v1470
  %v1477 = vsel %vm104, %v1450, 0
  %1479 = vmatprep.subr.bf16.mxu0 0
  %1480 = vmatpush1.bf16.msra.mxu0 %v1472
  %1481 = vmatprep.subr.bf16.mxu0 0
  %1482 = vmatpush1.bf16.msra.mxu0 %v1473
  %1483 = vmatprep.subr.bf16.mxu0 0
  %1484 = vmatpush1.bf16.msra.mxu0 0
  %1485 = vmatprep.subr.bf16.mxu0 0
  %1486 = vmatpush1.bf16.msra.mxu0 0
  %1487 = vmatprep.subr.bf16.mxu0 0
  %1488 = vmatpush1.bf16.msra.mxu0 0
  %1489 = vmatprep.subr.bf16.mxu0 0
  %1490 = vmatpush1.bf16.msra.mxu0 0
  %1491 = vmatprep.subr.bf16.mxu0 0
  %1492 = vmatpush1.bf16.msra.mxu0 0
  %1493 = vmatprep.subr.bf16.mxu0 0
  %1494 = vmatpush1.bf16.msra.mxu0 0
  %1495 = vmatprep.subr.bf16.mxu0 0
  %1496 = vmatpush1.bf16.msra.mxu0 0
  %1497 = vmatprep.subr.bf16.mxu0 0
  %1498 = vmatpush1.bf16.msra.mxu0 0
  %1499 = vmatprep.subr.bf16.mxu0 0
  %1500 = vmatpush1.bf16.msra.mxu0 0
  %1501 = vmatprep.subr.bf16.mxu0 0
  %1502 = vmatpush1.bf16.msra.mxu0 0
  %1503 = vmatprep.subr.bf16.mxu0 0
  %1504 = vmatpush1.bf16.msra.mxu0 0
  %1505 = vmatprep.subr.bf16.mxu0 0
  %1506 = vmatpush1.bf16.msra.mxu0 0
  %1507 = vmatprep.subr.bf16.mxu0 0
  %1508 = vmatpush1.bf16.msra.mxu0 0
  %1509 = vmatprep.subr.bf16.mxu0 0
  %1510 = vmatpush1.bf16.msra.mxu0 0
  %1511 = vmatprep.mubr.bf16.mxu0 0
  %1512 = vmatmul.mubr.bf16.gmra.mrb[0].mxu0 %v1477
  %v1513 = vpop.f32.mrb[0].mxu0
  %v1514 = vadd.f32 %v1462, %v1513
  %v1515 = vpop.f32.mrb[0].mxu0
  %v1516 = vpop.f32.mrb[0].mxu0
  %v1517 = vadd.f32 %v1462, %v1516
  %v1518 = vpop.f32.mrb[0].mxu0
  %1519 = vdwg.mxu0
  %v1520 = vadd.f32 %v937, %v1514
  %v1521 = vadd.f32 %v938, %v1517
  %s1522 = scalar_lea.vmem %s10, 1
  %v1523 = vld [vmem:[%s1522] sm:$0x1]
  %s1524 = scalar_lea.vmem %s11, 1
  %v1525 = vld [vmem:[%s1524] sm:$0x1]
  %v1526 = vsel %vm104, %v1520, 0.0
  %1527 = vadd.xlane.f32.xlu0 %v1526
  %v1528 = vpop.xlane.xlu0 %1527
  %v1529 = vsel %vm104, %v1521, 0.0
  %1530 = vadd.xlane.f32.xlu0 %v1529
  %v1531 = vpop.xlane.xlu0 %1530
  %v1532 = vmul.f32 %v1528, %v665
  %v1533 = vmul.f32 %v1531, %v665
  %v1534 = vmul.f32 %v1520, %v1520
  %v1535 = vmul.f32 %v1521, %v1521
  %v1536 = vsel %vm104, %v1534, 0.0
  %1537 = vadd.xlane.f32.xlu0 %v1536
  %v1538 = vpop.xlane.xlu0 %1537
  %v1539 = vsel %vm104, %v1535, 0.0
  %1540 = vadd.xlane.f32.xlu0 %v1539
  %v1541 = vpop.xlane.xlu0 %1540
  %v1542 = vmul.f32 %v1538, %v665
  %v1543 = vmul.f32 %v1541, %v665
  %v1544 = vmul.f32 %v1532, %v1532
  %v1545 = vmul.f32 %v1533, %v1533
  %v1546 = vsub.f32 %v1542, %v1544
  %v1547 = vsub.f32 %v1543, %v1545
  %v1548 = vadd.f32 %v1546, 1e-05
  %v1549 = vadd.f32 %v1547, 1e-05
  %v1550 = vrsqrt.pop %v1548
  %v1551 = vrsqrt.pop %v1549
  %v1552 = vsub.f32 %v1520, %v1532
  %v1553 = vsub.f32 %v1521, %v1533
  %v1555 = vlaneseq
  %v1556 = vshrl.u32 %v1555, 7
  %v1557 = vsub.s32 0, %v1556
  %v1558 = vrot.slane %v1523, %v1557
  %v1560 = vmul.f32 %v1550, %v1558
  %v1561 = vmul.f32 %v1551, %v1558
  %v1562 = vmul.f32 %v1552, %v1560
  %v1563 = vmul.f32 %v1553, %v1561
  %v1565 = vlaneseq
  %v1566 = vshrl.u32 %v1565, 7
  %v1567 = vsub.s32 0, %v1566
  %v1568 = vrot.slane %v1525, %v1567
  %v1570 = vadd.f32 %v1562, %v1568
  %v1571 = vadd.f32 %v1563, %v1568
  %v1572 = vpack.c.bf16 %v1571, %v1570
  %s1573 = scalar_lea.vmem %s12, 16
  %v1574 = vld [vmem:[%s1573] sm:$0xf]
  %v1575 = vld [vmem:[%s1573 + $0x4] sm:$0xf]
  %v1576 = vld [vmem:[%s1573 + $0x8] sm:$0xf]
  %v1577 = vld [vmem:[%s1573 + $0xc] sm:$0xf]
  %s1578 = scalar_lea.vmem %s13, 1
  %v1579 = vld [vmem:[%s1578] sm:$0x1]
  %v1581 = vlaneseq
  %v1582 = vshrl.u32 %v1581, 7
  %v1583 = vsub.s32 0, %v1582
  %v1584 = vrot.slane %v1579, %v1583
  %v1590 = vunpack.c.l.b16 %v1574
  %v1591 = vunpack.c.l.b16 %v1575
  %v1592 = vunpack.c.l.b16 %v1576
  %v1593 = vunpack.c.l.b16 %v1577
  %v1594 = vpack.c.b16 %v1591, %v1590
  %v1595 = vpack.c.b16 %v1593, %v1592
  %v1599 = vsel %vm104, %v1572, 0
  %1601 = vmatprep.subr.bf16.mxu0 0
  %1602 = vmatpush1.bf16.msra.mxu0 %v1594
  %1603 = vmatprep.subr.bf16.mxu0 0
  %1604 = vmatpush1.bf16.msra.mxu0 %v1595
  %1605 = vmatprep.subr.bf16.mxu0 0
  %1606 = vmatpush1.bf16.msra.mxu0 0
  %1607 = vmatprep.subr.bf16.mxu0 0
  %1608 = vmatpush1.bf16.msra.mxu0 0
  %1609 = vmatprep.subr.bf16.mxu0 0
  %1610 = vmatpush1.bf16.msra.mxu0 0
  %1611 = vmatprep.subr.bf16.mxu0 0
  %1612 = vmatpush1.bf16.msra.mxu0 0
  %1613 = vmatprep.subr.bf16.mxu0 0
  %1614 = vmatpush1.bf16.msra.mxu0 0
  %1615 = vmatprep.subr.bf16.mxu0 0
  %1616 = vmatpush1.bf16.msra.mxu0 0
  %1617 = vmatprep.subr.bf16.mxu0 0
  %1618 = vmatpush1.bf16.msra.mxu0 0
  %1619 = vmatprep.subr.bf16.mxu0 0
  %1620 = vmatpush1.bf16.msra.mxu0 0
  %1621 = vmatprep.subr.bf16.mxu0 0
  %1622 = vmatpush1.bf16.msra.mxu0 0
  %1623 = vmatprep.subr.bf16.mxu0 0
  %1624 = vmatpush1.bf16.msra.mxu0 0
  %1625 = vmatprep.subr.bf16.mxu0 0
  %1626 = vmatpush1.bf16.msra.mxu0 0
  %1627 = vmatprep.subr.bf16.mxu0 0
  %1628 = vmatpush1.bf16.msra.mxu0 0
  %1629 = vmatprep.subr.bf16.mxu0 0
  %1630 = vmatpush1.bf16.msra.mxu0 0
  %1631 = vmatprep.subr.bf16.mxu0 0
  %1632 = vmatpush1.bf16.msra.mxu0 0
  %1633 = vmatprep.mubr.bf16.mxu0 0
  %1634 = vmatmul.mubr.bf16.gmra.mrb[0].mxu0 %v1599
  %v1635 = vpop.f32.mrb[0].mxu0
  %v1636 = vadd.f32 %v1584, %v1635
  %v1637 = vpop.f32.mrb[0].mxu0
  %v1638 = vpop.f32.mrb[0].mxu0
  %v1639 = vadd.f32 %v1584, %v1638
  %v1640 = vpop.f32.mrb[0].mxu0
  %1641 = vdwg.mxu0
  %v1642 = vmax.f32 %v1636, 0.0
  %v1643 = vmax.f32 %v1639, 0.0
  %v1644 = vpack.c.bf16 %v1643, %v1642
  %s1645 = scalar_lea.vmem %s14, 64
  %v1646 = vld [vmem:[%s1645] sm:$0xf]
  %v1647 = vld [vmem:[%s1645 + $0x4] sm:$0xf]
  %v1648 = vld [vmem:[%s1645 + $0x8] sm:$0xf]
  %v1649 = vld [vmem:[%s1645 + $0xc] sm:$0xf]
  %v1650 = vld [vmem:[%s1645 + $0x10] sm:$0xf]
  %v1651 = vld [vmem:[%s1645 + $0x14] sm:$0xf]
  %v1652 = vld [vmem:[%s1645 + $0x18] sm:$0xf]
  %v1653 = vld [vmem:[%s1645 + $0x1c] sm:$0xf]
  %v1654 = vld [vmem:[%s1645 + $0x20] sm:$0xf]
  %v1655 = vld [vmem:[%s1645 + $0x24] sm:$0xf]
  %v1656 = vld [vmem:[%s1645 + $0x28] sm:$0xf]
  %v1657 = vld [vmem:[%s1645 + $0x2c] sm:$0xf]
  %v1658 = vld [vmem:[%s1645 + $0x30] sm:$0xf]
  %v1659 = vld [vmem:[%s1645 + $0x34] sm:$0xf]
  %v1660 = vld [vmem:[%s1645 + $0x38] sm:$0xf]
  %v1661 = vld [vmem:[%s1645 + $0x3c] sm:$0xf]
  %s1662 = scalar_lea.vmem %s15, 1
  %v1663 = vld [vmem:[%s1662] sm:$0x1]
  %v1665 = vlaneseq
  %v1666 = vshrl.u32 %v1665, 7
  %v1667 = vsub.s32 0, %v1666
  %v1668 = vrot.slane %v1663, %v1667
  %v1686 = vunpack.c.l.b16 %v1646
  %v1687 = vunpack.c.l.b16 %v1647
  %v1688 = vunpack.c.l.b16 %v1648
  %v1689 = vunpack.c.l.b16 %v1649
  %v1690 = vunpack.c.l.b16 %v1650
  %v1691 = vunpack.c.l.b16 %v1651
  %v1692 = vunpack.c.l.b16 %v1652
  %v1693 = vunpack.c.l.b16 %v1653
  %v1694 = vunpack.c.l.b16 %v1654
  %v1695 = vunpack.c.l.b16 %v1655
  %v1696 = vunpack.c.l.b16 %v1656
  %v1697 = vunpack.c.l.b16 %v1657
  %v1698 = vunpack.c.l.b16 %v1658
  %v1699 = vunpack.c.l.b16 %v1659
  %v1700 = vunpack.c.l.b16 %v1660
  %v1701 = vunpack.c.l.b16 %v1661
  %v1702 = vpack.c.b16 %v1687, %v1686
  %v1703 = vpack.c.b16 %v1689, %v1688
  %v1704 = vpack.c.b16 %v1691, %v1690
  %v1705 = vpack.c.b16 %v1693, %v1692
  %v1706 = vpack.c.b16 %v1695, %v1694
  %v1707 = vpack.c.b16 %v1697, %v1696
  %v1708 = vpack.c.b16 %v1699, %v1698
  %v1709 = vpack.c.b16 %v1701, %v1700
  %1718 = vmatprep.subr.bf16.mxu0 0
  %1719 = vmatpush1.bf16.msra.mxu0 %v1702
  %1720 = vmatprep.subr.bf16.mxu0 0
  %1721 = vmatpush1.bf16.msra.mxu0 %v1703
  %1722 = vmatprep.subr.bf16.mxu0 0
  %1723 = vmatpush1.bf16.msra.mxu0 %v1704
  %1724 = vmatprep.subr.bf16.mxu0 0
  %1725 = vmatpush1.bf16.msra.mxu0 %v1705
  %1726 = vmatprep.subr.bf16.mxu0 0
  %1727 = vmatpush1.bf16.msra.mxu0 %v1706
  %1728 = vmatprep.subr.bf16.mxu0 0
  %1729 = vmatpush1.bf16.msra.mxu0 %v1707
  %1730 = vmatprep.subr.bf16.mxu0 0
  %1731 = vmatpush1.bf16.msra.mxu0 %v1708
  %1732 = vmatprep.subr.bf16.mxu0 0
  %1733 = vmatpush1.bf16.msra.mxu0 %v1709
  %1734 = vmatprep.subr.bf16.mxu0 0
  %1735 = vmatpush1.bf16.msra.mxu0 0
  %1736 = vmatprep.subr.bf16.mxu0 0
  %1737 = vmatpush1.bf16.msra.mxu0 0
  %1738 = vmatprep.subr.bf16.mxu0 0
  %1739 = vmatpush1.bf16.msra.mxu0 0
  %1740 = vmatprep.subr.bf16.mxu0 0
  %1741 = vmatpush1.bf16.msra.mxu0 0
  %1742 = vmatprep.subr.bf16.mxu0 0
  %1743 = vmatpush1.bf16.msra.mxu0 0
  %1744 = vmatprep.subr.bf16.mxu0 0
  %1745 = vmatpush1.bf16.msra.mxu0 0
  %1746 = vmatprep.subr.bf16.mxu0 0
  %1747 = vmatpush1.bf16.msra.mxu0 0
  %1748 = vmatprep.subr.bf16.mxu0 0
  %1749 = vmatpush1.bf16.msra.mxu0 0
  %1750 = vmatprep.mubr.bf16.mxu0 0
  %1751 = vmatmul.mubr.bf16.gmra.mrb[0].mxu0 %v1644
  %v1752 = vpop.f32.mrb[0].mxu0
  %v1753 = vadd.f32 %v1668, %v1752
  %v1754 = vpop.f32.mrb[0].mxu0
  %v1755 = vpop.f32.mrb[0].mxu0
  %v1756 = vadd.f32 %v1668, %v1755
  %v1757 = vpop.f32.mrb[0].mxu0
  %1758 = vdwg.mxu0
  %v1759 = vadd.f32 %v1570, %v1753
  %v1760 = vadd.f32 %v1571, %v1756
  %s1761 = scalar_lea.vmem %s16, 1
  %v1762 = vld [vmem:[%s1761] sm:$0x1]
  %s1763 = scalar_lea.vmem %s17, 1
  %v1764 = vld [vmem:[%s1763] sm:$0x1]
  %v1765 = vsel %vm104, %v1759, 0.0
  %1766 = vadd.xlane.f32.xlu0 %v1765
  %v1767 = vpop.xlane.xlu0 %1766
  %v1768 = vsel %vm104, %v1760, 0.0
  %1769 = vadd.xlane.f32.xlu0 %v1768
  %v1770 = vpop.xlane.xlu0 %1769
  %v1771 = vmul.f32 %v1767, %v665
  %v1772 = vmul.f32 %v1770, %v665
  %v1773 = vmul.f32 %v1759, %v1759
  %v1774 = vmul.f32 %v1760, %v1760
  %v1775 = vsel %vm104, %v1773, 0.0
  %1776 = vadd.xlane.f32.xlu0 %v1775
  %v1777 = vpop.xlane.xlu0 %1776
  %v1778 = vsel %vm104, %v1774, 0.0
  %1779 = vadd.xlane.f32.xlu0 %v1778
  %v1780 = vpop.xlane.xlu0 %1779
  %v1781 = vmul.f32 %v1777, %v665
  %v1782 = vmul.f32 %v1780, %v665
  %v1783 = vmul.f32 %v1771, %v1771
  %v1784 = vmul.f32 %v1772, %v1772
  %v1785 = vsub.f32 %v1781, %v1783
  %v1786 = vsub.f32 %v1782, %v1784
  %v1787 = vadd.f32 %v1785, 1e-05
  %v1788 = vadd.f32 %v1786, 1e-05
  %v1789 = vrsqrt.pop %v1787
  %v1790 = vrsqrt.pop %v1788
  %v1791 = vsub.f32 %v1759, %v1771
  %v1792 = vsub.f32 %v1760, %v1772
  %v1794 = vlaneseq
  %v1795 = vshrl.u32 %v1794, 7
  %v1796 = vsub.s32 0, %v1795
  %v1797 = vrot.slane %v1762, %v1796
  %v1799 = vmul.f32 %v1789, %v1797
  %v1800 = vmul.f32 %v1790, %v1797
  %v1801 = vmul.f32 %v1791, %v1799
  %v1802 = vmul.f32 %v1792, %v1800
  %v1804 = vlaneseq
  %v1805 = vshrl.u32 %v1804, 7
  %v1806 = vsub.s32 0, %v1805
  %v1807 = vrot.slane %v1764, %v1806
  %v1809 = vadd.f32 %v1801, %v1807
  %v1810 = vadd.f32 %v1802, %v1807
  %v1811 = vpack.c.bf16 %v1810, %v1809
  %s1812 = scalar_lea.vmem %s2, 32
  %v1813 = vld [vmem:[%s1812] sm:$0xf]
  %v1814 = vld [vmem:[%s1812 + $0x4] sm:$0xf]
  %v1815 = vld [vmem:[%s1812 + $0x8] sm:$0xf]
  %v1816 = vld [vmem:[%s1812 + $0xc] sm:$0xf]
  %s1817 = scalar_lea.vmem %s5, 2
  %v1818 = vld [vmem:[%s1817] sm:$0x1]
  %v1820 = vlaneseq
  %v1821 = vshrl.u32 %v1820, 7
  %v1822 = vsub.s32 0, %v1821
  %v1823 = vrot.slane %v1818, %v1822
  %v1829 = vunpack.c.l.b16 %v1813
  %v1830 = vunpack.c.l.b16 %v1814
  %v1831 = vunpack.c.l.b16 %v1815
  %v1832 = vunpack.c.l.b16 %v1816
  %v1833 = vpack.c.b16 %v1830, %v1829
  %v1834 = vpack.c.b16 %v1832, %v1831
  %v1838 = vsel %vm104, %v1811, 0
  %1840 = vmatprep.subr.bf16.mxu0 0
  %1841 = vmatpush1.bf16.msra.mxu0 %v1833
  %1842 = vmatprep.subr.bf16.mxu0 0
  %1843 = vmatpush1.bf16.msra.mxu0 %v1834
  %1844 = vmatprep.subr.bf16.mxu0 0
  %1845 = vmatpush1.bf16.msra.mxu0 0
  %1846 = vmatprep.subr.bf16.mxu0 0
  %1847 = vmatpush1.bf16.msra.mxu0 0
  %1848 = vmatprep.subr.bf16.mxu0 0
  %1849 = vmatpush1.bf16.msra.mxu0 0
  %1850 = vmatprep.subr.bf16.mxu0 0
  %1851 = vmatpush1.bf16.msra.mxu0 0
  %1852 = vmatprep.subr.bf16.mxu0 0
  %1853 = vmatpush1.bf16.msra.mxu0 0
  %1854 = vmatprep.subr.bf16.mxu0 0
  %1855 = vmatpush1.bf16.msra.mxu0 0
  %1856 = vmatprep.subr.bf16.mxu0 0
  %1857 = vmatpush1.bf16.msra.mxu0 0
  %1858 = vmatprep.subr.bf16.mxu0 0
  %1859 = vmatpush1.bf16.msra.mxu0 0
  %1860 = vmatprep.subr.bf16.mxu0 0
  %1861 = vmatpush1.bf16.msra.mxu0 0
  %1862 = vmatprep.subr.bf16.mxu0 0
  %1863 = vmatpush1.bf16.msra.mxu0 0
  %1864 = vmatprep.subr.bf16.mxu0 0
  %1865 = vmatpush1.bf16.msra.mxu0 0
  %1866 = vmatprep.subr.bf16.mxu0 0
  %1867 = vmatpush1.bf16.msra.mxu0 0
  %1868 = vmatprep.subr.bf16.mxu0 0
  %1869 = vmatpush1.bf16.msra.mxu0 0
  %1870 = vmatprep.subr.bf16.mxu0 0
  %1871 = vmatpush1.bf16.msra.mxu0 0
  %1872 = vmatprep.mubr.bf16.mxu0 0
  %1873 = vmatmul.mubr.bf16.gmra.mrb[0].mxu0 %v1838
  %v1874 = vpop.f32.mrb[0].mxu0
  %v1875 = vadd.f32 %v1823, %v1874
  %v1876 = vpop.f32.mrb[0].mxu0
  %v1877 = vpop.f32.mrb[0].mxu0
  %v1878 = vadd.f32 %v1823, %v1877
  %v1879 = vpop.f32.mrb[0].mxu0
  %1880 = vdwg.mxu0
  %s1881 = scalar_lea.vmem %s3, 32
  %v1882 = vld [vmem:[%s1881] sm:$0xf]
  %v1883 = vld [vmem:[%s1881 + $0x4] sm:$0xf]
  %v1884 = vld [vmem:[%s1881 + $0x8] sm:$0xf]
  %v1885 = vld [vmem:[%s1881 + $0xc] sm:$0xf]
  %s1886 = scalar_lea.vmem %s6, 2
  %v1887 = vld [vmem:[%s1886] sm:$0x1]
  %v1889 = vlaneseq
  %v1890 = vshrl.u32 %v1889, 7
  %v1891 = vsub.s32 0, %v1890
  %v1892 = vrot.slane %v1887, %v1891
  %v1898 = vunpack.c.l.b16 %v1882
  %v1899 = vunpack.c.l.b16 %v1883
  %v1900 = vunpack.c.l.b16 %v1884
  %v1901 = vunpack.c.l.b16 %v1885
  %v1902 = vpack.c.b16 %v1899, %v1898
  %v1903 = vpack.c.b16 %v1901, %v1900
  %1906 = vmatprep.subr.bf16.mxu0 0
  %1907 = vmatpush1.bf16.msra.mxu0 %v1902
  %1908 = vmatprep.subr.bf16.mxu0 0
  %1909 = vmatpush1.bf16.msra.mxu0 %v1903
  %1910 = vmatprep.subr.bf16.mxu0 0
  %1911 = vmatpush1.bf16.msra.mxu0 0
  %1912 = vmatprep.subr.bf16.mxu0 0
  %1913 = vmatpush1.bf16.msra.mxu0 0
  %1914 = vmatprep.subr.bf16.mxu0 0
  %1915 = vmatpush1.bf16.msra.mxu0 0
  %1916 = vmatprep.subr.bf16.mxu0 0
  %1917 = vmatpush1.bf16.msra.mxu0 0
  %1918 = vmatprep.subr.bf16.mxu0 0
  %1919 = vmatpush1.bf16.msra.mxu0 0
  %1920 = vmatprep.subr.bf16.mxu0 0
  %1921 = vmatpush1.bf16.msra.mxu0 0
  %1922 = vmatprep.subr.bf16.mxu0 0
  %1923 = vmatpush1.bf16.msra.mxu0 0
  %1924 = vmatprep.subr.bf16.mxu0 0
  %1925 = vmatpush1.bf16.msra.mxu0 0
  %1926 = vmatprep.subr.bf16.mxu0 0
  %1927 = vmatpush1.bf16.msra.mxu0 0
  %1928 = vmatprep.subr.bf16.mxu0 0
  %1929 = vmatpush1.bf16.msra.mxu0 0
  %1930 = vmatprep.subr.bf16.mxu0 0
  %1931 = vmatpush1.bf16.msra.mxu0 0
  %1932 = vmatprep.subr.bf16.mxu0 0
  %1933 = vmatpush1.bf16.msra.mxu0 0
  %1934 = vmatprep.subr.bf16.mxu0 0
  %1935 = vmatpush1.bf16.msra.mxu0 0
  %1936 = vmatprep.subr.bf16.mxu0 0
  %1937 = vmatpush1.bf16.msra.mxu0 0
  %1938 = vmatprep.mubr.bf16.mxu0 0
  %1939 = vmatmul.mubr.bf16.gmra.mrb[0].mxu0 %v1838
  %v1940 = vpop.f32.mrb[0].mxu0
  %v1941 = vadd.f32 %v1892, %v1940
  %v1942 = vpop.f32.mrb[0].mxu0
  %v1943 = vpop.f32.mrb[0].mxu0
  %v1944 = vadd.f32 %v1892, %v1943
  %v1945 = vpop.f32.mrb[0].mxu0
  %1946 = vdwg.mxu0
  %s1947 = scalar_lea.vmem %s4, 32
  %v1948 = vld [vmem:[%s1947] sm:$0xf]
  %v1949 = vld [vmem:[%s1947 + $0x4] sm:$0xf]
  %v1950 = vld [vmem:[%s1947 + $0x8] sm:$0xf]
  %v1951 = vld [vmem:[%s1947 + $0xc] sm:$0xf]
  %s1952 = scalar_lea.vmem %s7, 2
  %v1953 = vld [vmem:[%s1952] sm:$0x1]
  %v1955 = vlaneseq
  %v1956 = vshrl.u32 %v1955, 7
  %v1957 = vsub.s32 0, %v1956
  %v1958 = vrot.slane %v1953, %v1957
  %v1964 = vunpack.c.l.b16 %v1948
  %v1965 = vunpack.c.l.b16 %v1949
  %v1966 = vunpack.c.l.b16 %v1950
  %v1967 = vunpack.c.l.b16 %v1951
  %v1968 = vpack.c.b16 %v1965, %v1964
  %v1969 = vpack.c.b16 %v1967, %v1966
  %1972 = vmatprep.subr.bf16.mxu0 0
  %1973 = vmatpush1.bf16.msra.mxu0 %v1968
  %1974 = vmatprep.subr.bf16.mxu0 0
  %1975 = vmatpush1.bf16.msra.mxu0 %v1969
  %1976 = vmatprep.subr.bf16.mxu0 0
  %1977 = vmatpush1.bf16.msra.mxu0 0
  %1978 = vmatprep.subr.bf16.mxu0 0
  %1979 = vmatpush1.bf16.msra.mxu0 0
  %1980 = vmatprep.subr.bf16.mxu0 0
  %1981 = vmatpush1.bf16.msra.mxu0 0
  %1982 = vmatprep.subr.bf16.mxu0 0
  %1983 = vmatpush1.bf16.msra.mxu0 0
  %1984 = vmatprep.subr.bf16.mxu0 0
  %1985 = vmatpush1.bf16.msra.mxu0 0
  %1986 = vmatprep.subr.bf16.mxu0 0
  %1987 = vmatpush1.bf16.msra.mxu0 0
  %1988 = vmatprep.subr.bf16.mxu0 0
  %1989 = vmatpush1.bf16.msra.mxu0 0
  %1990 = vmatprep.subr.bf16.mxu0 0
  %1991 = vmatpush1.bf16.msra.mxu0 0
  %1992 = vmatprep.subr.bf16.mxu0 0
  %1993 = vmatpush1.bf16.msra.mxu0 0
  %1994 = vmatprep.subr.bf16.mxu0 0
  %1995 = vmatpush1.bf16.msra.mxu0 0
  %1996 = vmatprep.subr.bf16.mxu0 0
  %1997 = vmatpush1.bf16.msra.mxu0 0
  %1998 = vmatprep.subr.bf16.mxu0 0
  %1999 = vmatpush1.bf16.msra.mxu0 0
  %2000 = vmatprep.subr.bf16.mxu0 0
  %2001 = vmatpush1.bf16.msra.mxu0 0
  %2002 = vmatprep.subr.bf16.mxu0 0
  %2003 = vmatpush1.bf16.msra.mxu0 0
  %2004 = vmatprep.mubr.bf16.mxu0 0
  %2005 = vmatmul.mubr.bf16.gmra.mrb[0].mxu0 %v1838
  %v2006 = vpop.f32.mrb[0].mxu0
  %v2007 = vadd.f32 %v1958, %v2006
  %v2008 = vpop.f32.mrb[0].mxu0
  %v2009 = vpop.f32.mrb[0].mxu0
  %v2010 = vadd.f32 %v1958, %v2009
  %v2011 = vpop.f32.mrb[0].mxu0
  %2012 = vdwg.mxu0
  %v2013 = vmul.f32 %v1941, %v68
  %v2014 = vmul.f32 %v1941, %v69
  %v2015 = vmul.f32 %v1941, %v70
  %v2016 = vmul.f32 %v1941, %v71
  %v2017 = vmul.f32 %v1941, %v72
  %v2018 = vmul.f32 %v1941, %v73
  %v2019 = vmul.f32 %v1941, %v74
  %v2020 = vmul.f32 %v1941, %v75
  %v2021 = vmul.f32 %v1944, %v68
  %v2022 = vmul.f32 %v1944, %v69
  %v2023 = vmul.f32 %v1944, %v70
  %v2024 = vmul.f32 %v1944, %v71
  %v2025 = vmul.f32 %v1944, %v72
  %v2026 = vmul.f32 %v1944, %v73
  %v2027 = vmul.f32 %v1944, %v74
  %v2028 = vmul.f32 %v1944, %v75
  %v2029 = vmul.f32 %v2007, %v68
  %v2030 = vmul.f32 %v2007, %v69
  %v2031 = vmul.f32 %v2007, %v70
  %v2032 = vmul.f32 %v2007, %v71
  %v2033 = vmul.f32 %v2007, %v72
  %v2034 = vmul.f32 %v2007, %v73
  %v2035 = vmul.f32 %v2007, %v74
  %v2036 = vmul.f32 %v2007, %v75
  %v2037 = vmul.f32 %v2010, %v68
  %v2038 = vmul.f32 %v2010, %v69
  %v2039 = vmul.f32 %v2010, %v70
  %v2040 = vmul.f32 %v2010, %v71
  %v2041 = vmul.f32 %v2010, %v72
  %v2042 = vmul.f32 %v2010, %v73
  %v2043 = vmul.f32 %v2010, %v74
  %v2044 = vmul.f32 %v2010, %v75
  %v2045 = vpack.c.bf16 %v1875, %v1875
  %v2046 = vpack.c.bf16 %v1878, %v1878
  %v2047 = vpack.c.bf16 %v2014, %v2013
  %v2048 = vpack.c.bf16 %v2016, %v2015
  %v2049 = vpack.c.bf16 %v2018, %v2017
  %v2050 = vpack.c.bf16 %v2020, %v2019
  %v2051 = vpack.c.bf16 %v2022, %v2021
  %v2052 = vpack.c.bf16 %v2024, %v2023
  %v2053 = vpack.c.bf16 %v2026, %v2025
  %v2054 = vpack.c.bf16 %v2028, %v2027
  %v2056 = vsel %vm104, %v2045, 0
  %v2059 = vsel %vm104, %v2047, 0
  %v2062 = vsel %vm104, %v2048, 0
  %v2065 = vsel %vm104, %v2049, 0
  %v2068 = vsel %vm104, %v2050, 0
  %2070 = vmatprep.subr.bf16.mxu0 0
  %2071 = vmatpush1.bf16.xpose.msra.mxu0 %v2059
  %2072 = vmatprep.subr.bf16.mxu0 0
  %2073 = vmatpush1.bf16.xpose.msra.mxu0 %v2062
  %2074 = vmatprep.subr.bf16.mxu0 0
  %2075 = vmatpush1.bf16.xpose.msra.mxu0 %v2065
  %2076 = vmatprep.subr.bf16.mxu0 0
  %2077 = vmatpush1.bf16.xpose.msra.mxu0 %v2068
  %2078 = vmatprep.subr.bf16.mxu0 0
  %2079 = vmatpush1.bf16.xpose.msra.mxu0 0
  %2080 = vmatprep.subr.bf16.mxu0 0
  %2081 = vmatpush1.bf16.xpose.msra.mxu0 0
  %2082 = vmatprep.subr.bf16.mxu0 0
  %2083 = vmatpush1.bf16.xpose.msra.mxu0 0
  %2084 = vmatprep.subr.bf16.mxu0 0
  %2085 = vmatpush1.bf16.xpose.msra.mxu0 0
  %2086 = vmatprep.subr.bf16.mxu0 0
  %2087 = vmatpush1.bf16.xpose.msra.mxu0 0
  %2088 = vmatprep.subr.bf16.mxu0 0
  %2089 = vmatpush1.bf16.xpose.msra.mxu0 0
  %2090 = vmatprep.subr.bf16.mxu0 0
  %2091 = vmatpush1.bf16.xpose.msra.mxu0 0
  %2092 = vmatprep.subr.bf16.mxu0 0
  %2093 = vmatpush1.bf16.xpose.msra.mxu0 0
  %2094 = vmatprep.subr.bf16.mxu0 0
  %2095 = vmatpush1.bf16.xpose.msra.mxu0 0
  %2096 = vmatprep.subr.bf16.mxu0 0
  %2097 = vmatpush1.bf16.xpose.msra.mxu0 0
  %2098 = vmatprep.subr.bf16.mxu0 0
  %2099 = vmatpush1.bf16.xpose.msra.mxu0 0
  %2100 = vmatprep.subr.bf16.mxu0 0
  %2101 = vmatpush1.bf16.xpose.msra.mxu0 0
  %2102 = vmatprep.mubr.bf16.mxu0 0
  %2103 = vmatmul.mubr.bf16.gmra.mrb[0].mxu0 %v2056
  %v2104 = vpop.f32.mrb[0].mxu0
  %v2105 = vadd.f32 0.0, %v2104
  %v2106 = vpop.f32.mrb[0].mxu0
  %v2107 = vpop.f32.mrb[0].mxu0
  %v2108 = vpop.f32.mrb[0].mxu0
  %2109 = vdwg.mxu0
  %v2111 = vsel %vm104, %v2046, 0
  %v2114 = vsel %vm104, %v2051, 0
  %v2117 = vsel %vm104, %v2052, 0
  %v2120 = vsel %vm104, %v2053, 0
  %v2123 = vsel %vm104, %v2054, 0
  %2125 = vmatprep.subr.bf16.mxu0 0
  %2126 = vmatpush1.bf16.xpose.msra.mxu0 %v2114
  %2127 = vmatprep.subr.bf16.mxu0 0
  %2128 = vmatpush1.bf16.xpose.msra.mxu0 %v2117
  %2129 = vmatprep.subr.bf16.mxu0 0
  %2130 = vmatpush1.bf16.xpose.msra.mxu0 %v2120
  %2131 = vmatprep.subr.bf16.mxu0 0
  %2132 = vmatpush1.bf16.xpose.msra.mxu0 %v2123
  %2133 = vmatprep.subr.bf16.mxu0 0
  %2134 = vmatpush1.bf16.xpose.msra.mxu0 0
  %2135 = vmatprep.subr.bf16.mxu0 0
  %2136 = vmatpush1.bf16.xpose.msra.mxu0 0
  %2137 = vmatprep.subr.bf16.mxu0 0
  %2138 = vmatpush1.bf16.xpose.msra.mxu0 0
  %2139 = vmatprep.subr.bf16.mxu0 0
  %2140 = vmatpush1.bf16.xpose.msra.mxu0 0
  %2141 = vmatprep.subr.bf16.mxu0 0
  %2142 = vmatpush1.bf16.xpose.msra.mxu0 0
  %2143 = vmatprep.subr.bf16.mxu0 0
  %2144 = vmatpush1.bf16.xpose.msra.mxu0 0
  %2145 = vmatprep.subr.bf16.mxu0 0
  %2146 = vmatpush1.bf16.xpose.msra.mxu0 0
  %2147 = vmatprep.subr.bf16.mxu0 0
  %2148 = vmatpush1.bf16.xpose.msra.mxu0 0
  %2149 = vmatprep.subr.bf16.mxu0 0
  %2150 = vmatpush1.bf16.xpose.msra.mxu0 0
  %2151 = vmatprep.subr.bf16.mxu0 0
  %2152 = vmatpush1.bf16.xpose.msra.mxu0 0
  %2153 = vmatprep.subr.bf16.mxu0 0
  %2154 = vmatpush1.bf16.xpose.msra.mxu0 0
  %2155 = vmatprep.subr.bf16.mxu0 0
  %2156 = vmatpush1.bf16.xpose.msra.mxu0 0
  %2157 = vmatprep.mubr.bf16.mxu0 0
  %2158 = vmatmul.mubr.bf16.gmra.mrb[0].mxu0 %v2111
  %v2159 = vpop.f32.mrb[0].mxu0
  %v2160 = vadd.f32 0.0, %v2159
  %v2161 = vpop.f32.mrb[0].mxu0
  %v2162 = vpop.f32.mrb[0].mxu0
  %v2163 = vpop.f32.mrb[0].mxu0
  %2164 = vdwg.mxu0
  %v2165 = vsel %vm429, %v2105, -inf
  %2166 = vmax.xlane.f32.xlu0 %v2165
  %v2167 = vpop.xlane.xlu0 %2166
  %v2168 = vsel %vm429, %v2160, -inf
  %2169 = vmax.xlane.f32.xlu0 %v2168
  %v2170 = vpop.xlane.xlu0 %2169
  %v2171 = vsub.f32 %v2105, %v2167
  %v2172 = vsub.f32 %v2160, %v2170
  %v2173 = vmul.f32 %v2171, 1.442695
  %v2174 = vpow.pop %v2173
  %v2175 = vmul.f32 %v2172, 1.442695
  %v2176 = vpow.pop %v2175
  %v2177 = vpack.c.bf16 %v2176, %v2174
  %v2179 = vsel %vm429, %v2177, 0
  %2181 = vmatprep.subr.bf16.mxu0 0
  %2182 = vmatpush1.bf16.msra.mxu0 %v76
  %2183 = vmatprep.subr.bf16.mxu0 0
  %2184 = vmatpush1.bf16.msra.mxu0 %v77
  %2185 = vmatprep.subr.bf16.mxu0 0
  %2186 = vmatpush1.bf16.msra.mxu0 %v78
  %2187 = vmatprep.subr.bf16.mxu0 0
  %2188 = vmatpush1.bf16.msra.mxu0 %v79
  %2189 = vmatprep.subr.bf16.mxu0 0
  %2190 = vmatpush1.bf16.msra.mxu0 0
  %2191 = vmatprep.subr.bf16.mxu0 0
  %2192 = vmatpush1.bf16.msra.mxu0 0
  %2193 = vmatprep.subr.bf16.mxu0 0
  %2194 = vmatpush1.bf16.msra.mxu0 0
  %2195 = vmatprep.subr.bf16.mxu0 0
  %2196 = vmatpush1.bf16.msra.mxu0 0
  %2197 = vmatprep.subr.bf16.mxu0 0
  %2198 = vmatpush1.bf16.msra.mxu0 0
  %2199 = vmatprep.subr.bf16.mxu0 0
  %2200 = vmatpush1.bf16.msra.mxu0 0
  %2201 = vmatprep.subr.bf16.mxu0 0
  %2202 = vmatpush1.bf16.msra.mxu0 0
  %2203 = vmatprep.subr.bf16.mxu0 0
  %2204 = vmatpush1.bf16.msra.mxu0 0
  %2205 = vmatprep.subr.bf16.mxu0 0
  %2206 = vmatpush1.bf16.msra.mxu0 0
  %2207 = vmatprep.subr.bf16.mxu0 0
  %2208 = vmatpush1.bf16.msra.mxu0 0
  %2209 = vmatprep.subr.bf16.mxu0 0
  %2210 = vmatpush1.bf16.msra.mxu0 0
  %2211 = vmatprep.subr.bf16.mxu0 0
  %2212 = vmatpush1.bf16.msra.mxu0 0
  %2213 = vmatprep.mubr.bf16.mxu0 0
  %2214 = vmatmul.mubr.bf16.gmra.mrb[0].mxu0 %v2179
  %v2215 = vpop.f32.mrb[0].mxu0
  %v2216 = vadd.f32 0.0, %v2215
  %v2217 = vpop.f32.mrb[0].mxu0
  %v2218 = vpop.f32.mrb[0].mxu0
  %v2219 = vadd.f32 0.0, %v2218
  %v2220 = vpop.f32.mrb[0].mxu0
  %2221 = vdwg.mxu0
  %v2222 = vpack.c.bf16 %v2174, %v2174
  %v2223 = vpack.c.bf16 %v2176, %v2176
  %v2224 = vpack.c.bf16 %v2030, %v2029
  %v2225 = vpack.c.bf16 %v2032, %v2031
  %v2226 = vpack.c.bf16 %v2034, %v2033
  %v2227 = vpack.c.bf16 %v2036, %v2035
  %v2228 = vpack.c.bf16 %v2038, %v2037
  %v2229 = vpack.c.bf16 %v2040, %v2039
  %v2230 = vpack.c.bf16 %v2042, %v2041
  %v2231 = vpack.c.bf16 %v2044, %v2043
  %v2233 = vsel %vm429, %v2222, 0
  %2235 = vmatprep.subr.bf16.mxu0 0
  %2236 = vmatpush1.bf16.msra.mxu0 %v2224
  %2237 = vmatprep.subr.bf16.mxu0 0
  %2238 = vmatpush1.bf16.msra.mxu0 %v2225
  %2239 = vmatprep.subr.bf16.mxu0 0
  %2240 = vmatpush1.bf16.msra.mxu0 %v2226
  %2241 = vmatprep.subr.bf16.mxu0 0
  %2242 = vmatpush1.bf16.msra.mxu0 %v2227
  %2243 = vmatprep.subr.bf16.mxu0 0
  %2244 = vmatpush1.bf16.msra.mxu0 0
  %2245 = vmatprep.subr.bf16.mxu0 0
  %2246 = vmatpush1.bf16.msra.mxu0 0
  %2247 = vmatprep.subr.bf16.mxu0 0
  %2248 = vmatpush1.bf16.msra.mxu0 0
  %2249 = vmatprep.subr.bf16.mxu0 0
  %2250 = vmatpush1.bf16.msra.mxu0 0
  %2251 = vmatprep.subr.bf16.mxu0 0
  %2252 = vmatpush1.bf16.msra.mxu0 0
  %2253 = vmatprep.subr.bf16.mxu0 0
  %2254 = vmatpush1.bf16.msra.mxu0 0
  %2255 = vmatprep.subr.bf16.mxu0 0
  %2256 = vmatpush1.bf16.msra.mxu0 0
  %2257 = vmatprep.subr.bf16.mxu0 0
  %2258 = vmatpush1.bf16.msra.mxu0 0
  %2259 = vmatprep.subr.bf16.mxu0 0
  %2260 = vmatpush1.bf16.msra.mxu0 0
  %2261 = vmatprep.subr.bf16.mxu0 0
  %2262 = vmatpush1.bf16.msra.mxu0 0
  %2263 = vmatprep.subr.bf16.mxu0 0
  %2264 = vmatpush1.bf16.msra.mxu0 0
  %2265 = vmatprep.subr.bf16.mxu0 0
  %2266 = vmatpush1.bf16.msra.mxu0 0
  %2267 = vmatprep.mubr.bf16.mxu0 0
  %2268 = vmatmul.mubr.bf16.gmra.mrb[0].mxu0 %v2233
  %v2269 = vpop.f32.mrb[0].mxu0
  %v2270 = vadd.f32 0.0, %v2269
  %v2271 = vpop.f32.mrb[0].mxu0
  %v2272 = vpop.f32.mrb[0].mxu0
  %v2273 = vpop.f32.mrb[0].mxu0
  %2274 = vdwg.mxu0
  %v2276 = vsel %vm429, %v2223, 0
  %2278 = vmatprep.subr.bf16.mxu0 0
  %2279 = vmatpush1.bf16.msra.mxu0 %v2228
  %2280 = vmatprep.subr.bf16.mxu0 0
  %2281 = vmatpush1.bf16.msra.mxu0 %v2229
  %2282 = vmatprep.subr.bf16.mxu0 0
  %2283 = vmatpush1.bf16.msra.mxu0 %v2230
  %2284 = vmatprep.subr.bf16.mxu0 0
  %2285 = vmatpush1.bf16.msra.mxu0 %v2231
  %2286 = vmatprep.subr.bf16.mxu0 0
  %2287 = vmatpush1.bf16.msra.mxu0 0
  %2288 = vmatprep.subr.bf16.mxu0 0
  %2289 = vmatpush1.bf16.msra.mxu0 0
  %2290 = vmatprep.subr.bf16.mxu0 0
  %2291 = vmatpush1.bf16.msra.mxu0 0
  %2292 = vmatprep.subr.bf16.mxu0 0
  %2293 = vmatpush1.bf16.msra.mxu0 0
  %2294 = vmatprep.subr.bf16.mxu0 0
  %2295 = vmatpush1.bf16.msra.mxu0 0
  %2296 = vmatprep.subr.bf16.mxu0 0
  %2297 = vmatpush1.bf16.msra.mxu0 0
  %2298 = vmatprep.subr.bf16.mxu0 0
  %2299 = vmatpush1.bf16.msra.mxu0 0
  %2300 = vmatprep.subr.bf16.mxu0 0
  %2301 = vmatpush1.bf16.msra.mxu0 0
  %2302 = vmatprep.subr.bf16.mxu0 0
  %2303 = vmatpush1.bf16.msra.mxu0 0
  %2304 = vmatprep.subr.bf16.mxu0 0
  %2305 = vmatpush1.bf16.msra.mxu0 0
  %2306 = vmatprep.subr.bf16.mxu0 0
  %2307 = vmatpush1.bf16.msra.mxu0 0
  %2308 = vmatprep.subr.bf16.mxu0 0
  %2309 = vmatpush1.bf16.msra.mxu0 0
  %2310 = vmatprep.mubr.bf16.mxu0 0
  %2311 = vmatmul.mubr.bf16.gmra.mrb[0].mxu0 %v2276
  %v2312 = vpop.f32.mrb[0].mxu0
  %v2313 = vadd.f32 0.0, %v2312
  %v2314 = vpop.f32.mrb[0].mxu0
  %v2315 = vpop.f32.mrb[0].mxu0
  %v2316 = vpop.f32.mrb[0].mxu0
  %2317 = vdwg.mxu0
  %v2318 = vrcp.pop %v2216
  %v2319 = vrcp.pop %v2219
  %v2320 = vmul.f32 %v2270, %v2318
  %v2321 = vmul.f32 %v2313, %v2319
  %v2322 = vpack.c.bf16 %v2321, %v2320
  %s2323 = scalar_lea.vmem %s8, 32
  %v2324 = vld [vmem:[%s2323] sm:$0xf]
  %v2325 = vld [vmem:[%s2323 + $0x4] sm:$0xf]
  %v2326 = vld [vmem:[%s2323 + $0x8] sm:$0xf]
  %v2327 = vld [vmem:[%s2323 + $0xc] sm:$0xf]
  %s2328 = scalar_lea.vmem %s9, 2
  %v2329 = vld [vmem:[%s2328] sm:$0x1]
  %v2331 = vlaneseq
  %v2332 = vshrl.u32 %v2331, 7
  %v2333 = vsub.s32 0, %v2332
  %v2334 = vrot.slane %v2329, %v2333
  %v2340 = vunpack.c.l.b16 %v2324
  %v2341 = vunpack.c.l.b16 %v2325
  %v2342 = vunpack.c.l.b16 %v2326
  %v2343 = vunpack.c.l.b16 %v2327
  %v2344 = vpack.c.b16 %v2341, %v2340
  %v2345 = vpack.c.b16 %v2343, %v2342
  %v2349 = vsel %vm104, %v2322, 0
  %2351 = vmatprep.subr.bf16.mxu0 0
  %2352 = vmatpush1.bf16.msra.mxu0 %v2344
  %2353 = vmatprep.subr.bf16.mxu0 0
  %2354 = vmatpush1.bf16.msra.mxu0 %v2345
  %2355 = vmatprep.subr.bf16.mxu0 0
  %2356 = vmatpush1.bf16.msra.mxu0 0
  %2357 = vmatprep.subr.bf16.mxu0 0
  %2358 = vmatpush1.bf16.msra.mxu0 0
  %2359 = vmatprep.subr.bf16.mxu0 0
  %2360 = vmatpush1.bf16.msra.mxu0 0
  %2361 = vmatprep.subr.bf16.mxu0 0
  %2362 = vmatpush1.bf16.msra.mxu0 0
  %2363 = vmatprep.subr.bf16.mxu0 0
  %2364 = vmatpush1.bf16.msra.mxu0 0
  %2365 = vmatprep.subr.bf16.mxu0 0
  %2366 = vmatpush1.bf16.msra.mxu0 0
  %2367 = vmatprep.subr.bf16.mxu0 0
  %2368 = vmatpush1.bf16.msra.mxu0 0
  %2369 = vmatprep.subr.bf16.mxu0 0
  %2370 = vmatpush1.bf16.msra.mxu0 0
  %2371 = vmatprep.subr.bf16.mxu0 0
  %2372 = vmatpush1.bf16.msra.mxu0 0
  %2373 = vmatprep.subr.bf16.mxu0 0
  %2374 = vmatpush1.bf16.msra.mxu0 0
  %2375 = vmatprep.subr.bf16.mxu0 0
  %2376 = vmatpush1.bf16.msra.mxu0 0
  %2377 = vmatprep.subr.bf16.mxu0 0
  %2378 = vmatpush1.bf16.msra.mxu0 0
  %2379 = vmatprep.subr.bf16.mxu0 0
  %2380 = vmatpush1.bf16.msra.mxu0 0
  %2381 = vmatprep.subr.bf16.mxu0 0
  %2382 = vmatpush1.bf16.msra.mxu0 0
  %2383 = vmatprep.mubr.bf16.mxu0 0
  %2384 = vmatmul.mubr.bf16.gmra.mrb[0].mxu0 %v2349
  %v2385 = vpop.f32.mrb[0].mxu0
  %v2386 = vadd.f32 %v2334, %v2385
  %v2387 = vpop.f32.mrb[0].mxu0
  %v2388 = vpop.f32.mrb[0].mxu0
  %v2389 = vadd.f32 %v2334, %v2388
  %v2390 = vpop.f32.mrb[0].mxu0
  %2391 = vdwg.mxu0
  %v2392 = vadd.f32 %v1809, %v2386
  %v2393 = vadd.f32 %v1810, %v2389
  %s2394 = scalar_lea.vmem %s10, 2
  %v2395 = vld [vmem:[%s2394] sm:$0x1]
  %s2396 = scalar_lea.vmem %s11, 2
  %v2397 = vld [vmem:[%s2396] sm:$0x1]
  %v2398 = vsel %vm104, %v2392, 0.0
  %2399 = vadd.xlane.f32.xlu0 %v2398
  %v2400 = vpop.xlane.xlu0 %2399
  %v2401 = vsel %vm104, %v2393, 0.0
  %2402 = vadd.xlane.f32.xlu0 %v2401
  %v2403 = vpop.xlane.xlu0 %2402
  %v2404 = vmul.f32 %v2400, %v665
  %v2405 = vmul.f32 %v2403, %v665
  %v2406 = vmul.f32 %v2392, %v2392
  %v2407 = vmul.f32 %v2393, %v2393
  %v2408 = vsel %vm104, %v2406, 0.0
  %2409 = vadd.xlane.f32.xlu0 %v2408
  %v2410 = vpop.xlane.xlu0 %2409
  %v2411 = vsel %vm104, %v2407, 0.0
  %2412 = vadd.xlane.f32.xlu0 %v2411
  %v2413 = vpop.xlane.xlu0 %2412
  %v2414 = vmul.f32 %v2410, %v665
  %v2415 = vmul.f32 %v2413, %v665
  %v2416 = vmul.f32 %v2404, %v2404
  %v2417 = vmul.f32 %v2405, %v2405
  %v2418 = vsub.f32 %v2414, %v2416
  %v2419 = vsub.f32 %v2415, %v2417
  %v2420 = vadd.f32 %v2418, 1e-05
  %v2421 = vadd.f32 %v2419, 1e-05
  %v2422 = vrsqrt.pop %v2420
  %v2423 = vrsqrt.pop %v2421
  %v2424 = vsub.f32 %v2392, %v2404
  %v2425 = vsub.f32 %v2393, %v2405
  %v2427 = vlaneseq
  %v2428 = vshrl.u32 %v2427, 7
  %v2429 = vsub.s32 0, %v2428
  %v2430 = vrot.slane %v2395, %v2429
  %v2432 = vmul.f32 %v2422, %v2430
  %v2433 = vmul.f32 %v2423, %v2430
  %v2434 = vmul.f32 %v2424, %v2432
  %v2435 = vmul.f32 %v2425, %v2433
  %v2437 = vlaneseq
  %v2438 = vshrl.u32 %v2437, 7
  %v2439 = vsub.s32 0, %v2438
  %v2440 = vrot.slane %v2397, %v2439
  %v2442 = vadd.f32 %v2434, %v2440
  %v2443 = vadd.f32 %v2435, %v2440
  %v2444 = vpack.c.bf16 %v2443, %v2442
  %s2445 = scalar_lea.vmem %s12, 32
  %v2446 = vld [vmem:[%s2445] sm:$0xf]
  %v2447 = vld [vmem:[%s2445 + $0x4] sm:$0xf]
  %v2448 = vld [vmem:[%s2445 + $0x8] sm:$0xf]
  %v2449 = vld [vmem:[%s2445 + $0xc] sm:$0xf]
  %s2450 = scalar_lea.vmem %s13, 2
  %v2451 = vld [vmem:[%s2450] sm:$0x1]
  %v2453 = vlaneseq
  %v2454 = vshrl.u32 %v2453, 7
  %v2455 = vsub.s32 0, %v2454
  %v2456 = vrot.slane %v2451, %v2455
  %v2462 = vunpack.c.l.b16 %v2446
  %v2463 = vunpack.c.l.b16 %v2447
  %v2464 = vunpack.c.l.b16 %v2448
  %v2465 = vunpack.c.l.b16 %v2449
  %v2466 = vpack.c.b16 %v2463, %v2462
  %v2467 = vpack.c.b16 %v2465, %v2464
  %v2471 = vsel %vm104, %v2444, 0
  %2473 = vmatprep.subr.bf16.mxu0 0
  %2474 = vmatpush1.bf16.msra.mxu0 %v2466
  %2475 = vmatprep.subr.bf16.mxu0 0
  %2476 = vmatpush1.bf16.msra.mxu0 %v2467
  %2477 = vmatprep.subr.bf16.mxu0 0
  %2478 = vmatpush1.bf16.msra.mxu0 0
  %2479 = vmatprep.subr.bf16.mxu0 0
  %2480 = vmatpush1.bf16.msra.mxu0 0
  %2481 = vmatprep.subr.bf16.mxu0 0
  %2482 = vmatpush1.bf16.msra.mxu0 0
  %2483 = vmatprep.subr.bf16.mxu0 0
  %2484 = vmatpush1.bf16.msra.mxu0 0
  %2485 = vmatprep.subr.bf16.mxu0 0
  %2486 = vmatpush1.bf16.msra.mxu0 0
  %2487 = vmatprep.subr.bf16.mxu0 0
  %2488 = vmatpush1.bf16.msra.mxu0 0
  %2489 = vmatprep.subr.bf16.mxu0 0
  %2490 = vmatpush1.bf16.msra.mxu0 0
  %2491 = vmatprep.subr.bf16.mxu0 0
  %2492 = vmatpush1.bf16.msra.mxu0 0
  %2493 = vmatprep.subr.bf16.mxu0 0
  %2494 = vmatpush1.bf16.msra.mxu0 0
  %2495 = vmatprep.subr.bf16.mxu0 0
  %2496 = vmatpush1.bf16.msra.mxu0 0
  %2497 = vmatprep.subr.bf16.mxu0 0
  %2498 = vmatpush1.bf16.msra.mxu0 0
  %2499 = vmatprep.subr.bf16.mxu0 0
  %2500 = vmatpush1.bf16.msra.mxu0 0
  %2501 = vmatprep.subr.bf16.mxu0 0
  %2502 = vmatpush1.bf16.msra.mxu0 0
  %2503 = vmatprep.subr.bf16.mxu0 0
  %2504 = vmatpush1.bf16.msra.mxu0 0
  %2505 = vmatprep.mubr.bf16.mxu0 0
  %2506 = vmatmul.mubr.bf16.gmra.mrb[0].mxu0 %v2471
  %v2507 = vpop.f32.mrb[0].mxu0
  %v2508 = vadd.f32 %v2456, %v2507
  %v2509 = vpop.f32.mrb[0].mxu0
  %v2510 = vpop.f32.mrb[0].mxu0
  %v2511 = vadd.f32 %v2456, %v2510
  %v2512 = vpop.f32.mrb[0].mxu0
  %2513 = vdwg.mxu0
  %v2514 = vmax.f32 %v2508, 0.0
  %v2515 = vmax.f32 %v2511, 0.0
  %v2516 = vpack.c.bf16 %v2515, %v2514
  %s2517 = scalar_lea.vmem %s14, 128
  %v2518 = vld [vmem:[%s2517] sm:$0xf]
  %v2519 = vld [vmem:[%s2517 + $0x4] sm:$0xf]
  %v2520 = vld [vmem:[%s2517 + $0x8] sm:$0xf]
  %v2521 = vld [vmem:[%s2517 + $0xc] sm:$0xf]
  %v2522 = vld [vmem:[%s2517 + $0x10] sm:$0xf]
  %v2523 = vld [vmem:[%s2517 + $0x14] sm:$0xf]
  %v2524 = vld [vmem:[%s2517 + $0x18] sm:$0xf]
  %v2525 = vld [vmem:[%s2517 + $0x1c] sm:$0xf]
  %v2526 = vld [vmem:[%s2517 + $0x20] sm:$0xf]
  %v2527 = vld [vmem:[%s2517 + $0x24] sm:$0xf]
  %v2528 = vld [vmem:[%s2517 + $0x28] sm:$0xf]
  %v2529 = vld [vmem:[%s2517 + $0x2c] sm:$0xf]
  %v2530 = vld [vmem:[%s2517 + $0x30] sm:$0xf]
  %v2531 = vld [vmem:[%s2517 + $0x34] sm:$0xf]
  %v2532 = vld [vmem:[%s2517 + $0x38] sm:$0xf]
  %v2533 = vld [vmem:[%s2517 + $0x3c] sm:$0xf]
  %s2534 = scalar_lea.vmem %s15, 2
  %v2535 = vld [vmem:[%s2534] sm:$0x1]
  %v2537 = vlaneseq
  %v2538 = vshrl.u32 %v2537, 7
  %v2539 = vsub.s32 0, %v2538
  %v2540 = vrot.slane %v2535, %v2539
  %v2558 = vunpack.c.l.b16 %v2518
  %v2559 = vunpack.c.l.b16 %v2519
  %v2560 = vunpack.c.l.b16 %v2520
  %v2561 = vunpack.c.l.b16 %v2521
  %v2562 = vunpack.c.l.b16 %v2522
  %v2563 = vunpack.c.l.b16 %v2523
  %v2564 = vunpack.c.l.b16 %v2524
  %v2565 = vunpack.c.l.b16 %v2525
  %v2566 = vunpack.c.l.b16 %v2526
  %v2567 = vunpack.c.l.b16 %v2527
  %v2568 = vunpack.c.l.b16 %v2528
  %v2569 = vunpack.c.l.b16 %v2529
  %v2570 = vunpack.c.l.b16 %v2530
  %v2571 = vunpack.c.l.b16 %v2531
  %v2572 = vunpack.c.l.b16 %v2532
  %v2573 = vunpack.c.l.b16 %v2533
  %v2574 = vpack.c.b16 %v2559, %v2558
  %v2575 = vpack.c.b16 %v2561, %v2560
  %v2576 = vpack.c.b16 %v2563, %v2562
  %v2577 = vpack.c.b16 %v2565, %v2564
  %v2578 = vpack.c.b16 %v2567, %v2566
  %v2579 = vpack.c.b16 %v2569, %v2568
  %v2580 = vpack.c.b16 %v2571, %v2570
  %v2581 = vpack.c.b16 %v2573, %v2572
  %2590 = vmatprep.subr.bf16.mxu0 0
  %2591 = vmatpush1.bf16.msra.mxu0 %v2574
  %2592 = vmatprep.subr.bf16.mxu0 0
  %2593 = vmatpush1.bf16.msra.mxu0 %v2575
  %2594 = vmatprep.subr.bf16.mxu0 0
  %2595 = vmatpush1.bf16.msra.mxu0 %v2576
  %2596 = vmatprep.subr.bf16.mxu0 0
  %2597 = vmatpush1.bf16.msra.mxu0 %v2577
  %2598 = vmatprep.subr.bf16.mxu0 0
  %2599 = vmatpush1.bf16.msra.mxu0 %v2578
  %2600 = vmatprep.subr.bf16.mxu0 0
  %2601 = vmatpush1.bf16.msra.mxu0 %v2579
  %2602 = vmatprep.subr.bf16.mxu0 0
  %2603 = vmatpush1.bf16.msra.mxu0 %v2580
  %2604 = vmatprep.subr.bf16.mxu0 0
  %2605 = vmatpush1.bf16.msra.mxu0 %v2581
  %2606 = vmatprep.subr.bf16.mxu0 0
  %2607 = vmatpush1.bf16.msra.mxu0 0
  %2608 = vmatprep.subr.bf16.mxu0 0
  %2609 = vmatpush1.bf16.msra.mxu0 0
  %2610 = vmatprep.subr.bf16.mxu0 0
  %2611 = vmatpush1.bf16.msra.mxu0 0
  %2612 = vmatprep.subr.bf16.mxu0 0
  %2613 = vmatpush1.bf16.msra.mxu0 0
  %2614 = vmatprep.subr.bf16.mxu0 0
  %2615 = vmatpush1.bf16.msra.mxu0 0
  %2616 = vmatprep.subr.bf16.mxu0 0
  %2617 = vmatpush1.bf16.msra.mxu0 0
  %2618 = vmatprep.subr.bf16.mxu0 0
  %2619 = vmatpush1.bf16.msra.mxu0 0
  %2620 = vmatprep.subr.bf16.mxu0 0
  %2621 = vmatpush1.bf16.msra.mxu0 0
  %2622 = vmatprep.mubr.bf16.mxu0 0
  %2623 = vmatmul.mubr.bf16.gmra.mrb[0].mxu0 %v2516
  %v2624 = vpop.f32.mrb[0].mxu0
  %v2625 = vadd.f32 %v2540, %v2624
  %v2626 = vpop.f32.mrb[0].mxu0
  %v2627 = vpop.f32.mrb[0].mxu0
  %v2628 = vadd.f32 %v2540, %v2627
  %v2629 = vpop.f32.mrb[0].mxu0
  %2630 = vdwg.mxu0
  %v2631 = vadd.f32 %v2442, %v2625
  %v2632 = vadd.f32 %v2443, %v2628
  %s2633 = scalar_lea.vmem %s16, 2
  %v2634 = vld [vmem:[%s2633] sm:$0x1]
  %s2635 = scalar_lea.vmem %s17, 2
  %v2636 = vld [vmem:[%s2635] sm:$0x1]
  %v2637 = vsel %vm104, %v2631, 0.0
  %2638 = vadd.xlane.f32.xlu0 %v2637
  %v2639 = vpop.xlane.xlu0 %2638
  %v2640 = vsel %vm104, %v2632, 0.0
  %2641 = vadd.xlane.f32.xlu0 %v2640
  %v2642 = vpop.xlane.xlu0 %2641
  %v2643 = vmul.f32 %v2639, %v665
  %v2644 = vmul.f32 %v2642, %v665
  %v2645 = vmul.f32 %v2631, %v2631
  %v2646 = vmul.f32 %v2632, %v2632
  %v2647 = vsel %vm104, %v2645, 0.0
  %2648 = vadd.xlane.f32.xlu0 %v2647
  %v2649 = vpop.xlane.xlu0 %2648
  %v2650 = vsel %vm104, %v2646, 0.0
  %2651 = vadd.xlane.f32.xlu0 %v2650
  %v2652 = vpop.xlane.xlu0 %2651
  %v2653 = vmul.f32 %v2649, %v665
  %v2654 = vmul.f32 %v2652, %v665
  %v2655 = vmul.f32 %v2643, %v2643
  %v2656 = vmul.f32 %v2644, %v2644
  %v2657 = vsub.f32 %v2653, %v2655
  %v2658 = vsub.f32 %v2654, %v2656
  %v2659 = vadd.f32 %v2657, 1e-05
  %v2660 = vadd.f32 %v2658, 1e-05
  %v2661 = vrsqrt.pop %v2659
  %v2662 = vrsqrt.pop %v2660
  %v2663 = vsub.f32 %v2631, %v2643
  %v2664 = vsub.f32 %v2632, %v2644
  %v2666 = vlaneseq
  %v2667 = vshrl.u32 %v2666, 7
  %v2668 = vsub.s32 0, %v2667
  %v2669 = vrot.slane %v2634, %v2668
  %v2671 = vmul.f32 %v2661, %v2669
  %v2672 = vmul.f32 %v2662, %v2669
  %v2673 = vmul.f32 %v2663, %v2671
  %v2674 = vmul.f32 %v2664, %v2672
  %v2676 = vlaneseq
  %v2677 = vshrl.u32 %v2676, 7
  %v2678 = vsub.s32 0, %v2677
  %v2679 = vrot.slane %v2636, %v2678
  %v2681 = vadd.f32 %v2673, %v2679
  %v2682 = vadd.f32 %v2674, %v2679
  %v2683 = vpack.c.bf16 %v2682, %v2681
  %s2684 = scalar_lea.vmem %s2, 48
  %v2685 = vld [vmem:[%s2684] sm:$0xf]
  %v2686 = vld [vmem:[%s2684 + $0x4] sm:$0xf]
  %v2687 = vld [vmem:[%s2684 + $0x8] sm:$0xf]
  %v2688 = vld [vmem:[%s2684 + $0xc] sm:$0xf]
  %s2689 = scalar_lea.vmem %s5, 3
  %v2690 = vld [vmem:[%s2689] sm:$0x1]
  %v2692 = vlaneseq
  %v2693 = vshrl.u32 %v2692, 7
  %v2694 = vsub.s32 0, %v2693
  %v2695 = vrot.slane %v2690, %v2694
  %v2701 = vunpack.c.l.b16 %v2685
  %v2702 = vunpack.c.l.b16 %v2686
  %v2703 = vunpack.c.l.b16 %v2687
  %v2704 = vunpack.c.l.b16 %v2688
  %v2705 = vpack.c.b16 %v2702, %v2701
  %v2706 = vpack.c.b16 %v2704, %v2703
  %v2710 = vsel %vm104, %v2683, 0
  %2712 = vmatprep.subr.bf16.mxu0 0
  %2713 = vmatpush1.bf16.msra.mxu0 %v2705
  %2714 = vmatprep.subr.bf16.mxu0 0
  %2715 = vmatpush1.bf16.msra.mxu0 %v2706
  %2716 = vmatprep.subr.bf16.mxu0 0
  %2717 = vmatpush1.bf16.msra.mxu0 0
  %2718 = vmatprep.subr.bf16.mxu0 0
  %2719 = vmatpush1.bf16.msra.mxu0 0
  %2720 = vmatprep.subr.bf16.mxu0 0
  %2721 = vmatpush1.bf16.msra.mxu0 0
  %2722 = vmatprep.subr.bf16.mxu0 0
  %2723 = vmatpush1.bf16.msra.mxu0 0
  %2724 = vmatprep.subr.bf16.mxu0 0
  %2725 = vmatpush1.bf16.msra.mxu0 0
  %2726 = vmatprep.subr.bf16.mxu0 0
  %2727 = vmatpush1.bf16.msra.mxu0 0
  %2728 = vmatprep.subr.bf16.mxu0 0
  %2729 = vmatpush1.bf16.msra.mxu0 0
  %2730 = vmatprep.subr.bf16.mxu0 0
  %2731 = vmatpush1.bf16.msra.mxu0 0
  %2732 = vmatprep.subr.bf16.mxu0 0
  %2733 = vmatpush1.bf16.msra.mxu0 0
  %2734 = vmatprep.subr.bf16.mxu0 0
  %2735 = vmatpush1.bf16.msra.mxu0 0
  %2736 = vmatprep.subr.bf16.mxu0 0
  %2737 = vmatpush1.bf16.msra.mxu0 0
  %2738 = vmatprep.subr.bf16.mxu0 0
  %2739 = vmatpush1.bf16.msra.mxu0 0
  %2740 = vmatprep.subr.bf16.mxu0 0
  %2741 = vmatpush1.bf16.msra.mxu0 0
  %2742 = vmatprep.subr.bf16.mxu0 0
  %2743 = vmatpush1.bf16.msra.mxu0 0
  %2744 = vmatprep.mubr.bf16.mxu0 0
  %2745 = vmatmul.mubr.bf16.gmra.mrb[0].mxu0 %v2710
  %v2746 = vpop.f32.mrb[0].mxu0
  %v2747 = vadd.f32 %v2695, %v2746
  %v2748 = vpop.f32.mrb[0].mxu0
  %v2749 = vpop.f32.mrb[0].mxu0
  %v2750 = vadd.f32 %v2695, %v2749
  %v2751 = vpop.f32.mrb[0].mxu0
  %2752 = vdwg.mxu0
  %s2753 = scalar_lea.vmem %s3, 48
  %v2754 = vld [vmem:[%s2753] sm:$0xf]
  %v2755 = vld [vmem:[%s2753 + $0x4] sm:$0xf]
  %v2756 = vld [vmem:[%s2753 + $0x8] sm:$0xf]
  %v2757 = vld [vmem:[%s2753 + $0xc] sm:$0xf]
  %s2758 = scalar_lea.vmem %s6, 3
  %v2759 = vld [vmem:[%s2758] sm:$0x1]
  %v2761 = vlaneseq
  %v2762 = vshrl.u32 %v2761, 7
  %v2763 = vsub.s32 0, %v2762
  %v2764 = vrot.slane %v2759, %v2763
  %v2770 = vunpack.c.l.b16 %v2754
  %v2771 = vunpack.c.l.b16 %v2755
  %v2772 = vunpack.c.l.b16 %v2756
  %v2773 = vunpack.c.l.b16 %v2757
  %v2774 = vpack.c.b16 %v2771, %v2770
  %v2775 = vpack.c.b16 %v2773, %v2772
  %2778 = vmatprep.subr.bf16.mxu0 0
  %2779 = vmatpush1.bf16.msra.mxu0 %v2774
  %2780 = vmatprep.subr.bf16.mxu0 0
  %2781 = vmatpush1.bf16.msra.mxu0 %v2775
  %2782 = vmatprep.subr.bf16.mxu0 0
  %2783 = vmatpush1.bf16.msra.mxu0 0
  %2784 = vmatprep.subr.bf16.mxu0 0
  %2785 = vmatpush1.bf16.msra.mxu0 0
  %2786 = vmatprep.subr.bf16.mxu0 0
  %2787 = vmatpush1.bf16.msra.mxu0 0
  %2788 = vmatprep.subr.bf16.mxu0 0
  %2789 = vmatpush1.bf16.msra.mxu0 0
  %2790 = vmatprep.subr.bf16.mxu0 0
  %2791 = vmatpush1.bf16.msra.mxu0 0
  %2792 = vmatprep.subr.bf16.mxu0 0
  %2793 = vmatpush1.bf16.msra.mxu0 0
  %2794 = vmatprep.subr.bf16.mxu0 0
  %2795 = vmatpush1.bf16.msra.mxu0 0
  %2796 = vmatprep.subr.bf16.mxu0 0
  %2797 = vmatpush1.bf16.msra.mxu0 0
  %2798 = vmatprep.subr.bf16.mxu0 0
  %2799 = vmatpush1.bf16.msra.mxu0 0
  %2800 = vmatprep.subr.bf16.mxu0 0
  %2801 = vmatpush1.bf16.msra.mxu0 0
  %2802 = vmatprep.subr.bf16.mxu0 0
  %2803 = vmatpush1.bf16.msra.mxu0 0
  %2804 = vmatprep.subr.bf16.mxu0 0
  %2805 = vmatpush1.bf16.msra.mxu0 0
  %2806 = vmatprep.subr.bf16.mxu0 0
  %2807 = vmatpush1.bf16.msra.mxu0 0
  %2808 = vmatprep.subr.bf16.mxu0 0
  %2809 = vmatpush1.bf16.msra.mxu0 0
  %2810 = vmatprep.mubr.bf16.mxu0 0
  %2811 = vmatmul.mubr.bf16.gmra.mrb[0].mxu0 %v2710
  %v2812 = vpop.f32.mrb[0].mxu0
  %v2813 = vadd.f32 %v2764, %v2812
  %v2814 = vpop.f32.mrb[0].mxu0
  %v2815 = vpop.f32.mrb[0].mxu0
  %v2816 = vadd.f32 %v2764, %v2815
  %v2817 = vpop.f32.mrb[0].mxu0
  %2818 = vdwg.mxu0
  %s2819 = scalar_lea.vmem %s4, 48
  %v2820 = vld [vmem:[%s2819] sm:$0xf]
  %v2821 = vld [vmem:[%s2819 + $0x4] sm:$0xf]
  %v2822 = vld [vmem:[%s2819 + $0x8] sm:$0xf]
  %v2823 = vld [vmem:[%s2819 + $0xc] sm:$0xf]
  %s2824 = scalar_lea.vmem %s7, 3
  %v2825 = vld [vmem:[%s2824] sm:$0x1]
  %v2827 = vlaneseq
  %v2828 = vshrl.u32 %v2827, 7
  %v2829 = vsub.s32 0, %v2828
  %v2830 = vrot.slane %v2825, %v2829
  %v2836 = vunpack.c.l.b16 %v2820
  %v2837 = vunpack.c.l.b16 %v2821
  %v2838 = vunpack.c.l.b16 %v2822
  %v2839 = vunpack.c.l.b16 %v2823
  %v2840 = vpack.c.b16 %v2837, %v2836
  %v2841 = vpack.c.b16 %v2839, %v2838
  %2844 = vmatprep.subr.bf16.mxu0 0
  %2845 = vmatpush1.bf16.msra.mxu0 %v2840
  %2846 = vmatprep.subr.bf16.mxu0 0
  %2847 = vmatpush1.bf16.msra.mxu0 %v2841
  %2848 = vmatprep.subr.bf16.mxu0 0
  %2849 = vmatpush1.bf16.msra.mxu0 0
  %2850 = vmatprep.subr.bf16.mxu0 0
  %2851 = vmatpush1.bf16.msra.mxu0 0
  %2852 = vmatprep.subr.bf16.mxu0 0
  %2853 = vmatpush1.bf16.msra.mxu0 0
  %2854 = vmatprep.subr.bf16.mxu0 0
  %2855 = vmatpush1.bf16.msra.mxu0 0
  %2856 = vmatprep.subr.bf16.mxu0 0
  %2857 = vmatpush1.bf16.msra.mxu0 0
  %2858 = vmatprep.subr.bf16.mxu0 0
  %2859 = vmatpush1.bf16.msra.mxu0 0
  %2860 = vmatprep.subr.bf16.mxu0 0
  %2861 = vmatpush1.bf16.msra.mxu0 0
  %2862 = vmatprep.subr.bf16.mxu0 0
  %2863 = vmatpush1.bf16.msra.mxu0 0
  %2864 = vmatprep.subr.bf16.mxu0 0
  %2865 = vmatpush1.bf16.msra.mxu0 0
  %2866 = vmatprep.subr.bf16.mxu0 0
  %2867 = vmatpush1.bf16.msra.mxu0 0
  %2868 = vmatprep.subr.bf16.mxu0 0
  %2869 = vmatpush1.bf16.msra.mxu0 0
  %2870 = vmatprep.subr.bf16.mxu0 0
  %2871 = vmatpush1.bf16.msra.mxu0 0
  %2872 = vmatprep.subr.bf16.mxu0 0
  %2873 = vmatpush1.bf16.msra.mxu0 0
  %2874 = vmatprep.subr.bf16.mxu0 0
  %2875 = vmatpush1.bf16.msra.mxu0 0
  %2876 = vmatprep.mubr.bf16.mxu0 0
  %2877 = vmatmul.mubr.bf16.gmra.mrb[0].mxu0 %v2710
  %v2878 = vpop.f32.mrb[0].mxu0
  %v2879 = vadd.f32 %v2830, %v2878
  %v2880 = vpop.f32.mrb[0].mxu0
  %v2881 = vpop.f32.mrb[0].mxu0
  %v2882 = vadd.f32 %v2830, %v2881
  %v2883 = vpop.f32.mrb[0].mxu0
  %2884 = vdwg.mxu0
  %v2885 = vmul.f32 %v2813, %v68
  %v2886 = vmul.f32 %v2813, %v69
  %v2887 = vmul.f32 %v2813, %v70
  %v2888 = vmul.f32 %v2813, %v71
  %v2889 = vmul.f32 %v2813, %v72
  %v2890 = vmul.f32 %v2813, %v73
  %v2891 = vmul.f32 %v2813, %v74
  %v2892 = vmul.f32 %v2813, %v75
  %v2893 = vmul.f32 %v2816, %v68
  %v2894 = vmul.f32 %v2816, %v69
  %v2895 = vmul.f32 %v2816, %v70
  %v2896 = vmul.f32 %v2816, %v71
  %v2897 = vmul.f32 %v2816, %v72
  %v2898 = vmul.f32 %v2816, %v73
  %v2899 = vmul.f32 %v2816, %v74
  %v2900 = vmul.f32 %v2816, %v75
  %v2901 = vmul.f32 %v2879, %v68
  %v2902 = vmul.f32 %v2879, %v69
  %v2903 = vmul.f32 %v2879, %v70
  %v2904 = vmul.f32 %v2879, %v71
  %v2905 = vmul.f32 %v2879, %v72
  %v2906 = vmul.f32 %v2879, %v73
  %v2907 = vmul.f32 %v2879, %v74
  %v2908 = vmul.f32 %v2879, %v75
  %v2909 = vmul.f32 %v2882, %v68
  %v2910 = vmul.f32 %v2882, %v69
  %v2911 = vmul.f32 %v2882, %v70
  %v2912 = vmul.f32 %v2882, %v71
  %v2913 = vmul.f32 %v2882, %v72
  %v2914 = vmul.f32 %v2882, %v73
  %v2915 = vmul.f32 %v2882, %v74
  %v2916 = vmul.f32 %v2882, %v75
  %v2917 = vpack.c.bf16 %v2747, %v2747
  %v2918 = vpack.c.bf16 %v2750, %v2750
  %v2919 = vpack.c.bf16 %v2886, %v2885
  %v2920 = vpack.c.bf16 %v2888, %v2887
  %v2921 = vpack.c.bf16 %v2890, %v2889
  %v2922 = vpack.c.bf16 %v2892, %v2891
  %v2923 = vpack.c.bf16 %v2894, %v2893
  %v2924 = vpack.c.bf16 %v2896, %v2895
  %v2925 = vpack.c.bf16 %v2898, %v2897
  %v2926 = vpack.c.bf16 %v2900, %v2899
  %v2928 = vsel %vm104, %v2917, 0
  %v2931 = vsel %vm104, %v2919, 0
  %v2934 = vsel %vm104, %v2920, 0
  %v2937 = vsel %vm104, %v2921, 0
  %v2940 = vsel %vm104, %v2922, 0
  %2942 = vmatprep.subr.bf16.mxu0 0
  %2943 = vmatpush1.bf16.xpose.msra.mxu0 %v2931
  %2944 = vmatprep.subr.bf16.mxu0 0
  %2945 = vmatpush1.bf16.xpose.msra.mxu0 %v2934
  %2946 = vmatprep.subr.bf16.mxu0 0
  %2947 = vmatpush1.bf16.xpose.msra.mxu0 %v2937
  %2948 = vmatprep.subr.bf16.mxu0 0
  %2949 = vmatpush1.bf16.xpose.msra.mxu0 %v2940
  %2950 = vmatprep.subr.bf16.mxu0 0
  %2951 = vmatpush1.bf16.xpose.msra.mxu0 0
  %2952 = vmatprep.subr.bf16.mxu0 0
  %2953 = vmatpush1.bf16.xpose.msra.mxu0 0
  %2954 = vmatprep.subr.bf16.mxu0 0
  %2955 = vmatpush1.bf16.xpose.msra.mxu0 0
  %2956 = vmatprep.subr.bf16.mxu0 0
  %2957 = vmatpush1.bf16.xpose.msra.mxu0 0
  %2958 = vmatprep.subr.bf16.mxu0 0
  %2959 = vmatpush1.bf16.xpose.msra.mxu0 0
  %2960 = vmatprep.subr.bf16.mxu0 0
  %2961 = vmatpush1.bf16.xpose.msra.mxu0 0
  %2962 = vmatprep.subr.bf16.mxu0 0
  %2963 = vmatpush1.bf16.xpose.msra.mxu0 0
  %2964 = vmatprep.subr.bf16.mxu0 0
  %2965 = vmatpush1.bf16.xpose.msra.mxu0 0
  %2966 = vmatprep.subr.bf16.mxu0 0
  %2967 = vmatpush1.bf16.xpose.msra.mxu0 0
  %2968 = vmatprep.subr.bf16.mxu0 0
  %2969 = vmatpush1.bf16.xpose.msra.mxu0 0
  %2970 = vmatprep.subr.bf16.mxu0 0
  %2971 = vmatpush1.bf16.xpose.msra.mxu0 0
  %2972 = vmatprep.subr.bf16.mxu0 0
  %2973 = vmatpush1.bf16.xpose.msra.mxu0 0
  %2974 = vmatprep.mubr.bf16.mxu0 0
  %2975 = vmatmul.mubr.bf16.gmra.mrb[0].mxu0 %v2928
  %v2976 = vpop.f32.mrb[0].mxu0
  %v2977 = vadd.f32 0.0, %v2976
  %v2978 = vpop.f32.mrb[0].mxu0
  %v2979 = vpop.f32.mrb[0].mxu0
  %v2980 = vpop.f32.mrb[0].mxu0
  %2981 = vdwg.mxu0
  %v2983 = vsel %vm104, %v2918, 0
  %v2986 = vsel %vm104, %v2923, 0
  %v2989 = vsel %vm104, %v2924, 0
  %v2992 = vsel %vm104, %v2925, 0
  %v2995 = vsel %vm104, %v2926, 0
  %2997 = vmatprep.subr.bf16.mxu0 0
  %2998 = vmatpush1.bf16.xpose.msra.mxu0 %v2986
  %2999 = vmatprep.subr.bf16.mxu0 0
  %3000 = vmatpush1.bf16.xpose.msra.mxu0 %v2989
  %3001 = vmatprep.subr.bf16.mxu0 0
  %3002 = vmatpush1.bf16.xpose.msra.mxu0 %v2992
  %3003 = vmatprep.subr.bf16.mxu0 0
  %3004 = vmatpush1.bf16.xpose.msra.mxu0 %v2995
  %3005 = vmatprep.subr.bf16.mxu0 0
  %3006 = vmatpush1.bf16.xpose.msra.mxu0 0
  %3007 = vmatprep.subr.bf16.mxu0 0
  %3008 = vmatpush1.bf16.xpose.msra.mxu0 0
  %3009 = vmatprep.subr.bf16.mxu0 0
  %3010 = vmatpush1.bf16.xpose.msra.mxu0 0
  %3011 = vmatprep.subr.bf16.mxu0 0
  %3012 = vmatpush1.bf16.xpose.msra.mxu0 0
  %3013 = vmatprep.subr.bf16.mxu0 0
  %3014 = vmatpush1.bf16.xpose.msra.mxu0 0
  %3015 = vmatprep.subr.bf16.mxu0 0
  %3016 = vmatpush1.bf16.xpose.msra.mxu0 0
  %3017 = vmatprep.subr.bf16.mxu0 0
  %3018 = vmatpush1.bf16.xpose.msra.mxu0 0
  %3019 = vmatprep.subr.bf16.mxu0 0
  %3020 = vmatpush1.bf16.xpose.msra.mxu0 0
  %3021 = vmatprep.subr.bf16.mxu0 0
  %3022 = vmatpush1.bf16.xpose.msra.mxu0 0
  %3023 = vmatprep.subr.bf16.mxu0 0
  %3024 = vmatpush1.bf16.xpose.msra.mxu0 0
  %3025 = vmatprep.subr.bf16.mxu0 0
  %3026 = vmatpush1.bf16.xpose.msra.mxu0 0
  %3027 = vmatprep.subr.bf16.mxu0 0
  %3028 = vmatpush1.bf16.xpose.msra.mxu0 0
  %3029 = vmatprep.mubr.bf16.mxu0 0
  %3030 = vmatmul.mubr.bf16.gmra.mrb[0].mxu0 %v2983
  %v3031 = vpop.f32.mrb[0].mxu0
  %v3032 = vadd.f32 0.0, %v3031
  %v3033 = vpop.f32.mrb[0].mxu0
  %v3034 = vpop.f32.mrb[0].mxu0
  %v3035 = vpop.f32.mrb[0].mxu0
  %3036 = vdwg.mxu0
  %v3037 = vsel %vm429, %v2977, -inf
  %3038 = vmax.xlane.f32.xlu0 %v3037
  %v3039 = vpop.xlane.xlu0 %3038
  %v3040 = vsel %vm429, %v3032, -inf
  %3041 = vmax.xlane.f32.xlu0 %v3040
  %v3042 = vpop.xlane.xlu0 %3041
  %v3043 = vsub.f32 %v2977, %v3039
  %v3044 = vsub.f32 %v3032, %v3042
  %v3045 = vmul.f32 %v3043, 1.442695
  %v3046 = vpow.pop %v3045
  %v3047 = vmul.f32 %v3044, 1.442695
  %v3048 = vpow.pop %v3047
  %v3049 = vpack.c.bf16 %v3048, %v3046
  %v3051 = vsel %vm429, %v3049, 0
  %3053 = vmatprep.subr.bf16.mxu0 0
  %3054 = vmatpush1.bf16.msra.mxu0 %v76
  %3055 = vmatprep.subr.bf16.mxu0 0
  %3056 = vmatpush1.bf16.msra.mxu0 %v77
  %3057 = vmatprep.subr.bf16.mxu0 0
  %3058 = vmatpush1.bf16.msra.mxu0 %v78
  %3059 = vmatprep.subr.bf16.mxu0 0
  %3060 = vmatpush1.bf16.msra.mxu0 %v79
  %3061 = vmatprep.subr.bf16.mxu0 0
  %3062 = vmatpush1.bf16.msra.mxu0 0
  %3063 = vmatprep.subr.bf16.mxu0 0
  %3064 = vmatpush1.bf16.msra.mxu0 0
  %3065 = vmatprep.subr.bf16.mxu0 0
  %3066 = vmatpush1.bf16.msra.mxu0 0
  %3067 = vmatprep.subr.bf16.mxu0 0
  %3068 = vmatpush1.bf16.msra.mxu0 0
  %3069 = vmatprep.subr.bf16.mxu0 0
  %3070 = vmatpush1.bf16.msra.mxu0 0
  %3071 = vmatprep.subr.bf16.mxu0 0
  %3072 = vmatpush1.bf16.msra.mxu0 0
  %3073 = vmatprep.subr.bf16.mxu0 0
  %3074 = vmatpush1.bf16.msra.mxu0 0
  %3075 = vmatprep.subr.bf16.mxu0 0
  %3076 = vmatpush1.bf16.msra.mxu0 0
  %3077 = vmatprep.subr.bf16.mxu0 0
  %3078 = vmatpush1.bf16.msra.mxu0 0
  %3079 = vmatprep.subr.bf16.mxu0 0
  %3080 = vmatpush1.bf16.msra.mxu0 0
  %3081 = vmatprep.subr.bf16.mxu0 0
  %3082 = vmatpush1.bf16.msra.mxu0 0
  %3083 = vmatprep.subr.bf16.mxu0 0
  %3084 = vmatpush1.bf16.msra.mxu0 0
  %3085 = vmatprep.mubr.bf16.mxu0 0
  %3086 = vmatmul.mubr.bf16.gmra.mrb[0].mxu0 %v3051
  %v3087 = vpop.f32.mrb[0].mxu0
  %v3088 = vadd.f32 0.0, %v3087
  %v3089 = vpop.f32.mrb[0].mxu0
  %v3090 = vpop.f32.mrb[0].mxu0
  %v3091 = vadd.f32 0.0, %v3090
  %v3092 = vpop.f32.mrb[0].mxu0
  %3093 = vdwg.mxu0
  %v3094 = vpack.c.bf16 %v3046, %v3046
  %v3095 = vpack.c.bf16 %v3048, %v3048
  %v3096 = vpack.c.bf16 %v2902, %v2901
  %v3097 = vpack.c.bf16 %v2904, %v2903
  %v3098 = vpack.c.bf16 %v2906, %v2905
  %v3099 = vpack.c.bf16 %v2908, %v2907
  %v3100 = vpack.c.bf16 %v2910, %v2909
  %v3101 = vpack.c.bf16 %v2912, %v2911
  %v3102 = vpack.c.bf16 %v2914, %v2913
  %v3103 = vpack.c.bf16 %v2916, %v2915
  %v3105 = vsel %vm429, %v3094, 0
  %3107 = vmatprep.subr.bf16.mxu0 0
  %3108 = vmatpush1.bf16.msra.mxu0 %v3096
  %3109 = vmatprep.subr.bf16.mxu0 0
  %3110 = vmatpush1.bf16.msra.mxu0 %v3097
  %3111 = vmatprep.subr.bf16.mxu0 0
  %3112 = vmatpush1.bf16.msra.mxu0 %v3098
  %3113 = vmatprep.subr.bf16.mxu0 0
  %3114 = vmatpush1.bf16.msra.mxu0 %v3099
  %3115 = vmatprep.subr.bf16.mxu0 0
  %3116 = vmatpush1.bf16.msra.mxu0 0
  %3117 = vmatprep.subr.bf16.mxu0 0
  %3118 = vmatpush1.bf16.msra.mxu0 0
  %3119 = vmatprep.subr.bf16.mxu0 0
  %3120 = vmatpush1.bf16.msra.mxu0 0
  %3121 = vmatprep.subr.bf16.mxu0 0
  %3122 = vmatpush1.bf16.msra.mxu0 0
  %3123 = vmatprep.subr.bf16.mxu0 0
  %3124 = vmatpush1.bf16.msra.mxu0 0
  %3125 = vmatprep.subr.bf16.mxu0 0
  %3126 = vmatpush1.bf16.msra.mxu0 0
  %3127 = vmatprep.subr.bf16.mxu0 0
  %3128 = vmatpush1.bf16.msra.mxu0 0
  %3129 = vmatprep.subr.bf16.mxu0 0
  %3130 = vmatpush1.bf16.msra.mxu0 0
  %3131 = vmatprep.subr.bf16.mxu0 0
  %3132 = vmatpush1.bf16.msra.mxu0 0
  %3133 = vmatprep.subr.bf16.mxu0 0
  %3134 = vmatpush1.bf16.msra.mxu0 0
  %3135 = vmatprep.subr.bf16.mxu0 0
  %3136 = vmatpush1.bf16.msra.mxu0 0
  %3137 = vmatprep.subr.bf16.mxu0 0
  %3138 = vmatpush1.bf16.msra.mxu0 0
  %3139 = vmatprep.mubr.bf16.mxu0 0
  %3140 = vmatmul.mubr.bf16.gmra.mrb[0].mxu0 %v3105
  %v3141 = vpop.f32.mrb[0].mxu0
  %v3142 = vadd.f32 0.0, %v3141
  %v3143 = vpop.f32.mrb[0].mxu0
  %v3144 = vpop.f32.mrb[0].mxu0
  %v3145 = vpop.f32.mrb[0].mxu0
  %3146 = vdwg.mxu0
  %v3148 = vsel %vm429, %v3095, 0
  %3150 = vmatprep.subr.bf16.mxu0 0
  %3151 = vmatpush1.bf16.msra.mxu0 %v3100
  %3152 = vmatprep.subr.bf16.mxu0 0
  %3153 = vmatpush1.bf16.msra.mxu0 %v3101
  %3154 = vmatprep.subr.bf16.mxu0 0
  %3155 = vmatpush1.bf16.msra.mxu0 %v3102
  %3156 = vmatprep.subr.bf16.mxu0 0
  %3157 = vmatpush1.bf16.msra.mxu0 %v3103
  %3158 = vmatprep.subr.bf16.mxu0 0
  %3159 = vmatpush1.bf16.msra.mxu0 0
  %3160 = vmatprep.subr.bf16.mxu0 0
  %3161 = vmatpush1.bf16.msra.mxu0 0
  %3162 = vmatprep.subr.bf16.mxu0 0
  %3163 = vmatpush1.bf16.msra.mxu0 0
  %3164 = vmatprep.subr.bf16.mxu0 0
  %3165 = vmatpush1.bf16.msra.mxu0 0
  %3166 = vmatprep.subr.bf16.mxu0 0
  %3167 = vmatpush1.bf16.msra.mxu0 0
  %3168 = vmatprep.subr.bf16.mxu0 0
  %3169 = vmatpush1.bf16.msra.mxu0 0
  %3170 = vmatprep.subr.bf16.mxu0 0
  %3171 = vmatpush1.bf16.msra.mxu0 0
  %3172 = vmatprep.subr.bf16.mxu0 0
  %3173 = vmatpush1.bf16.msra.mxu0 0
  %3174 = vmatprep.subr.bf16.mxu0 0
  %3175 = vmatpush1.bf16.msra.mxu0 0
  %3176 = vmatprep.subr.bf16.mxu0 0
  %3177 = vmatpush1.bf16.msra.mxu0 0
  %3178 = vmatprep.subr.bf16.mxu0 0
  %3179 = vmatpush1.bf16.msra.mxu0 0
  %3180 = vmatprep.subr.bf16.mxu0 0
  %3181 = vmatpush1.bf16.msra.mxu0 0
  %3182 = vmatprep.mubr.bf16.mxu0 0
  %3183 = vmatmul.mubr.bf16.gmra.mrb[0].mxu0 %v3148
  %v3184 = vpop.f32.mrb[0].mxu0
  %v3185 = vadd.f32 0.0, %v3184
  %v3186 = vpop.f32.mrb[0].mxu0
  %v3187 = vpop.f32.mrb[0].mxu0
  %v3188 = vpop.f32.mrb[0].mxu0
  %3189 = vdwg.mxu0
  %v3190 = vrcp.pop %v3088
  %v3191 = vrcp.pop %v3091
  %v3192 = vmul.f32 %v3142, %v3190
  %v3193 = vmul.f32 %v3185, %v3191
  %v3194 = vpack.c.bf16 %v3193, %v3192
  %s3195 = scalar_lea.vmem %s8, 48
  %v3196 = vld [vmem:[%s3195] sm:$0xf]
  %v3197 = vld [vmem:[%s3195 + $0x4] sm:$0xf]
  %v3198 = vld [vmem:[%s3195 + $0x8] sm:$0xf]
  %v3199 = vld [vmem:[%s3195 + $0xc] sm:$0xf]
  %s3200 = scalar_lea.vmem %s9, 3
  %v3201 = vld [vmem:[%s3200] sm:$0x1]
  %v3203 = vlaneseq
  %v3204 = vshrl.u32 %v3203, 7
  %v3205 = vsub.s32 0, %v3204
  %v3206 = vrot.slane %v3201, %v3205
  %v3212 = vunpack.c.l.b16 %v3196
  %v3213 = vunpack.c.l.b16 %v3197
  %v3214 = vunpack.c.l.b16 %v3198
  %v3215 = vunpack.c.l.b16 %v3199
  %v3216 = vpack.c.b16 %v3213, %v3212
  %v3217 = vpack.c.b16 %v3215, %v3214
  %v3221 = vsel %vm104, %v3194, 0
  %3223 = vmatprep.subr.bf16.mxu0 0
  %3224 = vmatpush1.bf16.msra.mxu0 %v3216
  %3225 = vmatprep.subr.bf16.mxu0 0
  %3226 = vmatpush1.bf16.msra.mxu0 %v3217
  %3227 = vmatprep.subr.bf16.mxu0 0
  %3228 = vmatpush1.bf16.msra.mxu0 0
  %3229 = vmatprep.subr.bf16.mxu0 0
  %3230 = vmatpush1.bf16.msra.mxu0 0
  %3231 = vmatprep.subr.bf16.mxu0 0
  %3232 = vmatpush1.bf16.msra.mxu0 0
  %3233 = vmatprep.subr.bf16.mxu0 0
  %3234 = vmatpush1.bf16.msra.mxu0 0
  %3235 = vmatprep.subr.bf16.mxu0 0
  %3236 = vmatpush1.bf16.msra.mxu0 0
  %3237 = vmatprep.subr.bf16.mxu0 0
  %3238 = vmatpush1.bf16.msra.mxu0 0
  %3239 = vmatprep.subr.bf16.mxu0 0
  %3240 = vmatpush1.bf16.msra.mxu0 0
  %3241 = vmatprep.subr.bf16.mxu0 0
  %3242 = vmatpush1.bf16.msra.mxu0 0
  %3243 = vmatprep.subr.bf16.mxu0 0
  %3244 = vmatpush1.bf16.msra.mxu0 0
  %3245 = vmatprep.subr.bf16.mxu0 0
  %3246 = vmatpush1.bf16.msra.mxu0 0
  %3247 = vmatprep.subr.bf16.mxu0 0
  %3248 = vmatpush1.bf16.msra.mxu0 0
  %3249 = vmatprep.subr.bf16.mxu0 0
  %3250 = vmatpush1.bf16.msra.mxu0 0
  %3251 = vmatprep.subr.bf16.mxu0 0
  %3252 = vmatpush1.bf16.msra.mxu0 0
  %3253 = vmatprep.subr.bf16.mxu0 0
  %3254 = vmatpush1.bf16.msra.mxu0 0
  %3255 = vmatprep.mubr.bf16.mxu0 0
  %3256 = vmatmul.mubr.bf16.gmra.mrb[0].mxu0 %v3221
  %v3257 = vpop.f32.mrb[0].mxu0
  %v3258 = vadd.f32 %v3206, %v3257
  %v3259 = vpop.f32.mrb[0].mxu0
  %v3260 = vpop.f32.mrb[0].mxu0
  %v3261 = vadd.f32 %v3206, %v3260
  %v3262 = vpop.f32.mrb[0].mxu0
  %3263 = vdwg.mxu0
  %v3264 = vadd.f32 %v2681, %v3258
  %v3265 = vadd.f32 %v2682, %v3261
  %s3266 = scalar_lea.vmem %s10, 3
  %v3267 = vld [vmem:[%s3266] sm:$0x1]
  %s3268 = scalar_lea.vmem %s11, 3
  %v3269 = vld [vmem:[%s3268] sm:$0x1]
  %v3270 = vsel %vm104, %v3264, 0.0
  %3271 = vadd.xlane.f32.xlu0 %v3270
  %v3272 = vpop.xlane.xlu0 %3271
  %v3273 = vsel %vm104, %v3265, 0.0
  %3274 = vadd.xlane.f32.xlu0 %v3273
  %v3275 = vpop.xlane.xlu0 %3274
  %v3276 = vmul.f32 %v3272, %v665
  %v3277 = vmul.f32 %v3275, %v665
  %v3278 = vmul.f32 %v3264, %v3264
  %v3279 = vmul.f32 %v3265, %v3265
  %v3280 = vsel %vm104, %v3278, 0.0
  %3281 = vadd.xlane.f32.xlu0 %v3280
  %v3282 = vpop.xlane.xlu0 %3281
  %v3283 = vsel %vm104, %v3279, 0.0
  %3284 = vadd.xlane.f32.xlu0 %v3283
  %v3285 = vpop.xlane.xlu0 %3284
  %v3286 = vmul.f32 %v3282, %v665
  %v3287 = vmul.f32 %v3285, %v665
  %v3288 = vmul.f32 %v3276, %v3276
  %v3289 = vmul.f32 %v3277, %v3277
  %v3290 = vsub.f32 %v3286, %v3288
  %v3291 = vsub.f32 %v3287, %v3289
  %v3292 = vadd.f32 %v3290, 1e-05
  %v3293 = vadd.f32 %v3291, 1e-05
  %v3294 = vrsqrt.pop %v3292
  %v3295 = vrsqrt.pop %v3293
  %v3296 = vsub.f32 %v3264, %v3276
  %v3297 = vsub.f32 %v3265, %v3277
  %v3299 = vlaneseq
  %v3300 = vshrl.u32 %v3299, 7
  %v3301 = vsub.s32 0, %v3300
  %v3302 = vrot.slane %v3267, %v3301
  %v3304 = vmul.f32 %v3294, %v3302
  %v3305 = vmul.f32 %v3295, %v3302
  %v3306 = vmul.f32 %v3296, %v3304
  %v3307 = vmul.f32 %v3297, %v3305
  %v3309 = vlaneseq
  %v3310 = vshrl.u32 %v3309, 7
  %v3311 = vsub.s32 0, %v3310
  %v3312 = vrot.slane %v3269, %v3311
  %v3314 = vadd.f32 %v3306, %v3312
  %v3315 = vadd.f32 %v3307, %v3312
  %v3316 = vpack.c.bf16 %v3315, %v3314
  %s3317 = scalar_lea.vmem %s12, 48
  %v3318 = vld [vmem:[%s3317] sm:$0xf]
  %v3319 = vld [vmem:[%s3317 + $0x4] sm:$0xf]
  %v3320 = vld [vmem:[%s3317 + $0x8] sm:$0xf]
  %v3321 = vld [vmem:[%s3317 + $0xc] sm:$0xf]
  %s3322 = scalar_lea.vmem %s13, 3
  %v3323 = vld [vmem:[%s3322] sm:$0x1]
  %v3325 = vlaneseq
  %v3326 = vshrl.u32 %v3325, 7
  %v3327 = vsub.s32 0, %v3326
  %v3328 = vrot.slane %v3323, %v3327
  %v3334 = vunpack.c.l.b16 %v3318
  %v3335 = vunpack.c.l.b16 %v3319
  %v3336 = vunpack.c.l.b16 %v3320
  %v3337 = vunpack.c.l.b16 %v3321
  %v3338 = vpack.c.b16 %v3335, %v3334
  %v3339 = vpack.c.b16 %v3337, %v3336
  %v3343 = vsel %vm104, %v3316, 0
  %3345 = vmatprep.subr.bf16.mxu0 0
  %3346 = vmatpush1.bf16.msra.mxu0 %v3338
  %3347 = vmatprep.subr.bf16.mxu0 0
  %3348 = vmatpush1.bf16.msra.mxu0 %v3339
  %3349 = vmatprep.subr.bf16.mxu0 0
  %3350 = vmatpush1.bf16.msra.mxu0 0
  %3351 = vmatprep.subr.bf16.mxu0 0
  %3352 = vmatpush1.bf16.msra.mxu0 0
  %3353 = vmatprep.subr.bf16.mxu0 0
  %3354 = vmatpush1.bf16.msra.mxu0 0
  %3355 = vmatprep.subr.bf16.mxu0 0
  %3356 = vmatpush1.bf16.msra.mxu0 0
  %3357 = vmatprep.subr.bf16.mxu0 0
  %3358 = vmatpush1.bf16.msra.mxu0 0
  %3359 = vmatprep.subr.bf16.mxu0 0
  %3360 = vmatpush1.bf16.msra.mxu0 0
  %3361 = vmatprep.subr.bf16.mxu0 0
  %3362 = vmatpush1.bf16.msra.mxu0 0
  %3363 = vmatprep.subr.bf16.mxu0 0
  %3364 = vmatpush1.bf16.msra.mxu0 0
  %3365 = vmatprep.subr.bf16.mxu0 0
  %3366 = vmatpush1.bf16.msra.mxu0 0
  %3367 = vmatprep.subr.bf16.mxu0 0
  %3368 = vmatpush1.bf16.msra.mxu0 0
  %3369 = vmatprep.subr.bf16.mxu0 0
  %3370 = vmatpush1.bf16.msra.mxu0 0
  %3371 = vmatprep.subr.bf16.mxu0 0
  %3372 = vmatpush1.bf16.msra.mxu0 0
  %3373 = vmatprep.subr.bf16.mxu0 0
  %3374 = vmatpush1.bf16.msra.mxu0 0
  %3375 = vmatprep.subr.bf16.mxu0 0
  %3376 = vmatpush1.bf16.msra.mxu0 0
  %3377 = vmatprep.mubr.bf16.mxu0 0
  %3378 = vmatmul.mubr.bf16.gmra.mrb[0].mxu0 %v3343
  %v3379 = vpop.f32.mrb[0].mxu0
  %v3380 = vadd.f32 %v3328, %v3379
  %v3381 = vpop.f32.mrb[0].mxu0
  %v3382 = vpop.f32.mrb[0].mxu0
  %v3383 = vadd.f32 %v3328, %v3382
  %v3384 = vpop.f32.mrb[0].mxu0
  %3385 = vdwg.mxu0
  %v3386 = vmax.f32 %v3380, 0.0
  %v3387 = vmax.f32 %v3383, 0.0
  %v3388 = vpack.c.bf16 %v3387, %v3386
  %s3389 = scalar_lea.vmem %s14, 192
  %v3390 = vld [vmem:[%s3389] sm:$0xf]
  %v3391 = vld [vmem:[%s3389 + $0x4] sm:$0xf]
  %v3392 = vld [vmem:[%s3389 + $0x8] sm:$0xf]
  %v3393 = vld [vmem:[%s3389 + $0xc] sm:$0xf]
  %v3394 = vld [vmem:[%s3389 + $0x10] sm:$0xf]
  %v3395 = vld [vmem:[%s3389 + $0x14] sm:$0xf]
  %v3396 = vld [vmem:[%s3389 + $0x18] sm:$0xf]
  %v3397 = vld [vmem:[%s3389 + $0x1c] sm:$0xf]
  %v3398 = vld [vmem:[%s3389 + $0x20] sm:$0xf]
  %v3399 = vld [vmem:[%s3389 + $0x24] sm:$0xf]
  %v3400 = vld [vmem:[%s3389 + $0x28] sm:$0xf]
  %v3401 = vld [vmem:[%s3389 + $0x2c] sm:$0xf]
  %v3402 = vld [vmem:[%s3389 + $0x30] sm:$0xf]
  %v3403 = vld [vmem:[%s3389 + $0x34] sm:$0xf]
  %v3404 = vld [vmem:[%s3389 + $0x38] sm:$0xf]
  %v3405 = vld [vmem:[%s3389 + $0x3c] sm:$0xf]
  %s3406 = scalar_lea.vmem %s15, 3
  %v3407 = vld [vmem:[%s3406] sm:$0x1]
  %v3409 = vlaneseq
  %v3410 = vshrl.u32 %v3409, 7
  %v3411 = vsub.s32 0, %v3410
  %v3412 = vrot.slane %v3407, %v3411
  %v3430 = vunpack.c.l.b16 %v3390
  %v3431 = vunpack.c.l.b16 %v3391
  %v3432 = vunpack.c.l.b16 %v3392
  %v3433 = vunpack.c.l.b16 %v3393
  %v3434 = vunpack.c.l.b16 %v3394
  %v3435 = vunpack.c.l.b16 %v3395
  %v3436 = vunpack.c.l.b16 %v3396
  %v3437 = vunpack.c.l.b16 %v3397
  %v3438 = vunpack.c.l.b16 %v3398
  %v3439 = vunpack.c.l.b16 %v3399
  %v3440 = vunpack.c.l.b16 %v3400
  %v3441 = vunpack.c.l.b16 %v3401
  %v3442 = vunpack.c.l.b16 %v3402
  %v3443 = vunpack.c.l.b16 %v3403
  %v3444 = vunpack.c.l.b16 %v3404
  %v3445 = vunpack.c.l.b16 %v3405
  %v3446 = vpack.c.b16 %v3431, %v3430
  %v3447 = vpack.c.b16 %v3433, %v3432
  %v3448 = vpack.c.b16 %v3435, %v3434
  %v3449 = vpack.c.b16 %v3437, %v3436
  %v3450 = vpack.c.b16 %v3439, %v3438
  %v3451 = vpack.c.b16 %v3441, %v3440
  %v3452 = vpack.c.b16 %v3443, %v3442
  %v3453 = vpack.c.b16 %v3445, %v3444
  %3462 = vmatprep.subr.bf16.mxu0 0
  %3463 = vmatpush1.bf16.msra.mxu0 %v3446
  %3464 = vmatprep.subr.bf16.mxu0 0
  %3465 = vmatpush1.bf16.msra.mxu0 %v3447
  %3466 = vmatprep.subr.bf16.mxu0 0
  %3467 = vmatpush1.bf16.msra.mxu0 %v3448
  %3468 = vmatprep.subr.bf16.mxu0 0
  %3469 = vmatpush1.bf16.msra.mxu0 %v3449
  %3470 = vmatprep.subr.bf16.mxu0 0
  %3471 = vmatpush1.bf16.msra.mxu0 %v3450
  %3472 = vmatprep.subr.bf16.mxu0 0
  %3473 = vmatpush1.bf16.msra.mxu0 %v3451
  %3474 = vmatprep.subr.bf16.mxu0 0
  %3475 = vmatpush1.bf16.msra.mxu0 %v3452
  %3476 = vmatprep.subr.bf16.mxu0 0
  %3477 = vmatpush1.bf16.msra.mxu0 %v3453
  %3478 = vmatprep.subr.bf16.mxu0 0
  %3479 = vmatpush1.bf16.msra.mxu0 0
  %3480 = vmatprep.subr.bf16.mxu0 0
  %3481 = vmatpush1.bf16.msra.mxu0 0
  %3482 = vmatprep.subr.bf16.mxu0 0
  %3483 = vmatpush1.bf16.msra.mxu0 0
  %3484 = vmatprep.subr.bf16.mxu0 0
  %3485 = vmatpush1.bf16.msra.mxu0 0
  %3486 = vmatprep.subr.bf16.mxu0 0
  %3487 = vmatpush1.bf16.msra.mxu0 0
  %3488 = vmatprep.subr.bf16.mxu0 0
  %3489 = vmatpush1.bf16.msra.mxu0 0
  %3490 = vmatprep.subr.bf16.mxu0 0
  %3491 = vmatpush1.bf16.msra.mxu0 0
  %3492 = vmatprep.subr.bf16.mxu0 0
  %3493 = vmatpush1.bf16.msra.mxu0 0
  %3494 = vmatprep.mubr.bf16.mxu0 0
  %3495 = vmatmul.mubr.bf16.gmra.mrb[0].mxu0 %v3388
  %v3496 = vpop.f32.mrb[0].mxu0
  %v3497 = vadd.f32 %v3412, %v3496
  %v3498 = vpop.f32.mrb[0].mxu0
  %v3499 = vpop.f32.mrb[0].mxu0
  %v3500 = vadd.f32 %v3412, %v3499
  %v3501 = vpop.f32.mrb[0].mxu0
  %3502 = vdwg.mxu0
  %v3503 = vadd.f32 %v3314, %v3497
  %v3504 = vadd.f32 %v3315, %v3500
  %s3505 = scalar_lea.vmem %s16, 3
  %v3506 = vld [vmem:[%s3505] sm:$0x1]
  %s3507 = scalar_lea.vmem %s17, 3
  %v3508 = vld [vmem:[%s3507] sm:$0x1]
  %v3509 = vsel %vm104, %v3503, 0.0
  %3510 = vadd.xlane.f32.xlu0 %v3509
  %v3511 = vpop.xlane.xlu0 %3510
  %v3512 = vsel %vm104, %v3504, 0.0
  %3513 = vadd.xlane.f32.xlu0 %v3512
  %v3514 = vpop.xlane.xlu0 %3513
  %v3515 = vmul.f32 %v3511, %v665
  %v3516 = vmul.f32 %v3514, %v665
  %v3517 = vmul.f32 %v3503, %v3503
  %v3518 = vmul.f32 %v3504, %v3504
  %v3519 = vsel %vm104, %v3517, 0.0
  %3520 = vadd.xlane.f32.xlu0 %v3519
  %v3521 = vpop.xlane.xlu0 %3520
  %v3522 = vsel %vm104, %v3518, 0.0
  %3523 = vadd.xlane.f32.xlu0 %v3522
  %v3524 = vpop.xlane.xlu0 %3523
  %v3525 = vmul.f32 %v3521, %v665
  %v3526 = vmul.f32 %v3524, %v665
  %v3527 = vmul.f32 %v3515, %v3515
  %v3528 = vmul.f32 %v3516, %v3516
  %v3529 = vsub.f32 %v3525, %v3527
  %v3530 = vsub.f32 %v3526, %v3528
  %v3531 = vadd.f32 %v3529, 1e-05
  %v3532 = vadd.f32 %v3530, 1e-05
  %v3533 = vrsqrt.pop %v3531
  %v3534 = vrsqrt.pop %v3532
  %v3535 = vsub.f32 %v3503, %v3515
  %v3536 = vsub.f32 %v3504, %v3516
  %v3538 = vlaneseq
  %v3539 = vshrl.u32 %v3538, 7
  %v3540 = vsub.s32 0, %v3539
  %v3541 = vrot.slane %v3506, %v3540
  %v3543 = vmul.f32 %v3533, %v3541
  %v3544 = vmul.f32 %v3534, %v3541
  %v3545 = vmul.f32 %v3535, %v3543
  %v3546 = vmul.f32 %v3536, %v3544
  %v3548 = vlaneseq
  %v3549 = vshrl.u32 %v3548, 7
  %v3550 = vsub.s32 0, %v3549
  %v3551 = vrot.slane %v3508, %v3550
  %v3553 = vadd.f32 %v3545, %v3551
  %v3554 = vadd.f32 %v3546, %v3551
  %v3555 = vpack.c.bf16 %v3554, %v3553
  %v3556 = vld [vmem:[%s18] sm:$0xf]
  %v3557 = vld [vmem:[%s18 + $0x4] sm:$0xf]
  %v3558 = vld [vmem:[%s18 + $0x8] sm:$0xf]
  %v3559 = vld [vmem:[%s18 + $0xc] sm:$0xf]
  %v3560 = vld [vmem:[%s19] sm:$0x1]
  %v3562 = vlaneseq
  %v3563 = vshrl.u32 %v3562, 7
  %v3564 = vsub.s32 0, %v3563
  %v3565 = vrot.slane %v3560, %v3564
  %v3571 = vunpack.c.l.b16 %v3556
  %v3572 = vunpack.c.l.b16 %v3557
  %v3573 = vunpack.c.l.b16 %v3558
  %v3574 = vunpack.c.l.b16 %v3559
  %v3575 = vpack.c.b16 %v3572, %v3571
  %v3576 = vpack.c.b16 %v3574, %v3573
  %v3580 = vsel %vm104, %v3555, 0
  %3582 = vmatprep.subr.bf16.mxu0 0
  %3583 = vmatpush1.bf16.msra.mxu0 %v3575
  %3584 = vmatprep.subr.bf16.mxu0 0
  %3585 = vmatpush1.bf16.msra.mxu0 %v3576
  %3586 = vmatprep.subr.bf16.mxu0 0
  %3587 = vmatpush1.bf16.msra.mxu0 0
  %3588 = vmatprep.subr.bf16.mxu0 0
  %3589 = vmatpush1.bf16.msra.mxu0 0
  %3590 = vmatprep.subr.bf16.mxu0 0
  %3591 = vmatpush1.bf16.msra.mxu0 0
  %3592 = vmatprep.subr.bf16.mxu0 0
  %3593 = vmatpush1.bf16.msra.mxu0 0
  %3594 = vmatprep.subr.bf16.mxu0 0
  %3595 = vmatpush1.bf16.msra.mxu0 0
  %3596 = vmatprep.subr.bf16.mxu0 0
  %3597 = vmatpush1.bf16.msra.mxu0 0
  %3598 = vmatprep.subr.bf16.mxu0 0
  %3599 = vmatpush1.bf16.msra.mxu0 0
  %3600 = vmatprep.subr.bf16.mxu0 0
  %3601 = vmatpush1.bf16.msra.mxu0 0
  %3602 = vmatprep.subr.bf16.mxu0 0
  %3603 = vmatpush1.bf16.msra.mxu0 0
  %3604 = vmatprep.subr.bf16.mxu0 0
  %3605 = vmatpush1.bf16.msra.mxu0 0
  %3606 = vmatprep.subr.bf16.mxu0 0
  %3607 = vmatpush1.bf16.msra.mxu0 0
  %3608 = vmatprep.subr.bf16.mxu0 0
  %3609 = vmatpush1.bf16.msra.mxu0 0
  %3610 = vmatprep.subr.bf16.mxu0 0
  %3611 = vmatpush1.bf16.msra.mxu0 0
  %3612 = vmatprep.subr.bf16.mxu0 0
  %3613 = vmatpush1.bf16.msra.mxu0 0
  %3614 = vmatprep.mubr.bf16.mxu0 0
  %3615 = vmatmul.mubr.bf16.gmra.mrb[0].mxu0 %v3580
  %v3616 = vpop.f32.mrb[0].mxu0
  %v3617 = vadd.f32 %v3565, %v3616
  %v3618 = vpop.f32.mrb[0].mxu0
  %v3619 = vpop.f32.mrb[0].mxu0
  %v3620 = vadd.f32 %v3565, %v3619
  %v3621 = vpop.f32.mrb[0].mxu0
  %3622 = vdwg.mxu0
  %vm3623 = vcmask 23552
  %3624 = vst.msk [vmem:[%s20] sm:$0xff] %vm3623, %v3617
  %3625 = vst.msk [vmem:[%s20 + $0x8] sm:$0xff] %vm3623, %v3620
  // Predicated region
  $region82: #{predict.1} parent=0 // pred_check
    _
  $region83: #{predict.1} parent=0 // pred_check_branch
    %3627 = sbr.rel (0) target = $region85
  $region84: #{predict.1} parent=0 // pred_region
    _
  $region85: #{predict.1} parent=0 // pred_fallthru
    _
  // Predicated region
  $region86: #{predict.1} parent=0 // pred_check
    _
  $region87: #{predict.1} parent=0 // pred_check_branch
    %3629 = sbr.rel (0) target = $region89
  $region88: #{predict.1} parent=0 // pred_region
    _
  $region89: #{predict.1} parent=0 // pred_fallthru
    _

</llo_original>
